<compile_context>
chip_gen: v7x
topology: tpu7x:2x2x1
jax: 0.10.0
libtpu: 0.0.40
codegen_flags: <defaults>
</compile_context>

<pallas_src>
import functools

import jax
import jax.numpy as jnp
import numpy as np
from jax.experimental import pallas as pl
from jax.experimental.pallas import tpu as pltpu


# ----------------------------------------------------------------------------
# Pallas kernel: one TimesAttentionBlock layer (grid axis 1) for one block of
# Bn batch columns (grid axis 0).  Residual stream is an f32 VMEM scratch that
# persists across the layer axis.
# ----------------------------------------------------------------------------
def _stack_kernel(x_ref, ln1w_ref, ln1b_ref, wqkv_ref, bqkv_ref, wo_ref, bo_ref,
                  ln2w_ref, ln2b_ref, wfc_ref, bfc_ref, wproj_ref, bproj_ref,
                  out_ref, resid_ref, oattn_ref, *, n_head):
    Bn, L, D = x_ref.shape
    dh = D // n_head
    eps = 1e-5
    f32 = jnp.float32
    mm = wqkv_ref.dtype                    # matmul-input dtype (bf16 fast path or f32)
    layer = pl.program_id(1)

    # First layer for this batch block: load the residual stream into VMEM (f32).
    @pl.when(layer == 0)
    def _():
        resid_ref[...] = x_ref[...].astype(f32)

    x = resid_ref[...].reshape(Bn * L, D)   # GEMMs see M = Bn*L rows

    def layernorm(v, w_ref, b_ref):
        mu = jnp.mean(v, axis=-1, keepdims=True)
        c = v - mu
        var = jnp.mean(c * c, axis=-1, keepdims=True)
        return (c * jax.lax.rsqrt(var + eps) * w_ref[...].astype(f32)
                + b_ref[...].astype(f32))

    # ---- attention branch ----------------------------------------------------
    xn = layernorm(x, ln1w_ref, ln1b_ref).astype(mm)
    qkv = (jnp.dot(xn, wqkv_ref[...], preferred_element_type=f32)
           + bqkv_ref[...].astype(f32))                               # (Bn*L, 3D)
    # 1/sqrt(dh) is already folded into the Q columns of wqkv/bqkv (wrapper prep).
    for h in range(n_head):
        q = qkv[:, h * dh:(h + 1) * dh].astype(mm).reshape(Bn, L, dh)
        k = qkv[:, D + h * dh:D + (h + 1) * dh].astype(mm).reshape(Bn, L, dh)
        v = qkv[:, 2 * D + h * dh:2 * D + (h + 1) * dh].astype(mm).reshape(Bn, L, dh)
        s = jnp.einsum('bld,bmd->blm', q, k, preferred_element_type=f32)   # (Bn, L, L)
        s = s - jnp.max(s, axis=-1, keepdims=True)
        p = jnp.exp(s)
        p = p * pl.reciprocal(jnp.sum(p, axis=-1, keepdims=True), approx=True)
        oh = jnp.einsum('blm,bmd->bld', p.astype(mm), v,
                        preferred_element_type=f32)                        # (Bn, L, dh)
        # Park head output in its column slot; temporaries die here (no per-head
        # K=dh matmul, no long-lived f32 accumulator across the head loop).
        oattn_ref[:, :, h * dh:(h + 1) * dh] = oh.astype(mm)
    attn = jnp.dot(oattn_ref[...].reshape(Bn * L, D), wo_ref[...],
                   preferred_element_type=f32)                             # single K=D matmul
    x = x + attn + bo_ref[...].astype(f32)

    # ---- MLP branch ------------------------------------------------------------
    xn2 = layernorm(x, ln2w_ref, ln2b_ref).astype(mm)
    hdn = (jnp.dot(xn2, wfc_ref[...], preferred_element_type=f32)
           + bfc_ref[...].astype(f32))                                     # (Bn*L, 4D) f32
    # QuickGELU: x * sigmoid(1.702 x).  exp in compute dtype (bf16 fast path -> EUP
    # bf16 rate on v6e/v7x; correct-but-not-faster on v5e), reciprocal on the EUP.
    e = jnp.exp(-1.702 * hdn.astype(mm))
    gate = pl.reciprocal(1.0 + e.astype(f32), approx=True)
    act = (hdn * gate).astype(mm)
    mlp = jnp.dot(act, wproj_ref[...], preferred_element_type=f32)         # (Bn*L, D)
    x = x + mlp + bproj_ref[...].astype(f32)

    # Carry the f32 residual stream to the next layer.
    resid_ref[...] = x.reshape(Bn, L, D)

    @pl.when(layer == pl.num_programs(1) - 1)
    def _():
        out_ref[...] = x.reshape(Bn, L, D).astype(out_ref.dtype)


# ----------------------------------------------------------------------------
# VMEM / block planning (generation-aware)
# ----------------------------------------------------------------------------
def _phys_vmem_bytes():
    try:
        info = pltpu.get_tpu_info()
        for attr in ("vmem_capacity_bytes", "vmem_bytes", "vmem_size_bytes"):
            v = getattr(info, attr, None)
            if v:
                return int(v)
    except Exception:
        pass
    return 64 << 20                       # conservative fallback: v7x per-TC VMEM


def _vmem_plan(block_n, L, D, compute_dtype, x_dtype, phys_vmem):
    """Returns (double_buffer_weights, vmem_limit_bytes)."""
    bw = jnp.dtype(compute_dtype).itemsize
    bx = jnp.dtype(x_dtype).itemsize
    rows = block_n * L
    w_layer = 12 * D * D * bw + 13 * D * 4          # matmul weights + biases/LN params
    act_io = 4 * rows * D * bx                       # double-buffered in/out blocks
    scratches = rows * D * (4 + bw)                  # f32 residual + mm head-output scratch
    # Peak live intermediates (~MLP phase dominates): f32 residual + f32 4D hidden +
    # compute-dtype hidden copies, plus attention-phase qkv and per-head score tiles.
    live = rows * D * (4 + 16 + 8 * bw) + rows * 3 * D * 4 + 2 * block_n * L * L * 4
    cap = int(phys_vmem * 0.8)                       # headroom for Mosaic scratch/semaphores
    base = act_io + scratches + live + (4 << 20)
    dbuf_weights = (2 * w_layer + base) <= cap
    need = (2 if dbuf_weights else 1) * w_layer + base
    return dbuf_weights, int(min(max(need, 32 << 20), cap))


# ----------------------------------------------------------------------------
# Wrapper: weight prep (transpose, scale-fold, cast, stack over layers) + call
# ----------------------------------------------------------------------------
def _prep_layer_params(p, n_head, compute_dtype):
    """Pre-transpose matmul weights to (in, out), fold 1/sqrt(dh) into the Q columns,
    and cast matmul weights to compute_dtype.  LN params / biases stay f32."""
    (ln1w, ln1b, wqkv, bqkv, wo, bo, ln2w, ln2b, wfc, bfc, wproj, bproj) = p
    f32 = jnp.float32
    D = wo.shape[0]
    dh = D // n_head
    scale = 1.0 / float(np.sqrt(dh))
    qscale = jnp.concatenate([jnp.full((D,), scale, f32), jnp.ones((2 * D,), f32)])
    wqkv_t = wqkv.T.astype(f32) * qscale[None, :]          # (D, 3D)
    bqkv_s = bqkv.astype(f32) * qscale[None, :]            # (1, 3D)
    return (ln1w.astype(f32), ln1b.astype(f32),
            wqkv_t.astype(compute_dtype), bqkv_s,
            wo.T.astype(compute_dtype), bo.astype(f32),
            ln2w.astype(f32), ln2b.astype(f32),
            wfc.T.astype(compute_dtype), bfc.astype(f32),
            wproj.T.astype(compute_dtype), bproj.astype(f32))


def _prep_and_stack(all_params, n_head, compute_dtype):
    per_layer = [_prep_layer_params(p, n_head, compute_dtype) for p in all_params]
    return [jnp.stack(ts, axis=0) for ts in zip(*per_layer)]   # leading layer axis


def ts_transformer(x_lnd, all_params, n_head, *,
                   compute_dtype=jnp.bfloat16, block_n=None):
    """TSTransformer.forward.  x_lnd: (L, B*T, D) as in the PyTorch module."""
    L, N, D = x_lnd.shape
    n_layers = len(all_params)
    assert D % n_head == 0

    x = jnp.transpose(x_lnd, (1, 0, 2)).astype(compute_dtype)      # (N, L, D)
    stacked = _prep_and_stack(all_params, n_head, compute_dtype)

    phys = _phys_vmem_bytes()
    if block_n is None:
        # Target Bn*L ~ 1024 rows per GEMM on 128-MiB parts (v5e/v6e), ~512 on
        # 64-MiB parts (v7x), but keep >= 2 grid blocks so both v7x TCs get work.
        target_rows = 1024 if phys >= (96 << 20) else 512
        block_n = max(1, min(N, target_rows // max(L, 1)))
        if N // block_n < 2 and N >= 2:
            block_n = pl.cdiv(N, 2)

    n_blocks = pl.cdiv(N, block_n)
    if n_blocks > 1 and n_blocks % 2 == 1:
        n_blocks += 1                        # even block count -> balanced on 2-TC chips
    n_pad = n_blocks * block_n
    if n_pad != N:
        x = jnp.pad(x, ((0, n_pad - N), (0, 0), (0, 0)))           # harmless zero columns

    dbuf_weights, vmem_limit = _vmem_plan(block_n, L, D, compute_dtype, x.dtype, phys)
    wmode = None if dbuf_weights else pl.Buffered(1)

    def weight_spec(trailing_shape):
        nd = len(trailing_shape)
        idx = lambda n, l, _nd=nd: (l,) + (0,) * _nd      # per-layer slice of the stack
        if wmode is None:
            return pl.BlockSpec((None,) + tuple(trailing_shape), idx)
        return pl.BlockSpec((None,) + tuple(trailing_shape), idx, pipeline_mode=wmode)

    in_specs = [pl.BlockSpec((block_n, L, D), lambda n, l: (n, 0, 0))]
    in_specs += [weight_spec(w.shape[1:]) for w in stacked]
    out_spec = pl.BlockSpec((block_n, L, D), lambda n, l: (n, 0, 0))

    out = pl.pallas_call(
        functools.partial(_stack_kernel, n_head=n_head),
        out_shape=jax.ShapeDtypeStruct((n_pad, L, D), x.dtype),
        grid_spec=pltpu.PrefetchScalarGridSpec(
            num_scalar_prefetch=0,
            grid=(n_blocks, n_layers),           # layer axis innermost (sequential)
            in_specs=in_specs,
            out_specs=out_spec,
            scratch_shapes=[
                pltpu.VMEM((block_n, L, D), jnp.float32),   # f32 residual stream
                pltpu.VMEM((block_n, L, D), compute_dtype), # per-head output slots
            ]),
        compiler_params=pltpu.CompilerParams(
            dimension_semantics=("parallel", "arbitrary"),
            vmem_limit_bytes=vmem_limit),
    )(x, *stacked)

    out = out[:N]
    return jnp.transpose(out, (1, 0, 2))                            # back to (L, N, D)


# ----------------------------------------------------------------------------
# Pure-JAX reference (same math, f32, exact softmax) for correctness checks
# ----------------------------------------------------------------------------
def _ref_block(x, p, n_head):
    (ln1w, ln1b, wqkv, bqkv, wo, bo, ln2w, ln2b, wfc, bfc, wproj, bproj) = p
    L, N, D = x.shape
    dh = D // n_head

    def ln(v, w, b):
        mu = jnp.mean(v, -1, keepdims=True)
        var = jnp.mean((v - mu) ** 2, -1, keepdims=True)
        return (v - mu) / jnp.sqrt(var + 1e-5) * w + b

    xn = ln(x, ln1w, ln1b)
    qkv = xn @ wqkv.T + bqkv
    q, k, v = qkv[..., :D], qkv[..., D:2 * D], qkv[..., 2 * D:]
    q = q.reshape(L, N, n_head, dh).transpose(1, 2, 0, 3)
    k = k.reshape(L, N, n_head, dh).transpose(1, 2, 0, 3)
    v = v.reshape(L, N, n_head, dh).transpose(1, 2, 0, 3)
    s = (q @ jnp.swapaxes(k, -1, -2)) / np.sqrt(dh)
    p_att = jax.nn.softmax(s, axis=-1)
    o = (p_att @ v).transpose(2, 0, 1, 3).reshape(L, N, D)
    x = x + (o @ wo.T + bo)

    xn2 = ln(x, ln2w, ln2b)
    h = xn2 @ wfc.T + bfc
    h = h * jax.nn.sigmoid(1.702 * h)
    return x + (h @ wproj.T + bproj)


def _ref_forward(x, all_params, n_head):
    for p in all_params:
        x = _ref_block(x, p, n_head)
    return x


# ----------------------------------------------------------------------------
# Deterministic parameter construction (shapes from the module __init__,
# PyTorch nn.Linear convention: weight is (out_features, in_features))
# ----------------------------------------------------------------------------
def make_params(key, width, layers):
    D = width
    all_params = []
    for li in range(layers):
        keys = jax.random.split(jax.random.fold_in(key, li), 10)
        ln1w = 1.0 + 0.1 * jax.random.normal(keys[4], (1, D), jnp.float32)
        ln1b = 0.1 * jax.random.normal(keys[5], (1, D), jnp.float32)
        wqkv = 0.02 * jax.random.normal(keys[0], (3 * D, D), jnp.float32)
        bqkv = 0.02 * jax.random.normal(keys[6], (1, 3 * D), jnp.float32)
        wo = 0.02 * jax.random.normal(keys[1], (D, D), jnp.float32)
        bo = 0.02 * jax.random.normal(keys[7], (1, D), jnp.float32)
        ln2w = 1.0 + 0.1 * jax.random.normal(keys[8], (1, D), jnp.float32)
        ln2b = 0.1 * jax.random.normal(keys[9], (1, D), jnp.float32)
        wfc = 0.02 * jax.random.normal(keys[2], (4 * D, D), jnp.float32)
        bfc = jnp.zeros((1, 4 * D), jnp.float32)
        wproj = 0.02 * jax.random.normal(keys[3], (D, 4 * D), jnp.float32)
        bproj = jnp.zeros((1, D), jnp.float32)
        all_params.append((ln1w, ln1b, wqkv, bqkv, wo, bo,
                           ln2w, ln2b, wfc, bfc, wproj, bproj))
    return all_params


if __name__ == "__main__":
    # small shapes: width=64, heads=4, layers=2, T=4, batch=2 -> N=8, seq L=8
    width, heads, layers, T, B, L = 64, 4, 2, 4, 2, 8
    N = B * T

    key = jax.random.PRNGKey(0)
    x = jax.random.normal(jax.random.fold_in(key, 123), (L, N, width), jnp.float32)
    params = make_params(key, width, layers)

    ref = _ref_forward(x, params, heads)

    # f32 path, explicit non-dividing block_n=3 -> exercises padding + even block count.
    out_f32 = ts_transformer(x, params, heads,
                             compute_dtype=jnp.float32, block_n=3)
    out_f32 = jax.block_until_ready(out_f32)
    np.testing.assert_allclose(np.asarray(out_f32), np.asarray(ref),
                               rtol=2e-2, atol=2e-2)

    # bf16 fast path (default block_n heuristic): bf16 weights/activations,
    # f32 accumulation, f32 residual stream across layers.
    out_bf16 = ts_transformer(x, params, heads)
    out_bf16 = jax.block_until_ready(out_bf16)
    np.testing.assert_allclose(np.asarray(out_bf16.astype(jnp.float32)),
                               np.asarray(ref), rtol=8e-2, atol=8e-2)

    print("KERNEL_OK")
</pallas_src>

<mosaic_0001>
module attributes {stable_mosaic.version = 11 : i64} {
  func.func @_stack_kernel(%arg0: i32, %arg1: i32, %arg2: memref<3x8x64xf32, #tpu.memory_space<vmem>>, %arg3: memref<1x1x64xf32, #tpu.memory_space<vmem>>, %arg4: memref<1x1x64xf32, #tpu.memory_space<vmem>>, %arg5: memref<1x64x192xf32, #tpu.memory_space<vmem>>, %arg6: memref<1x1x192xf32, #tpu.memory_space<vmem>>, %arg7: memref<1x64x64xf32, #tpu.memory_space<vmem>>, %arg8: memref<1x1x64xf32, #tpu.memory_space<vmem>>, %arg9: memref<1x1x64xf32, #tpu.memory_space<vmem>>, %arg10: memref<1x1x64xf32, #tpu.memory_space<vmem>>, %arg11: memref<1x64x256xf32, #tpu.memory_space<vmem>>, %arg12: memref<1x1x256xf32, #tpu.memory_space<vmem>>, %arg13: memref<1x256x64xf32, #tpu.memory_space<vmem>>, %arg14: memref<1x1x64xf32, #tpu.memory_space<vmem>>, %arg15: memref<3x8x64xf32, #tpu.memory_space<vmem>>, %arg16: memref<3x8x64xf32, #tpu.memory_space<vmem>>, %arg17: memref<3x8x64xf32, #tpu.memory_space<vmem>>) attributes {dimension_semantics = [#tpu.dimension_semantics<parallel>, #tpu.dimension_semantics<arbitrary>], iteration_bounds = array<i64: 4, 2>, scalar_prefetch = 0 : i64, scratch_operands = 2 : i64, tpu.core_type = #tpu.core_type<tc>, window_params = [{transform_indices = @transform_0, window_bounds = array<i64: 3, 8, 64>}, {transform_indices = @transform_1, window_bounds = array<i64: 1, 1, 64>}, {transform_indices = @transform_2, window_bounds = array<i64: 1, 1, 64>}, {transform_indices = @transform_3, window_bounds = array<i64: 1, 64, 192>}, {transform_indices = @transform_4, window_bounds = array<i64: 1, 1, 192>}, {transform_indices = @transform_5, window_bounds = array<i64: 1, 64, 64>}, {transform_indices = @transform_6, window_bounds = array<i64: 1, 1, 64>}, {transform_indices = @transform_7, window_bounds = array<i64: 1, 1, 64>}, {transform_indices = @transform_8, window_bounds = array<i64: 1, 1, 64>}, {transform_indices = @transform_9, window_bounds = array<i64: 1, 64, 256>}, {transform_indices = @transform_10, window_bounds = array<i64: 1, 1, 256>}, {transform_indices = @transform_11, window_bounds = array<i64: 1, 256, 64>}, {transform_indices = @transform_12, window_bounds = array<i64: 1, 1, 64>}, {transform_indices = @transform_13, window_bounds = array<i64: 3, 8, 64>}]} {
    %c0_i32 = arith.constant 0 : i32
    %0 = arith.cmpi eq, %arg1, %c0_i32 : i32
    %1 = arith.extui %0 : i1 to i32
    %c0_i32_0 = arith.constant 0 : i32
    %2 = arith.cmpi ne, %1, %c0_i32_0 : i32
    scf.if %2 {
      %c0_86 = arith.constant 0 : index
      %c0_87 = arith.constant 0 : index
      %c0_88 = arith.constant 0 : index
      %173 = vector.load %arg2[%c0_86, %c0_87, %c0_88] : memref<3x8x64xf32, #tpu.memory_space<vmem>>, vector<3x8x64xf32>
      %c0_89 = arith.constant 0 : index
      %c0_90 = arith.constant 0 : index
      %c0_91 = arith.constant 0 : index
      %174 = vector.load %arg16[%c0_89, %c0_90, %c0_91] : memref<3x8x64xf32, #tpu.memory_space<vmem>>, vector<3x8x64xf32>
      tpu.vector_store %arg16[%c0_89, %c0_90, %c0_91], %173 {strides = array<i32>} : memref<3x8x64xf32, #tpu.memory_space<vmem>>, vector<3x8x64xf32>,
    } else {
    }
    %c0 = arith.constant 0 : index
    %c0_1 = arith.constant 0 : index
    %c0_2 = arith.constant 0 : index
    %3 = vector.load %arg16[%c0, %c0_1, %c0_2] : memref<3x8x64xf32, #tpu.memory_space<vmem>>, vector<3x8x64xf32>
    %4 = vector.shape_cast %3 : vector<3x8x64xf32> to vector<24x64xf32>
    %cst = arith.constant dense<0.000000e+00> : vector<24xf32>
    %5 = vector.multi_reduction <add>, %4, %cst [1] : vector<24x64xf32> to vector<24xf32>
    %6 = vector.shape_cast %5 : vector<24xf32> to vector<24x1xf32>
    %cst_3 = arith.constant 6.400000e+01 : f32
    %7 = vector.broadcast %cst_3 : f32 to vector<24x1xf32>
    %8 = arith.divf %6, %7 : vector<24x1xf32>
    %9 = vector.broadcast %8 : vector<24x1xf32> to vector<24x64xf32>
    %10 = arith.subf %4, %9 : vector<24x64xf32>
    %11 = arith.mulf %10, %10 : vector<24x64xf32>
    %cst_4 = arith.constant dense<0.000000e+00> : vector<24xf32>
    %12 = vector.multi_reduction <add>, %11, %cst_4 [1] : vector<24x64xf32> to vector<24xf32>
    %13 = vector.shape_cast %12 : vector<24xf32> to vector<24x1xf32>
    %cst_5 = arith.constant 6.400000e+01 : f32
    %14 = vector.broadcast %cst_5 : f32 to vector<24x1xf32>
    %15 = arith.divf %13, %14 : vector<24x1xf32>
    %cst_6 = arith.constant 9.99999974E-6 : f32
    %16 = vector.broadcast %cst_6 : f32 to vector<24x1xf32>
    %17 = arith.addf %15, %16 : vector<24x1xf32>
    %18 = math.rsqrt %17 : vector<24x1xf32>
    %19 = vector.broadcast %18 : vector<24x1xf32> to vector<24x64xf32>
    %20 = arith.mulf %10, %19 : vector<24x64xf32>
    %c0_7 = arith.constant 0 : index
    %c0_8 = arith.constant 0 : index
    %c0_9 = arith.constant 0 : index
    %21 = vector.load %arg3[%c0_7, %c0_8, %c0_9] : memref<1x1x64xf32, #tpu.memory_space<vmem>>, vector<1x1x64xf32>
    %22 = vector.shape_cast %21 : vector<1x1x64xf32> to vector<1x64xf32>
    %23 = vector.broadcast %22 : vector<1x64xf32> to vector<24x64xf32>
    %24 = arith.mulf %20, %23 : vector<24x64xf32>
    %c0_10 = arith.constant 0 : index
    %c0_11 = arith.constant 0 : index
    %c0_12 = arith.constant 0 : index
    %25 = vector.load %arg4[%c0_10, %c0_11, %c0_12] : memref<1x1x64xf32, #tpu.memory_space<vmem>>, vector<1x1x64xf32>
    %26 = vector.shape_cast %25 : vector<1x1x64xf32> to vector<1x64xf32>
    %27 = vector.broadcast %26 : vector<1x64xf32> to vector<24x64xf32>
    %28 = arith.addf %24, %27 : vector<24x64xf32>
    %c0_13 = arith.constant 0 : index
    %c0_14 = arith.constant 0 : index
    %c0_15 = arith.constant 0 : index
    %29 = vector.load %arg5[%c0_13, %c0_14, %c0_15] : memref<1x64x192xf32, #tpu.memory_space<vmem>>, vector<1x64x192xf32>
    %30 = vector.shape_cast %29 : vector<1x64x192xf32> to vector<64x192xf32>
    %cst_16 = arith.constant dense<0.000000e+00> : vector<24x192xf32>
    %31 = tpu.matmul %28, %30, %cst_16 {dimension_numbers = #tpu.dot_dimension_numbers<[1], [0], [0], [1], [0, 0, 1, 1], [], []>} : vector<24x64xf32>, vector<64x192xf32>, vector<24x192xf32> -> vector<24x192xf32>
    %c0_17 = arith.constant 0 : index
    %c0_18 = arith.constant 0 : index
    %c0_19 = arith.constant 0 : index
    %32 = vector.load %arg6[%c0_17, %c0_18, %c0_19] : memref<1x1x192xf32, #tpu.memory_space<vmem>>, vector<1x1x192xf32>
    %33 = vector.shape_cast %32 : vector<1x1x192xf32> to vector<1x192xf32>
    %34 = vector.broadcast %33 : vector<1x192xf32> to vector<24x192xf32>
    %35 = arith.addf %31, %34 : vector<24x192xf32>
    %36 = vector.extract_strided_slice %35 {offsets = [0, 0], sizes = [24, 16], strides = [1, 1]} : vector<24x192xf32> to vector<24x16xf32>
    %37 = vector.shape_cast %36 : vector<24x16xf32> to vector<3x8x16xf32>
    %38 = vector.extract_strided_slice %35 {offsets = [0, 64], sizes = [24, 16], strides = [1, 1]} : vector<24x192xf32> to vector<24x16xf32>
    %39 = vector.shape_cast %38 : vector<24x16xf32> to vector<3x8x16xf32>
    %40 = vector.extract_strided_slice %35 {offsets = [0, 128], sizes = [24, 16], strides = [1, 1]} : vector<24x192xf32> to vector<24x16xf32>
    %41 = vector.shape_cast %40 : vector<24x16xf32> to vector<3x8x16xf32>
    "tpu.trace_start"() <{level = 10 : i32, message = "bld,bmd->blm"}> : () -> ()
    %cst_20 = arith.constant dense<0.000000e+00> : vector<3x8x8xf32>
    %42 = tpu.matmul %37, %39, %cst_20 {dimension_numbers = #tpu.dot_dimension_numbers<[2], [2], [1], [1], [0, 0, 0, 1, 1, 1], [0], [0]>} : vector<3x8x16xf32>, vector<3x8x16xf32>, vector<3x8x8xf32> -> vector<3x8x8xf32>
    "tpu.trace_stop"() : () -> ()
    %cst_21 = arith.constant dense<0xFF800000> : vector<3x8xf32>
    %43 = vector.multi_reduction <maximumf>, %42, %cst_21 [2] : vector<3x8x8xf32> to vector<3x8xf32>
    %44 = vector.shape_cast %43 : vector<3x8xf32> to vector<3x8x1xf32>
    %45 = vector.broadcast %44 : vector<3x8x1xf32> to vector<3x8x8xf32>
    %46 = arith.subf %42, %45 : vector<3x8x8xf32>
    %47 = math.exp %46 : vector<3x8x8xf32>
    %cst_22 = arith.constant dense<0.000000e+00> : vector<3x8xf32>
    %48 = vector.multi_reduction <add>, %47, %cst_22 [2] : vector<3x8x8xf32> to vector<3x8xf32>
    %49 = vector.shape_cast %48 : vector<3x8xf32> to vector<3x8x1xf32>
    %50 = tpu.reciprocal %49 {approx = true} : vector<3x8x1xf32> -> vector<3x8x1xf32>
    %51 = vector.broadcast %50 : vector<3x8x1xf32> to vector<3x8x8xf32>
    %52 = arith.mulf %47, %51 : vector<3x8x8xf32>
    "tpu.trace_start"() <{level = 10 : i32, message = "blm,bmd->bld"}> : () -> ()
    %cst_23 = arith.constant dense<0.000000e+00> : vector<3x8x16xf32>
    %53 = tpu.matmul %52, %41, %cst_23 {dimension_numbers = #tpu.dot_dimension_numbers<[2], [1], [1], [2], [0, 0, 0, 1, 1, 2], [0], [0]>} : vector<3x8x8xf32>, vector<3x8x16xf32>, vector<3x8x16xf32> -> vector<3x8x16xf32>
    "tpu.trace_stop"() : () -> ()
    %c0_24 = arith.constant 0 : index
    %c0_25 = arith.constant 0 : index
    %c0_26 = arith.constant 0 : index
    %54 = vector.load %arg17[%c0_24, %c0_25, %c0_26] : memref<3x8x64xf32, #tpu.memory_space<vmem>>, vector<3x8x16xf32>
    tpu.vector_store %arg17[%c0_24, %c0_25, %c0_26], %53 {strides = array<i32>} : memref<3x8x64xf32, #tpu.memory_space<vmem>>, vector<3x8x16xf32>,
    %55 = vector.extract_strided_slice %35 {offsets = [0, 16], sizes = [24, 16], strides = [1, 1]} : vector<24x192xf32> to vector<24x16xf32>
    %56 = vector.shape_cast %55 : vector<24x16xf32> to vector<3x8x16xf32>
    %57 = vector.extract_strided_slice %35 {offsets = [0, 80], sizes = [24, 16], strides = [1, 1]} : vector<24x192xf32> to vector<24x16xf32>
    %58 = vector.shape_cast %57 : vector<24x16xf32> to vector<3x8x16xf32>
    %59 = vector.extract_strided_slice %35 {offsets = [0, 144], sizes = [24, 16], strides = [1, 1]} : vector<24x192xf32> to vector<24x16xf32>
    %60 = vector.shape_cast %59 : vector<24x16xf32> to vector<3x8x16xf32>
    "tpu.trace_start"() <{level = 10 : i32, message = "bld,bmd->blm"}> : () -> ()
    %cst_27 = arith.constant dense<0.000000e+00> : vector<3x8x8xf32>
    %61 = tpu.matmul %56, %58, %cst_27 {dimension_numbers = #tpu.dot_dimension_numbers<[2], [2], [1], [1], [0, 0, 0, 1, 1, 1], [0], [0]>} : vector<3x8x16xf32>, vector<3x8x16xf32>, vector<3x8x8xf32> -> vector<3x8x8xf32>
    "tpu.trace_stop"() : () -> ()
    %cst_28 = arith.constant dense<0xFF800000> : vector<3x8xf32>
    %62 = vector.multi_reduction <maximumf>, %61, %cst_28 [2] : vector<3x8x8xf32> to vector<3x8xf32>
    %63 = vector.shape_cast %62 : vector<3x8xf32> to vector<3x8x1xf32>
    %64 = vector.broadcast %63 : vector<3x8x1xf32> to vector<3x8x8xf32>
    %65 = arith.subf %61, %64 : vector<3x8x8xf32>
    %66 = math.exp %65 : vector<3x8x8xf32>
    %cst_29 = arith.constant dense<0.000000e+00> : vector<3x8xf32>
    %67 = vector.multi_reduction <add>, %66, %cst_29 [2] : vector<3x8x8xf32> to vector<3x8xf32>
    %68 = vector.shape_cast %67 : vector<3x8xf32> to vector<3x8x1xf32>
    %69 = tpu.reciprocal %68 {approx = true} : vector<3x8x1xf32> -> vector<3x8x1xf32>
    %70 = vector.broadcast %69 : vector<3x8x1xf32> to vector<3x8x8xf32>
    %71 = arith.mulf %66, %70 : vector<3x8x8xf32>
    "tpu.trace_start"() <{level = 10 : i32, message = "blm,bmd->bld"}> : () -> ()
    %cst_30 = arith.constant dense<0.000000e+00> : vector<3x8x16xf32>
    %72 = tpu.matmul %71, %60, %cst_30 {dimension_numbers = #tpu.dot_dimension_numbers<[2], [1], [1], [2], [0, 0, 0, 1, 1, 2], [0], [0]>} : vector<3x8x8xf32>, vector<3x8x16xf32>, vector<3x8x16xf32> -> vector<3x8x16xf32>
    "tpu.trace_stop"() : () -> ()
    %c0_31 = arith.constant 0 : index
    %c0_32 = arith.constant 0 : index
    %c16 = arith.constant 16 : index
    %73 = vector.load %arg17[%c0_31, %c0_32, %c16] : memref<3x8x64xf32, #tpu.memory_space<vmem>>, vector<3x8x16xf32>
    tpu.vector_store %arg17[%c0_31, %c0_32, %c16], %72 {strides = array<i32>} : memref<3x8x64xf32, #tpu.memory_space<vmem>>, vector<3x8x16xf32>,
    %74 = vector.extract_strided_slice %35 {offsets = [0, 32], sizes = [24, 16], strides = [1, 1]} : vector<24x192xf32> to vector<24x16xf32>
    %75 = vector.shape_cast %74 : vector<24x16xf32> to vector<3x8x16xf32>
    %76 = vector.extract_strided_slice %35 {offsets = [0, 96], sizes = [24, 16], strides = [1, 1]} : vector<24x192xf32> to vector<24x16xf32>
    %77 = vector.shape_cast %76 : vector<24x16xf32> to vector<3x8x16xf32>
    %78 = vector.extract_strided_slice %35 {offsets = [0, 160], sizes = [24, 16], strides = [1, 1]} : vector<24x192xf32> to vector<24x16xf32>
    %79 = vector.shape_cast %78 : vector<24x16xf32> to vector<3x8x16xf32>
    "tpu.trace_start"() <{level = 10 : i32, message = "bld,bmd->blm"}> : () -> ()
    %cst_33 = arith.constant dense<0.000000e+00> : vector<3x8x8xf32>
    %80 = tpu.matmul %75, %77, %cst_33 {dimension_numbers = #tpu.dot_dimension_numbers<[2], [2], [1], [1], [0, 0, 0, 1, 1, 1], [0], [0]>} : vector<3x8x16xf32>, vector<3x8x16xf32>, vector<3x8x8xf32> -> vector<3x8x8xf32>
    "tpu.trace_stop"() : () -> ()
    %cst_34 = arith.constant dense<0xFF800000> : vector<3x8xf32>
    %81 = vector.multi_reduction <maximumf>, %80, %cst_34 [2] : vector<3x8x8xf32> to vector<3x8xf32>
    %82 = vector.shape_cast %81 : vector<3x8xf32> to vector<3x8x1xf32>
    %83 = vector.broadcast %82 : vector<3x8x1xf32> to vector<3x8x8xf32>
    %84 = arith.subf %80, %83 : vector<3x8x8xf32>
    %85 = math.exp %84 : vector<3x8x8xf32>
    %cst_35 = arith.constant dense<0.000000e+00> : vector<3x8xf32>
    %86 = vector.multi_reduction <add>, %85, %cst_35 [2] : vector<3x8x8xf32> to vector<3x8xf32>
    %87 = vector.shape_cast %86 : vector<3x8xf32> to vector<3x8x1xf32>
    %88 = tpu.reciprocal %87 {approx = true} : vector<3x8x1xf32> -> vector<3x8x1xf32>
    %89 = vector.broadcast %88 : vector<3x8x1xf32> to vector<3x8x8xf32>
    %90 = arith.mulf %85, %89 : vector<3x8x8xf32>
    "tpu.trace_start"() <{level = 10 : i32, message = "blm,bmd->bld"}> : () -> ()
    %cst_36 = arith.constant dense<0.000000e+00> : vector<3x8x16xf32>
    %91 = tpu.matmul %90, %79, %cst_36 {dimension_numbers = #tpu.dot_dimension_numbers<[2], [1], [1], [2], [0, 0, 0, 1, 1, 2], [0], [0]>} : vector<3x8x8xf32>, vector<3x8x16xf32>, vector<3x8x16xf32> -> vector<3x8x16xf32>
    "tpu.trace_stop"() : () -> ()
    %c0_37 = arith.constant 0 : index
    %c0_38 = arith.constant 0 : index
    %c32 = arith.constant 32 : index
    %92 = vector.load %arg17[%c0_37, %c0_38, %c32] : memref<3x8x64xf32, #tpu.memory_space<vmem>>, vector<3x8x16xf32>
    tpu.vector_store %arg17[%c0_37, %c0_38, %c32], %91 {strides = array<i32>} : memref<3x8x64xf32, #tpu.memory_space<vmem>>, vector<3x8x16xf32>,
    %93 = vector.extract_strided_slice %35 {offsets = [0, 48], sizes = [24, 16], strides = [1, 1]} : vector<24x192xf32> to vector<24x16xf32>
    %94 = vector.shape_cast %93 : vector<24x16xf32> to vector<3x8x16xf32>
    %95 = vector.extract_strided_slice %35 {offsets = [0, 112], sizes = [24, 16], strides = [1, 1]} : vector<24x192xf32> to vector<24x16xf32>
    %96 = vector.shape_cast %95 : vector<24x16xf32> to vector<3x8x16xf32>
    %97 = vector.extract_strided_slice %35 {offsets = [0, 176], sizes = [24, 16], strides = [1, 1]} : vector<24x192xf32> to vector<24x16xf32>
    %98 = vector.shape_cast %97 : vector<24x16xf32> to vector<3x8x16xf32>
    "tpu.trace_start"() <{level = 10 : i32, message = "bld,bmd->blm"}> : () -> ()
    %cst_39 = arith.constant dense<0.000000e+00> : vector<3x8x8xf32>
    %99 = tpu.matmul %94, %96, %cst_39 {dimension_numbers = #tpu.dot_dimension_numbers<[2], [2], [1], [1], [0, 0, 0, 1, 1, 1], [0], [0]>} : vector<3x8x16xf32>, vector<3x8x16xf32>, vector<3x8x8xf32> -> vector<3x8x8xf32>
    "tpu.trace_stop"() : () -> ()
    %cst_40 = arith.constant dense<0xFF800000> : vector<3x8xf32>
    %100 = vector.multi_reduction <maximumf>, %99, %cst_40 [2] : vector<3x8x8xf32> to vector<3x8xf32>
    %101 = vector.shape_cast %100 : vector<3x8xf32> to vector<3x8x1xf32>
    %102 = vector.broadcast %101 : vector<3x8x1xf32> to vector<3x8x8xf32>
    %103 = arith.subf %99, %102 : vector<3x8x8xf32>
    %104 = math.exp %103 : vector<3x8x8xf32>
    %cst_41 = arith.constant dense<0.000000e+00> : vector<3x8xf32>
    %105 = vector.multi_reduction <add>, %104, %cst_41 [2] : vector<3x8x8xf32> to vector<3x8xf32>
    %106 = vector.shape_cast %105 : vector<3x8xf32> to vector<3x8x1xf32>
    %107 = tpu.reciprocal %106 {approx = true} : vector<3x8x1xf32> -> vector<3x8x1xf32>
    %108 = vector.broadcast %107 : vector<3x8x1xf32> to vector<3x8x8xf32>
    %109 = arith.mulf %104, %108 : vector<3x8x8xf32>
    "tpu.trace_start"() <{level = 10 : i32, message = "blm,bmd->bld"}> : () -> ()
    %cst_42 = arith.constant dense<0.000000e+00> : vector<3x8x16xf32>
    %110 = tpu.matmul %109, %98, %cst_42 {dimension_numbers = #tpu.dot_dimension_numbers<[2], [1], [1], [2], [0, 0, 0, 1, 1, 2], [0], [0]>} : vector<3x8x8xf32>, vector<3x8x16xf32>, vector<3x8x16xf32> -> vector<3x8x16xf32>
    "tpu.trace_stop"() : () -> ()
    %c0_43 = arith.constant 0 : index
    %c0_44 = arith.constant 0 : index
    %c48 = arith.constant 48 : index
    %111 = vector.load %arg17[%c0_43, %c0_44, %c48] : memref<3x8x64xf32, #tpu.memory_space<vmem>>, vector<3x8x16xf32>
    tpu.vector_store %arg17[%c0_43, %c0_44, %c48], %110 {strides = array<i32>} : memref<3x8x64xf32, #tpu.memory_space<vmem>>, vector<3x8x16xf32>,
    %c0_45 = arith.constant 0 : index
    %c0_46 = arith.constant 0 : index
    %c0_47 = arith.constant 0 : index
    %112 = vector.load %arg17[%c0_45, %c0_46, %c0_47] : memref<3x8x64xf32, #tpu.memory_space<vmem>>, vector<3x8x64xf32>
    %113 = vector.shape_cast %112 : vector<3x8x64xf32> to vector<24x64xf32>
    %c0_48 = arith.constant 0 : index
    %c0_49 = arith.constant 0 : index
    %c0_50 = arith.constant 0 : index
    %114 = vector.load %arg7[%c0_48, %c0_49, %c0_50] : memref<1x64x64xf32, #tpu.memory_space<vmem>>, vector<1x64x64xf32>
    %115 = vector.shape_cast %114 : vector<1x64x64xf32> to vector<64x64xf32>
    %cst_51 = arith.constant dense<0.000000e+00> : vector<24x64xf32>
    %116 = tpu.matmul %113, %115, %cst_51 {dimension_numbers = #tpu.dot_dimension_numbers<[1], [0], [0], [1], [0, 0, 1, 1], [], []>} : vector<24x64xf32>, vector<64x64xf32>, vector<24x64xf32> -> vector<24x64xf32>
    %117 = arith.addf %4, %116 : vector<24x64xf32>
    %c0_52 = arith.constant 0 : index
    %c0_53 = arith.constant 0 : index
    %c0_54 = arith.constant 0 : index
    %118 = vector.load %arg8[%c0_52, %c0_53, %c0_54] : memref<1x1x64xf32, #tpu.memory_space<vmem>>, vector<1x1x64xf32>
    %119 = vector.shape_cast %118 : vector<1x1x64xf32> to vector<1x64xf32>
    %120 = vector.broadcast %119 : vector<1x64xf32> to vector<24x64xf32>
    %121 = arith.addf %117, %120 : vector<24x64xf32>
    %cst_55 = arith.constant dense<0.000000e+00> : vector<24xf32>
    %122 = vector.multi_reduction <add>, %121, %cst_55 [1] : vector<24x64xf32> to vector<24xf32>
    %123 = vector.shape_cast %122 : vector<24xf32> to vector<24x1xf32>
    %cst_56 = arith.constant 6.400000e+01 : f32
    %124 = vector.broadcast %cst_56 : f32 to vector<24x1xf32>
    %125 = arith.divf %123, %124 : vector<24x1xf32>
    %126 = vector.broadcast %125 : vector<24x1xf32> to vector<24x64xf32>
    %127 = arith.subf %121, %126 : vector<24x64xf32>
    %128 = arith.mulf %127, %127 : vector<24x64xf32>
    %cst_57 = arith.constant dense<0.000000e+00> : vector<24xf32>
    %129 = vector.multi_reduction <add>, %128, %cst_57 [1] : vector<24x64xf32> to vector<24xf32>
    %130 = vector.shape_cast %129 : vector<24xf32> to vector<24x1xf32>
    %cst_58 = arith.constant 6.400000e+01 : f32
    %131 = vector.broadcast %cst_58 : f32 to vector<24x1xf32>
    %132 = arith.divf %130, %131 : vector<24x1xf32>
    %cst_59 = arith.constant 9.99999974E-6 : f32
    %133 = vector.broadcast %cst_59 : f32 to vector<24x1xf32>
    %134 = arith.addf %132, %133 : vector<24x1xf32>
    %135 = math.rsqrt %134 : vector<24x1xf32>
    %136 = vector.broadcast %135 : vector<24x1xf32> to vector<24x64xf32>
    %137 = arith.mulf %127, %136 : vector<24x64xf32>
    %c0_60 = arith.constant 0 : index
    %c0_61 = arith.constant 0 : index
    %c0_62 = arith.constant 0 : index
    %138 = vector.load %arg9[%c0_60, %c0_61, %c0_62] : memref<1x1x64xf32, #tpu.memory_space<vmem>>, vector<1x1x64xf32>
    %139 = vector.shape_cast %138 : vector<1x1x64xf32> to vector<1x64xf32>
    %140 = vector.broadcast %139 : vector<1x64xf32> to vector<24x64xf32>
    %141 = arith.mulf %137, %140 : vector<24x64xf32>
    %c0_63 = arith.constant 0 : index
    %c0_64 = arith.constant 0 : index
    %c0_65 = arith.constant 0 : index
    %142 = vector.load %arg10[%c0_63, %c0_64, %c0_65] : memref<1x1x64xf32, #tpu.memory_space<vmem>>, vector<1x1x64xf32>
    %143 = vector.shape_cast %142 : vector<1x1x64xf32> to vector<1x64xf32>
    %144 = vector.broadcast %143 : vector<1x64xf32> to vector<24x64xf32>
    %145 = arith.addf %141, %144 : vector<24x64xf32>
    %c0_66 = arith.constant 0 : index
    %c0_67 = arith.constant 0 : index
    %c0_68 = arith.constant 0 : index
    %146 = vector.load %arg11[%c0_66, %c0_67, %c0_68] : memref<1x64x256xf32, #tpu.memory_space<vmem>>, vector<1x64x256xf32>
    %147 = vector.shape_cast %146 : vector<1x64x256xf32> to vector<64x256xf32>
    %cst_69 = arith.constant dense<0.000000e+00> : vector<24x256xf32>
    %148 = tpu.matmul %145, %147, %cst_69 {dimension_numbers = #tpu.dot_dimension_numbers<[1], [0], [0], [1], [0, 0, 1, 1], [], []>} : vector<24x64xf32>, vector<64x256xf32>, vector<24x256xf32> -> vector<24x256xf32>
    %c0_70 = arith.constant 0 : index
    %c0_71 = arith.constant 0 : index
    %c0_72 = arith.constant 0 : index
    %149 = vector.load %arg12[%c0_70, %c0_71, %c0_72] : memref<1x1x256xf32, #tpu.memory_space<vmem>>, vector<1x1x256xf32>
    %150 = vector.shape_cast %149 : vector<1x1x256xf32> to vector<1x256xf32>
    %151 = vector.broadcast %150 : vector<1x256xf32> to vector<24x256xf32>
    %152 = arith.addf %148, %151 : vector<24x256xf32>
    %cst_73 = arith.constant -1.702000e+00 : f32
    %153 = vector.broadcast %cst_73 : f32 to vector<24x256xf32>
    %154 = arith.mulf %153, %152 : vector<24x256xf32>
    %155 = math.exp %154 : vector<24x256xf32>
    %cst_74 = arith.constant 1.000000e+00 : f32
    %156 = vector.broadcast %cst_74 : f32 to vector<24x256xf32>
    %157 = arith.addf %156, %155 : vector<24x256xf32>
    %158 = tpu.reciprocal %157 {approx = true} : vector<24x256xf32> -> vector<24x256xf32>
    %159 = arith.mulf %152, %158 : vector<24x256xf32>
    %c0_75 = arith.constant 0 : index
    %c0_76 = arith.constant 0 : index
    %c0_77 = arith.constant 0 : index
    %160 = vector.load %arg13[%c0_75, %c0_76, %c0_77] : memref<1x256x64xf32, #tpu.memory_space<vmem>>, vector<1x256x64xf32>
    %161 = vector.shape_cast %160 : vector<1x256x64xf32> to vector<256x64xf32>
    %cst_78 = arith.constant dense<0.000000e+00> : vector<24x64xf32>
    %162 = tpu.matmul %159, %161, %cst_78 {dimension_numbers = #tpu.dot_dimension_numbers<[1], [0], [0], [1], [0, 0, 1, 1], [], []>} : vector<24x256xf32>, vector<256x64xf32>, vector<24x64xf32> -> vector<24x64xf32>
    %163 = arith.addf %121, %162 : vector<24x64xf32>
    %c0_79 = arith.constant 0 : index
    %c0_80 = arith.constant 0 : index
    %c0_81 = arith.constant 0 : index
    %164 = vector.load %arg14[%c0_79, %c0_80, %c0_81] : memref<1x1x64xf32, #tpu.memory_space<vmem>>, vector<1x1x64xf32>
    %165 = vector.shape_cast %164 : vector<1x1x64xf32> to vector<1x64xf32>
    %166 = vector.broadcast %165 : vector<1x64xf32> to vector<24x64xf32>
    %167 = arith.addf %163, %166 : vector<24x64xf32>
    %168 = vector.shape_cast %167 : vector<24x64xf32> to vector<3x8x64xf32>
    %c0_82 = arith.constant 0 : index
    %c0_83 = arith.constant 0 : index
    %c0_84 = arith.constant 0 : index
    %169 = vector.load %arg16[%c0_82, %c0_83, %c0_84] : memref<3x8x64xf32, #tpu.memory_space<vmem>>, vector<3x8x64xf32>
    tpu.vector_store %arg16[%c0_82, %c0_83, %c0_84], %168 {strides = array<i32>} : memref<3x8x64xf32, #tpu.memory_space<vmem>>, vector<3x8x64xf32>,
    %c1_i32 = arith.constant 1 : i32
    %170 = arith.cmpi eq, %arg1, %c1_i32 : i32
    %171 = arith.extui %170 : i1 to i32
    %c0_i32_85 = arith.constant 0 : i32
    %172 = arith.cmpi ne, %171, %c0_i32_85 : i32
    scf.if %172 {
      %173 = vector.shape_cast %167 : vector<24x64xf32> to vector<3x8x64xf32>
      %c0_86 = arith.constant 0 : index
      %c0_87 = arith.constant 0 : index
      %c0_88 = arith.constant 0 : index
      %174 = vector.load %arg15[%c0_86, %c0_87, %c0_88] : memref<3x8x64xf32, #tpu.memory_space<vmem>>, vector<3x8x64xf32>
      tpu.vector_store %arg15[%c0_86, %c0_87, %c0_88], %173 {strides = array<i32>} : memref<3x8x64xf32, #tpu.memory_space<vmem>>, vector<3x8x64xf32>,
    } else {
    }
    return
  }
  func.func @transform_0(%arg0: i32, %arg1: i32) -> (i32, i32, i32) {
    %c0_i32 = arith.constant 0 : i32
    %c0_i32_0 = arith.constant 0 : i32
    %c0_i32_1 = arith.constant 0 : i32
    return %arg0, %c0_i32, %c0_i32_0 : i32, i32, i32
  }
  func.func @transform_1(%arg0: i32, %arg1: i32) -> (i32, i32, i32) {
    %c0_i32 = arith.constant 0 : i32
    %c0_i32_0 = arith.constant 0 : i32
    %c0_i32_1 = arith.constant 0 : i32
    return %arg1, %c0_i32, %c0_i32_0 : i32, i32, i32
  }
  func.func @transform_2(%arg0: i32, %arg1: i32) -> (i32, i32, i32) {
    %c0_i32 = arith.constant 0 : i32
    %c0_i32_0 = arith.constant 0 : i32
    %c0_i32_1 = arith.constant 0 : i32
    return %arg1, %c0_i32, %c0_i32_0 : i32, i32, i32
  }
  func.func @transform_3(%arg0: i32, %arg1: i32) -> (i32, i32, i32) {
    %c0_i32 = arith.constant 0 : i32
    %c0_i32_0 = arith.constant 0 : i32
    %c0_i32_1 = arith.constant 0 : i32
    return %arg1, %c0_i32, %c0_i32_0 : i32, i32, i32
  }
  func.func @transform_4(%arg0: i32, %arg1: i32) -> (i32, i32, i32) {
    %c0_i32 = arith.constant 0 : i32
    %c0_i32_0 = arith.constant 0 : i32
    %c0_i32_1 = arith.constant 0 : i32
    return %arg1, %c0_i32, %c0_i32_0 : i32, i32, i32
  }
  func.func @transform_5(%arg0: i32, %arg1: i32) -> (i32, i32, i32) {
    %c0_i32 = arith.constant 0 : i32
    %c0_i32_0 = arith.constant 0 : i32
    %c0_i32_1 = arith.constant 0 : i32
    return %arg1, %c0_i32, %c0_i32_0 : i32, i32, i32
  }
  func.func @transform_6(%arg0: i32, %arg1: i32) -> (i32, i32, i32) {
    %c0_i32 = arith.constant 0 : i32
    %c0_i32_0 = arith.constant 0 : i32
    %c0_i32_1 = arith.constant 0 : i32
    return %arg1, %c0_i32, %c0_i32_0 : i32, i32, i32
  }
  func.func @transform_7(%arg0: i32, %arg1: i32) -> (i32, i32, i32) {
    %c0_i32 = arith.constant 0 : i32
    %c0_i32_0 = arith.constant 0 : i32
    %c0_i32_1 = arith.constant 0 : i32
    return %arg1, %c0_i32, %c0_i32_0 : i32, i32, i32
  }
  func.func @transform_8(%arg0: i32, %arg1: i32) -> (i32, i32, i32) {
    %c0_i32 = arith.constant 0 : i32
    %c0_i32_0 = arith.constant 0 : i32
    %c0_i32_1 = arith.constant 0 : i32
    return %arg1, %c0_i32, %c0_i32_0 : i32, i32, i32
  }
  func.func @transform_9(%arg0: i32, %arg1: i32) -> (i32, i32, i32) {
    %c0_i32 = arith.constant 0 : i32
    %c0_i32_0 = arith.constant 0 : i32
    %c0_i32_1 = arith.constant 0 : i32
    return %arg1, %c0_i32, %c0_i32_0 : i32, i32, i32
  }
  func.func @transform_10(%arg0: i32, %arg1: i32) -> (i32, i32, i32) {
    %c0_i32 = arith.constant 0 : i32
    %c0_i32_0 = arith.constant 0 : i32
    %c0_i32_1 = arith.constant 0 : i32
    return %arg1, %c0_i32, %c0_i32_0 : i32, i32, i32
  }
  func.func @transform_11(%arg0: i32, %arg1: i32) -> (i32, i32, i32) {
    %c0_i32 = arith.constant 0 : i32
    %c0_i32_0 = arith.constant 0 : i32
    %c0_i32_1 = arith.constant 0 : i32
    return %arg1, %c0_i32, %c0_i32_0 : i32, i32, i32
  }
  func.func @transform_12(%arg0: i32, %arg1: i32) -> (i32, i32, i32) {
    %c0_i32 = arith.constant 0 : i32
    %c0_i32_0 = arith.constant 0 : i32
    %c0_i32_1 = arith.constant 0 : i32
    return %arg1, %c0_i32, %c0_i32_0 : i32, i32, i32
  }
  func.func @transform_13(%arg0: i32, %arg1: i32) -> (i32, i32, i32) {
    %c0_i32 = arith.constant 0 : i32
    %c0_i32_0 = arith.constant 0 : i32
    %c0_i32_1 = arith.constant 0 : i32
    return %arg0, %c0_i32, %c0_i32_0 : i32, i32, i32
  }
}

</mosaic_0001>

<llo_original>
// kernel: tpu_custom_call.1
$region0: #{tpu_custom_call.1}
  #allocation0 [shape = 'u32[]', space=smem, size = 0x4, offset = 0x4, fixed_abs, tag = 'smem constant byte address 0x4 - core index']
  #allocation1 [shape = 'u32[144,128]{1,0:T(1,128)}', space=vmem, size = 0x12000, scoped, tag = 'internal scratch']
  #allocation2 [shape = 'f32[3,8,64]{2,1,0:T(8,128)}', space=vmem, size = 0x3000, scoped, tag = 'scratch operand']
  #allocation3 [shape = 'f32[3,8,64]{2,1,0:T(8,128)}', space=vmem, size = 0x3000, scoped, tag = 'scratch operand']
  %s0 = inlined_call_operand.vmem [shape: f32[12,8,64], index: 0, kind: input, shape index: {}]
  %s1 = inlined_call_operand.vmem [shape: f32[2,1,64], index: 1, kind: input, shape index: {}]
  %s2 = inlined_call_operand.vmem [shape: f32[2,1,64], index: 2, kind: input, shape index: {}]
  %s3 = inlined_call_operand.vmem [shape: f32[2,64,192], index: 3, kind: input, shape index: {}]
  %s4 = inlined_call_operand.vmem [shape: f32[2,1,192], index: 4, kind: input, shape index: {}]
  %s5 = inlined_call_operand.vmem [shape: f32[2,64,64], index: 5, kind: input, shape index: {}]
  %s6 = inlined_call_operand.vmem [shape: f32[2,1,64], index: 6, kind: input, shape index: {}]
  %s7 = inlined_call_operand.vmem [shape: f32[2,1,64], index: 7, kind: input, shape index: {}]
  %s8 = inlined_call_operand.vmem [shape: f32[2,1,64], index: 8, kind: input, shape index: {}]
  %s9 = inlined_call_operand.vmem [shape: f32[2,64,256], index: 9, kind: input, shape index: {}]
  %s10 = inlined_call_operand.vmem [shape: f32[2,1,256], index: 10, kind: input, shape index: {}]
  %s11 = inlined_call_operand.vmem [shape: f32[2,256,64], index: 11, kind: input, shape index: {}]
  %s12 = inlined_call_operand.vmem [shape: f32[2,1,64], index: 12, kind: input, shape index: {}]
  %s13 = inlined_call_operand.hbm [shape: f32[12,8,64], index: 13, kind: output, shape index: {}]
  %s14 = sld [smem:[#allocation0]]
  $region93: #{tpu_custom_call.1} parent=0
    _
  %s16 = ssub.s32 1, %s14
  %s17 = scalar_select 0, %s16, %s14
  $region1: #{tpu_custom_call.1} parent=0
    #allocation4 [shape = 'u8[24576]{0}', space=vmem, size = 0x6000, scoped, tag = 'output window, operand 0']
    #allocation5 [shape = 's32[2]{0}', space=sflag, size = 0x8, scoped, tag = 'scoped memory for tpu_custom_call.1']
    %18 = vsyncpa [#allocation5], 0
    %s19 = scalar_lea.sflag [#allocation5], 1
    %20 = vsyncpa %s19, 0
    loop: start=0, step=1, limit=10
    $region2: #{tpu_custom_call.1} parent=1 // loop_pre_header
      _
    $region3: #{tpu_custom_call.1} parent=1 // loop_header
      %s22 = sphi 0, %s26
      %p23 = scmp.ge.s32.totalorder %s22, 10
      %s29 = sphi 0, %s41
      %s30 = sphi 0, %s37
      %s31 = sphi 0, %s29
      %s32 = sphi 0, %s30
      %s33 = sphi 0, %s31
      %s34 = sphi 0, %s32
      %s44 = sphi 0, %s46
      %s47 = sphi 0, %s44
      %s48 = sphi 0, %s47
      %s64 = sphi 0, %s48
      %s70 = sphi 0, %s72
      %s73 = sphi 0, %s70
      %s74 = sphi 0, %s73
      %s90 = sphi 0, %s74
      %s96 = sphi 0, %s98
      %s99 = sphi 0, %s96
      %s100 = sphi 0, %s99
      %s116 = sphi 0, %s100
      %s122 = sphi 0, %s124
      %s125 = sphi 0, %s122
      %s126 = sphi 0, %s125
      %s142 = sphi 0, %s126
      %s148 = sphi 0, %s150
      %s151 = sphi 0, %s148
      %s152 = sphi 0, %s151
      %s168 = sphi 0, %s152
      %s174 = sphi 0, %s176
      %s177 = sphi 0, %s174
      %s178 = sphi 0, %s177
      %s194 = sphi 0, %s178
      %s200 = sphi 0, %s202
      %s203 = sphi 0, %s200
      %s204 = sphi 0, %s203
      %s220 = sphi 0, %s204
      %s226 = sphi 0, %s228
      %s229 = sphi 0, %s226
      %s230 = sphi 0, %s229
      %s246 = sphi 0, %s230
      %s252 = sphi 0, %s254
      %s255 = sphi 0, %s252
      %s256 = sphi 0, %s255
      %s272 = sphi 0, %s256
      %s278 = sphi 0, %s280
      %s281 = sphi 0, %s278
      %s282 = sphi 0, %s281
      %s298 = sphi 0, %s282
      %s304 = sphi 0, %s306
      %s307 = sphi 0, %s304
      %s308 = sphi 0, %s307
      %s324 = sphi 0, %s308
      %s330 = sphi 0, %s332
      %s333 = sphi 0, %s330
      %s334 = sphi 0, %s333
      %s350 = sphi 0, %s334
      %s356 = sphi 0, %s358
      %s359 = sphi 0, %s356
      %s360 = sphi 0, %s359
      %s376 = sphi 0, %s360
      %s382 = sphi 0, %s384
      %s385 = sphi 0, %s382
      %s386 = sphi 0, %s385
      %s402 = sphi 0, %s386
    $region4: #{tpu_custom_call.1} parent=1 // loop_header_branch
      %25 = sbr.rel (%p23) target = $region8
    $region5: #{tpu_custom_call.1} parent=1 // loop_body
      %s27 = ssub.s32 %s22, 1
      %s28 = ssub.s32 %s22, 2
      %s35 = sadd.s32 1, %s30
      %p36 = scmp.ge.s32.totalorder %s35, 2
      %s37 = scalar_select %p36, 0, %s35
      %s38 = sadd.s32 1, %s29
      %s39 = scalar_select %p36, %s38, %s29
      %p40 = scmp.ge.s32.totalorder %s39, 4
      %s41 = scalar_select %p40, 0, %s39
      %s42 = ssub.s32 %s29, %s41
      %p43 = scmp.eq.s32.totalorder %s42, 0
      %s45 = sadd.s32 %s44, 1
      %s46 = scalar_select %p43, %s44, %s45
      %p49 = pneg %p43
      %p50 = scmp.eq.s32.totalorder %s22, 7
      %p51 = por %p49, %p50
      %p52 = scmp.ne.s32.totalorder %s44, %s47
      %p53 = scmp.eq.s32.totalorder %s22, 0
      %p54 = por %p52, %p53
      %p55 = scmp.ne.s32.totalorder %s44, %s47
      %p56 = scmp.eq.s32.totalorder %s27, 7
      %p57 = por %p55, %p56
      %p58 = scmp.ne.s32.totalorder %s47, %s48
      %p59 = scmp.eq.s32.totalorder %s27, 0
      %p60 = por %p58, %p59
      %p61 = scmp.ne.s32.totalorder %s47, %s48
      %p62 = scmp.eq.s32.totalorder %s28, 7
      %p63 = por %p61, %p62
      %p65 = scmp.ne.s32.totalorder %s48, %s64
      %p66 = scmp.eq.s32.totalorder %s28, 0
      %p67 = por %p65, %p66
      %s68 = ssub.s32 %s30, %s37
      %p69 = scmp.eq.s32.totalorder %s68, 0
      %s71 = sadd.s32 %s70, 1
      %s72 = scalar_select %p69, %s70, %s71
      %p75 = pneg %p69
      %p76 = scmp.eq.s32.totalorder %s22, 7
      %p77 = por %p75, %p76
      %p78 = scmp.ne.s32.totalorder %s70, %s73
      %p79 = scmp.eq.s32.totalorder %s22, 0
      %p80 = por %p78, %p79
      %p81 = scmp.ne.s32.totalorder %s70, %s73
      %p82 = scmp.eq.s32.totalorder %s27, 7
      %p83 = por %p81, %p82
      %p84 = scmp.ne.s32.totalorder %s73, %s74
      %p85 = scmp.eq.s32.totalorder %s27, 0
      %p86 = por %p84, %p85
      %p87 = scmp.ne.s32.totalorder %s73, %s74
      %p88 = scmp.eq.s32.totalorder %s28, 7
      %p89 = por %p87, %p88
      %p91 = scmp.ne.s32.totalorder %s74, %s90
      %p92 = scmp.eq.s32.totalorder %s28, 0
      %p93 = por %p91, %p92
      %s94 = ssub.s32 %s30, %s37
      %p95 = scmp.eq.s32.totalorder %s94, 0
      %s97 = sadd.s32 %s96, 1
      %s98 = scalar_select %p95, %s96, %s97
      %p101 = pneg %p95
      %p102 = scmp.eq.s32.totalorder %s22, 7
      %p103 = por %p101, %p102
      %p104 = scmp.ne.s32.totalorder %s96, %s99
      %p105 = scmp.eq.s32.totalorder %s22, 0
      %p106 = por %p104, %p105
      %p107 = scmp.ne.s32.totalorder %s96, %s99
      %p108 = scmp.eq.s32.totalorder %s27, 7
      %p109 = por %p107, %p108
      %p110 = scmp.ne.s32.totalorder %s99, %s100
      %p111 = scmp.eq.s32.totalorder %s27, 0
      %p112 = por %p110, %p111
      %p113 = scmp.ne.s32.totalorder %s99, %s100
      %p114 = scmp.eq.s32.totalorder %s28, 7
      %p115 = por %p113, %p114
      %p117 = scmp.ne.s32.totalorder %s100, %s116
      %p118 = scmp.eq.s32.totalorder %s28, 0
      %p119 = por %p117, %p118
      %s120 = ssub.s32 %s30, %s37
      %p121 = scmp.eq.s32.totalorder %s120, 0
      %s123 = sadd.s32 %s122, 1
      %s124 = scalar_select %p121, %s122, %s123
      %p127 = pneg %p121
      %p128 = scmp.eq.s32.totalorder %s22, 7
      %p129 = por %p127, %p128
      %p130 = scmp.ne.s32.totalorder %s122, %s125
      %p131 = scmp.eq.s32.totalorder %s22, 0
      %p132 = por %p130, %p131
      %p133 = scmp.ne.s32.totalorder %s122, %s125
      %p134 = scmp.eq.s32.totalorder %s27, 7
      %p135 = por %p133, %p134
      %p136 = scmp.ne.s32.totalorder %s125, %s126
      %p137 = scmp.eq.s32.totalorder %s27, 0
      %p138 = por %p136, %p137
      %p139 = scmp.ne.s32.totalorder %s125, %s126
      %p140 = scmp.eq.s32.totalorder %s28, 7
      %p141 = por %p139, %p140
      %p143 = scmp.ne.s32.totalorder %s126, %s142
      %p144 = scmp.eq.s32.totalorder %s28, 0
      %p145 = por %p143, %p144
      %s146 = ssub.s32 %s30, %s37
      %p147 = scmp.eq.s32.totalorder %s146, 0
      %s149 = sadd.s32 %s148, 1
      %s150 = scalar_select %p147, %s148, %s149
      %p153 = pneg %p147
      %p154 = scmp.eq.s32.totalorder %s22, 7
      %p155 = por %p153, %p154
      %p156 = scmp.ne.s32.totalorder %s148, %s151
      %p157 = scmp.eq.s32.totalorder %s22, 0
      %p158 = por %p156, %p157
      %p159 = scmp.ne.s32.totalorder %s148, %s151
      %p160 = scmp.eq.s32.totalorder %s27, 7
      %p161 = por %p159, %p160
      %p162 = scmp.ne.s32.totalorder %s151, %s152
      %p163 = scmp.eq.s32.totalorder %s27, 0
      %p164 = por %p162, %p163
      %p165 = scmp.ne.s32.totalorder %s151, %s152
      %p166 = scmp.eq.s32.totalorder %s28, 7
      %p167 = por %p165, %p166
      %p169 = scmp.ne.s32.totalorder %s152, %s168
      %p170 = scmp.eq.s32.totalorder %s28, 0
      %p171 = por %p169, %p170
      %s172 = ssub.s32 %s30, %s37
      %p173 = scmp.eq.s32.totalorder %s172, 0
      %s175 = sadd.s32 %s174, 1
      %s176 = scalar_select %p173, %s174, %s175
      %p179 = pneg %p173
      %p180 = scmp.eq.s32.totalorder %s22, 7
      %p181 = por %p179, %p180
      %p182 = scmp.ne.s32.totalorder %s174, %s177
      %p183 = scmp.eq.s32.totalorder %s22, 0
      %p184 = por %p182, %p183
      %p185 = scmp.ne.s32.totalorder %s174, %s177
      %p186 = scmp.eq.s32.totalorder %s27, 7
      %p187 = por %p185, %p186
      %p188 = scmp.ne.s32.totalorder %s177, %s178
      %p189 = scmp.eq.s32.totalorder %s27, 0
      %p190 = por %p188, %p189
      %p191 = scmp.ne.s32.totalorder %s177, %s178
      %p192 = scmp.eq.s32.totalorder %s28, 7
      %p193 = por %p191, %p192
      %p195 = scmp.ne.s32.totalorder %s178, %s194
      %p196 = scmp.eq.s32.totalorder %s28, 0
      %p197 = por %p195, %p196
      %s198 = ssub.s32 %s30, %s37
      %p199 = scmp.eq.s32.totalorder %s198, 0
      %s201 = sadd.s32 %s200, 1
      %s202 = scalar_select %p199, %s200, %s201
      %p205 = pneg %p199
      %p206 = scmp.eq.s32.totalorder %s22, 7
      %p207 = por %p205, %p206
      %p208 = scmp.ne.s32.totalorder %s200, %s203
      %p209 = scmp.eq.s32.totalorder %s22, 0
      %p210 = por %p208, %p209
      %p211 = scmp.ne.s32.totalorder %s200, %s203
      %p212 = scmp.eq.s32.totalorder %s27, 7
      %p213 = por %p211, %p212
      %p214 = scmp.ne.s32.totalorder %s203, %s204
      %p215 = scmp.eq.s32.totalorder %s27, 0
      %p216 = por %p214, %p215
      %p217 = scmp.ne.s32.totalorder %s203, %s204
      %p218 = scmp.eq.s32.totalorder %s28, 7
      %p219 = por %p217, %p218
      %p221 = scmp.ne.s32.totalorder %s204, %s220
      %p222 = scmp.eq.s32.totalorder %s28, 0
      %p223 = por %p221, %p222
      %s224 = ssub.s32 %s30, %s37
      %p225 = scmp.eq.s32.totalorder %s224, 0
      %s227 = sadd.s32 %s226, 1
      %s228 = scalar_select %p225, %s226, %s227
      %p231 = pneg %p225
      %p232 = scmp.eq.s32.totalorder %s22, 7
      %p233 = por %p231, %p232
      %p234 = scmp.ne.s32.totalorder %s226, %s229
      %p235 = scmp.eq.s32.totalorder %s22, 0
      %p236 = por %p234, %p235
      %p237 = scmp.ne.s32.totalorder %s226, %s229
      %p238 = scmp.eq.s32.totalorder %s27, 7
      %p239 = por %p237, %p238
      %p240 = scmp.ne.s32.totalorder %s229, %s230
      %p241 = scmp.eq.s32.totalorder %s27, 0
      %p242 = por %p240, %p241
      %p243 = scmp.ne.s32.totalorder %s229, %s230
      %p244 = scmp.eq.s32.totalorder %s28, 7
      %p245 = por %p243, %p244
      %p247 = scmp.ne.s32.totalorder %s230, %s246
      %p248 = scmp.eq.s32.totalorder %s28, 0
      %p249 = por %p247, %p248
      %s250 = ssub.s32 %s30, %s37
      %p251 = scmp.eq.s32.totalorder %s250, 0
      %s253 = sadd.s32 %s252, 1
      %s254 = scalar_select %p251, %s252, %s253
      %p257 = pneg %p251
      %p258 = scmp.eq.s32.totalorder %s22, 7
      %p259 = por %p257, %p258
      %p260 = scmp.ne.s32.totalorder %s252, %s255
      %p261 = scmp.eq.s32.totalorder %s22, 0
      %p262 = por %p260, %p261
      %p263 = scmp.ne.s32.totalorder %s252, %s255
      %p264 = scmp.eq.s32.totalorder %s27, 7
      %p265 = por %p263, %p264
      %p266 = scmp.ne.s32.totalorder %s255, %s256
      %p267 = scmp.eq.s32.totalorder %s27, 0
      %p268 = por %p266, %p267
      %p269 = scmp.ne.s32.totalorder %s255, %s256
      %p270 = scmp.eq.s32.totalorder %s28, 7
      %p271 = por %p269, %p270
      %p273 = scmp.ne.s32.totalorder %s256, %s272
      %p274 = scmp.eq.s32.totalorder %s28, 0
      %p275 = por %p273, %p274
      %s276 = ssub.s32 %s30, %s37
      %p277 = scmp.eq.s32.totalorder %s276, 0
      %s279 = sadd.s32 %s278, 1
      %s280 = scalar_select %p277, %s278, %s279
      %p283 = pneg %p277
      %p284 = scmp.eq.s32.totalorder %s22, 7
      %p285 = por %p283, %p284
      %p286 = scmp.ne.s32.totalorder %s278, %s281
      %p287 = scmp.eq.s32.totalorder %s22, 0
      %p288 = por %p286, %p287
      %p289 = scmp.ne.s32.totalorder %s278, %s281
      %p290 = scmp.eq.s32.totalorder %s27, 7
      %p291 = por %p289, %p290
      %p292 = scmp.ne.s32.totalorder %s281, %s282
      %p293 = scmp.eq.s32.totalorder %s27, 0
      %p294 = por %p292, %p293
      %p295 = scmp.ne.s32.totalorder %s281, %s282
      %p296 = scmp.eq.s32.totalorder %s28, 7
      %p297 = por %p295, %p296
      %p299 = scmp.ne.s32.totalorder %s282, %s298
      %p300 = scmp.eq.s32.totalorder %s28, 0
      %p301 = por %p299, %p300
      %s302 = ssub.s32 %s30, %s37
      %p303 = scmp.eq.s32.totalorder %s302, 0
      %s305 = sadd.s32 %s304, 1
      %s306 = scalar_select %p303, %s304, %s305
      %p309 = pneg %p303
      %p310 = scmp.eq.s32.totalorder %s22, 7
      %p311 = por %p309, %p310
      %p312 = scmp.ne.s32.totalorder %s304, %s307
      %p313 = scmp.eq.s32.totalorder %s22, 0
      %p314 = por %p312, %p313
      %p315 = scmp.ne.s32.totalorder %s304, %s307
      %p316 = scmp.eq.s32.totalorder %s27, 7
      %p317 = por %p315, %p316
      %p318 = scmp.ne.s32.totalorder %s307, %s308
      %p319 = scmp.eq.s32.totalorder %s27, 0
      %p320 = por %p318, %p319
      %p321 = scmp.ne.s32.totalorder %s307, %s308
      %p322 = scmp.eq.s32.totalorder %s28, 7
      %p323 = por %p321, %p322
      %p325 = scmp.ne.s32.totalorder %s308, %s324
      %p326 = scmp.eq.s32.totalorder %s28, 0
      %p327 = por %p325, %p326
      %s328 = ssub.s32 %s30, %s37
      %p329 = scmp.eq.s32.totalorder %s328, 0
      %s331 = sadd.s32 %s330, 1
      %s332 = scalar_select %p329, %s330, %s331
      %p335 = pneg %p329
      %p336 = scmp.eq.s32.totalorder %s22, 7
      %p337 = por %p335, %p336
      %p338 = scmp.ne.s32.totalorder %s330, %s333
      %p339 = scmp.eq.s32.totalorder %s22, 0
      %p340 = por %p338, %p339
      %p341 = scmp.ne.s32.totalorder %s330, %s333
      %p342 = scmp.eq.s32.totalorder %s27, 7
      %p343 = por %p341, %p342
      %p344 = scmp.ne.s32.totalorder %s333, %s334
      %p345 = scmp.eq.s32.totalorder %s27, 0
      %p346 = por %p344, %p345
      %p347 = scmp.ne.s32.totalorder %s333, %s334
      %p348 = scmp.eq.s32.totalorder %s28, 7
      %p349 = por %p347, %p348
      %p351 = scmp.ne.s32.totalorder %s334, %s350
      %p352 = scmp.eq.s32.totalorder %s28, 0
      %p353 = por %p351, %p352
      %s354 = ssub.s32 %s30, %s37
      %p355 = scmp.eq.s32.totalorder %s354, 0
      %s357 = sadd.s32 %s356, 1
      %s358 = scalar_select %p355, %s356, %s357
      %p361 = pneg %p355
      %p362 = scmp.eq.s32.totalorder %s22, 7
      %p363 = por %p361, %p362
      %p364 = scmp.ne.s32.totalorder %s356, %s359
      %p365 = scmp.eq.s32.totalorder %s22, 0
      %p366 = por %p364, %p365
      %p367 = scmp.ne.s32.totalorder %s356, %s359
      %p368 = scmp.eq.s32.totalorder %s27, 7
      %p369 = por %p367, %p368
      %p370 = scmp.ne.s32.totalorder %s359, %s360
      %p371 = scmp.eq.s32.totalorder %s27, 0
      %p372 = por %p370, %p371
      %p373 = scmp.ne.s32.totalorder %s359, %s360
      %p374 = scmp.eq.s32.totalorder %s28, 7
      %p375 = por %p373, %p374
      %p377 = scmp.ne.s32.totalorder %s360, %s376
      %p378 = scmp.eq.s32.totalorder %s28, 0
      %p379 = por %p377, %p378
      %s380 = ssub.s32 %s29, %s41
      %p381 = scmp.eq.s32.totalorder %s380, 0
      %s383 = sadd.s32 %s382, 1
      %s384 = scalar_select %p381, %s382, %s383
      %p387 = pneg %p381
      %p388 = scmp.eq.s32.totalorder %s22, 7
      %p389 = por %p387, %p388
      %p390 = scmp.ne.s32.totalorder %s382, %s385
      %p391 = scmp.eq.s32.totalorder %s22, 0
      %p392 = por %p390, %p391
      %p393 = scmp.ne.s32.totalorder %s382, %s385
      %p394 = scmp.eq.s32.totalorder %s27, 7
      %p395 = por %p393, %p394
      %p396 = scmp.ne.s32.totalorder %s385, %s386
      %p397 = scmp.eq.s32.totalorder %s27, 0
      %p398 = por %p396, %p397
      %p399 = scmp.ne.s32.totalorder %s385, %s386
      %p400 = scmp.eq.s32.totalorder %s28, 7
      %p401 = por %p399, %p400
      %p403 = scmp.ne.s32.totalorder %s386, %s402
      %p404 = scmp.eq.s32.totalorder %s28, 0
      %p405 = por %p403, %p404
      %p406 = scmp.le.s32.totalorder 1, %s22
      %p407 = scmp.lt.s32.totalorder %s22, 9
      %p408 = pnand %p406, %p407
      %p409 = pneg %p408
      // Predicated region
      $region9: #{tpu_custom_call.1} parent=5 // pred_check
        _
      $region10: #{tpu_custom_call.1} parent=5 // pred_check_branch
        %411 = sbr.rel (%p408) target = $region12
      $region11: #{tpu_custom_call.1} parent=5 // pred_region
        %s412 = ssub.s32 %s22, 1
      $region12: #{tpu_custom_call.1} parent=5 // pred_fallthru
        _
      %p413 = scmp.lt.s32.totalorder %s22, 8
      // Predicated region
      $region13: #{tpu_custom_call.1} parent=5 // pred_check
        %p414 = pneg %p413
      $region14: #{tpu_custom_call.1} parent=5 // pred_check_branch
        %416 = sbr.rel (%p414) target = $region16
      $region15: #{tpu_custom_call.1} parent=5 // pred_region
        // Predicated region
        $region17: #{tpu_custom_call.1} parent=15 // pred_check
          %p417 = pneg %p54
        $region18: #{tpu_custom_call.1} parent=15 // pred_check_branch
          %419 = sbr.rel (%p417) target = $region20
        $region19: #{tpu_custom_call.1} parent=15 // pred_region
          %s420 = smul.u32 3, %s29
          %p421 = scmp.lt.s32.totalorder %s420, 11
          %s422 = scalar_select %p421, %s420, 11
          %s423 = smul.addr %s422, 8
          %s424 = scalar_lea.vmem %s0, %s423
          %s425 = smul.u32 3, %s29
        $region20: #{tpu_custom_call.1} parent=15 // pred_fallthru
          _
        // Predicated region
        $region21: #{tpu_custom_call.1} parent=15 // pred_check
          %p426 = pneg %p80
        $region22: #{tpu_custom_call.1} parent=15 // pred_check_branch
          %428 = sbr.rel (%p426) target = $region24
        $region23: #{tpu_custom_call.1} parent=15 // pred_region
          %p429 = scmp.lt.s32.totalorder %s30, 1
          %s430 = scalar_select %p429, %s30, 1
          %s431 = scalar_lea.vmem %s1, %s430
        $region24: #{tpu_custom_call.1} parent=15 // pred_fallthru
          _
        // Predicated region
        $region25: #{tpu_custom_call.1} parent=15 // pred_check
          %p432 = pneg %p106
        $region26: #{tpu_custom_call.1} parent=15 // pred_check_branch
          %434 = sbr.rel (%p432) target = $region28
        $region27: #{tpu_custom_call.1} parent=15 // pred_region
          %p435 = scmp.lt.s32.totalorder %s30, 1
          %s436 = scalar_select %p435, %s30, 1
          %s437 = scalar_lea.vmem %s2, %s436
        $region28: #{tpu_custom_call.1} parent=15 // pred_fallthru
          _
        // Predicated region
        $region29: #{tpu_custom_call.1} parent=15 // pred_check
          %p438 = pneg %p132
        $region30: #{tpu_custom_call.1} parent=15 // pred_check_branch
          %440 = sbr.rel (%p438) target = $region32
        $region31: #{tpu_custom_call.1} parent=15 // pred_region
          %p441 = scmp.lt.s32.totalorder %s30, 1
          %s442 = scalar_select %p441, %s30, 1
          %s443 = smul.addr %s442, 16
          %s444 = smul.addr %s443, 8
          %s445 = scalar_lea.vmem %s3, %s444
        $region32: #{tpu_custom_call.1} parent=15 // pred_fallthru
          _
        // Predicated region
        $region33: #{tpu_custom_call.1} parent=15 // pred_check
          %p446 = pneg %p158
        $region34: #{tpu_custom_call.1} parent=15 // pred_check_branch
          %448 = sbr.rel (%p446) target = $region36
        $region35: #{tpu_custom_call.1} parent=15 // pred_region
          %p449 = scmp.lt.s32.totalorder %s30, 1
          %s450 = scalar_select %p449, %s30, 1
          %s451 = smul.addr %s450, 2
          %s452 = scalar_lea.vmem %s4, %s451
        $region36: #{tpu_custom_call.1} parent=15 // pred_fallthru
          _
        // Predicated region
        $region37: #{tpu_custom_call.1} parent=15 // pred_check
          %p453 = pneg %p184
        $region38: #{tpu_custom_call.1} parent=15 // pred_check_branch
          %455 = sbr.rel (%p453) target = $region40
        $region39: #{tpu_custom_call.1} parent=15 // pred_region
          %p456 = scmp.lt.s32.totalorder %s30, 1
          %s457 = scalar_select %p456, %s30, 1
          %s458 = smul.addr %s457, 8
          %s459 = smul.addr %s458, 8
          %s460 = scalar_lea.vmem %s5, %s459
        $region40: #{tpu_custom_call.1} parent=15 // pred_fallthru
          _
        // Predicated region
        $region41: #{tpu_custom_call.1} parent=15 // pred_check
          %p461 = pneg %p210
        $region42: #{tpu_custom_call.1} parent=15 // pred_check_branch
          %463 = sbr.rel (%p461) target = $region44
        $region43: #{tpu_custom_call.1} parent=15 // pred_region
          %p464 = scmp.lt.s32.totalorder %s30, 1
          %s465 = scalar_select %p464, %s30, 1
          %s466 = scalar_lea.vmem %s6, %s465
        $region44: #{tpu_custom_call.1} parent=15 // pred_fallthru
          _
        // Predicated region
        $region45: #{tpu_custom_call.1} parent=15 // pred_check
          %p467 = pneg %p236
        $region46: #{tpu_custom_call.1} parent=15 // pred_check_branch
          %469 = sbr.rel (%p467) target = $region48
        $region47: #{tpu_custom_call.1} parent=15 // pred_region
          %p470 = scmp.lt.s32.totalorder %s30, 1
          %s471 = scalar_select %p470, %s30, 1
          %s472 = scalar_lea.vmem %s7, %s471
        $region48: #{tpu_custom_call.1} parent=15 // pred_fallthru
          _
        // Predicated region
        $region49: #{tpu_custom_call.1} parent=15 // pred_check
          %p473 = pneg %p262
        $region50: #{tpu_custom_call.1} parent=15 // pred_check_branch
          %475 = sbr.rel (%p473) target = $region52
        $region51: #{tpu_custom_call.1} parent=15 // pred_region
          %p476 = scmp.lt.s32.totalorder %s30, 1
          %s477 = scalar_select %p476, %s30, 1
          %s478 = scalar_lea.vmem %s8, %s477
        $region52: #{tpu_custom_call.1} parent=15 // pred_fallthru
          _
        // Predicated region
        $region53: #{tpu_custom_call.1} parent=15 // pred_check
          %p479 = pneg %p288
        $region54: #{tpu_custom_call.1} parent=15 // pred_check_branch
          %481 = sbr.rel (%p479) target = $region56
        $region55: #{tpu_custom_call.1} parent=15 // pred_region
          %p482 = scmp.lt.s32.totalorder %s30, 1
          %s483 = scalar_select %p482, %s30, 1
          %s484 = smul.addr %s483, 16
          %s485 = smul.addr %s484, 8
          %s486 = scalar_lea.vmem %s9, %s485
        $region56: #{tpu_custom_call.1} parent=15 // pred_fallthru
          _
        // Predicated region
        $region57: #{tpu_custom_call.1} parent=15 // pred_check
          %p487 = pneg %p314
        $region58: #{tpu_custom_call.1} parent=15 // pred_check_branch
          %489 = sbr.rel (%p487) target = $region60
        $region59: #{tpu_custom_call.1} parent=15 // pred_region
          %p490 = scmp.lt.s32.totalorder %s30, 1
          %s491 = scalar_select %p490, %s30, 1
          %s492 = smul.addr %s491, 2
          %s493 = scalar_lea.vmem %s10, %s492
        $region60: #{tpu_custom_call.1} parent=15 // pred_fallthru
          _
        // Predicated region
        $region61: #{tpu_custom_call.1} parent=15 // pred_check
          %p494 = pneg %p340
        $region62: #{tpu_custom_call.1} parent=15 // pred_check_branch
          %496 = sbr.rel (%p494) target = $region64
        $region63: #{tpu_custom_call.1} parent=15 // pred_region
          %p497 = scmp.lt.s32.totalorder %s30, 1
          %s498 = scalar_select %p497, %s30, 1
          %s499 = smul.addr %s498, 32
          %s500 = smul.addr %s499, 8
          %s501 = scalar_lea.vmem %s11, %s500
        $region64: #{tpu_custom_call.1} parent=15 // pred_fallthru
          _
        // Predicated region
        $region65: #{tpu_custom_call.1} parent=15 // pred_check
          %p502 = pneg %p366
        $region66: #{tpu_custom_call.1} parent=15 // pred_check_branch
          %504 = sbr.rel (%p502) target = $region68
        $region67: #{tpu_custom_call.1} parent=15 // pred_region
          %p505 = scmp.lt.s32.totalorder %s30, 1
          %s506 = scalar_select %p505, %s30, 1
          %s507 = scalar_lea.vmem %s12, %s506
        $region68: #{tpu_custom_call.1} parent=15 // pred_fallthru
          _
      $region16: #{tpu_custom_call.1} parent=5 // pred_fallthru
        _
      %p508 = scmp.le.s32.totalorder 1, %s22
      %p509 = scmp.lt.s32.totalorder %s22, 9
      %p510 = pnand %p508, %p509
      %p511 = pneg %p510
      // Predicated region
      $region69: #{tpu_custom_call.1} parent=5 // pred_check
        _
      $region70: #{tpu_custom_call.1} parent=5 // pred_check_branch
        %513 = sbr.rel (%p510) target = $region72
      $region71: #{tpu_custom_call.1} parent=5 // pred_region
        %s514 = ssub.s32 %s22, 1
        %s515 = smul.u32 3, %s31
        %p516 = scmp.lt.s32.totalorder %s515, 11
        %s517 = scalar_select %p516, %s515, 11
        %s518 = smul.addr %s517, 8
        %s519 = scalar_lea.vmem %s0, %s518
        %p520 = pneg %p60
        %p521 = pneg %p57
        %p522 = scmp.lt.s32.totalorder %s32, 1
        %s523 = scalar_select %p522, %s32, 1
        %s524 = scalar_lea.vmem %s1, %s523
        %p525 = pneg %p86
        %p526 = pneg %p83
        %p527 = scmp.lt.s32.totalorder %s32, 1
        %s528 = scalar_select %p527, %s32, 1
        %s529 = scalar_lea.vmem %s2, %s528
        %p530 = pneg %p112
        %p531 = pneg %p109
        %p532 = scmp.lt.s32.totalorder %s32, 1
        %s533 = scalar_select %p532, %s32, 1
        %s534 = smul.addr %s533, 16
        %s535 = smul.addr %s534, 8
        %s536 = scalar_lea.vmem %s3, %s535
        %p537 = pneg %p138
        %p538 = pneg %p135
        %p539 = scmp.lt.s32.totalorder %s32, 1
        %s540 = scalar_select %p539, %s32, 1
        %s541 = smul.addr %s540, 2
        %s542 = scalar_lea.vmem %s4, %s541
        %p543 = pneg %p164
        %p544 = pneg %p161
        %p545 = scmp.lt.s32.totalorder %s32, 1
        %s546 = scalar_select %p545, %s32, 1
        %s547 = smul.addr %s546, 8
        %s548 = smul.addr %s547, 8
        %s549 = scalar_lea.vmem %s5, %s548
        %p550 = pneg %p190
        %p551 = pneg %p187
        %p552 = scmp.lt.s32.totalorder %s32, 1
        %s553 = scalar_select %p552, %s32, 1
        %s554 = scalar_lea.vmem %s6, %s553
        %p555 = pneg %p216
        %p556 = pneg %p213
        %p557 = scmp.lt.s32.totalorder %s32, 1
        %s558 = scalar_select %p557, %s32, 1
        %s559 = scalar_lea.vmem %s7, %s558
        %p560 = pneg %p242
        %p561 = pneg %p239
        %p562 = scmp.lt.s32.totalorder %s32, 1
        %s563 = scalar_select %p562, %s32, 1
        %s564 = scalar_lea.vmem %s8, %s563
        %p565 = pneg %p268
        %p566 = pneg %p265
        %p567 = scmp.lt.s32.totalorder %s32, 1
        %s568 = scalar_select %p567, %s32, 1
        %s569 = smul.addr %s568, 16
        %s570 = smul.addr %s569, 8
        %s571 = scalar_lea.vmem %s9, %s570
        %p572 = pneg %p294
        %p573 = pneg %p291
        %p574 = scmp.lt.s32.totalorder %s32, 1
        %s575 = scalar_select %p574, %s32, 1
        %s576 = smul.addr %s575, 2
        %s577 = scalar_lea.vmem %s10, %s576
        %p578 = pneg %p320
        %p579 = pneg %p317
        %p580 = scmp.lt.s32.totalorder %s32, 1
        %s581 = scalar_select %p580, %s32, 1
        %s582 = smul.addr %s581, 32
        %s583 = smul.addr %s582, 8
        %s584 = scalar_lea.vmem %s11, %s583
        %p585 = pneg %p346
        %p586 = pneg %p343
        %p587 = scmp.lt.s32.totalorder %s32, 1
        %s588 = scalar_select %p587, %s32, 1
        %s589 = scalar_lea.vmem %s12, %s588
        %p590 = pneg %p372
        %p591 = pneg %p369
        %p592 = pneg %p398
        %p593 = pneg %p395
        %s594 = sand.u32 %s385, 1
        %s595 = scalar_lea.sflag [#allocation5], %s594
        %s596 = sand.u32 %s385, 1
        %s597 = smul.addr %s596, 24
        %s598 = scalar_lea.vmem [#allocation4], %s597
        %s599 = smul.u32 3, %s31
        %p600 = scmp.lt.s32.totalorder %s599, 11
        %s601 = scalar_select %p600, %s599, 11
        %s602 = smul.addr %s601, 8
        %s603 = scalar_lea.vmem %s0, %s602
        %s604 = smul.u32 3, %s31
        %p605 = scmp.lt.s32.totalorder %s32, 1
        %s606 = scalar_select %p605, %s32, 1
        %s607 = scalar_lea.vmem %s1, %s606
        %p608 = scmp.lt.s32.totalorder %s32, 1
        %s609 = scalar_select %p608, %s32, 1
        %s610 = scalar_lea.vmem %s2, %s609
        %p611 = scmp.lt.s32.totalorder %s32, 1
        %s612 = scalar_select %p611, %s32, 1
        %s613 = smul.addr %s612, 16
        %s614 = smul.addr %s613, 8
        %s615 = scalar_lea.vmem %s3, %s614
        %p616 = scmp.lt.s32.totalorder %s32, 1
        %s617 = scalar_select %p616, %s32, 1
        %s618 = smul.addr %s617, 2
        %s619 = scalar_lea.vmem %s4, %s618
        %p620 = scmp.lt.s32.totalorder %s32, 1
        %s621 = scalar_select %p620, %s32, 1
        %s622 = smul.addr %s621, 8
        %s623 = smul.addr %s622, 8
        %s624 = scalar_lea.vmem %s5, %s623
        %p625 = scmp.lt.s32.totalorder %s32, 1
        %s626 = scalar_select %p625, %s32, 1
        %s627 = scalar_lea.vmem %s6, %s626
        %p628 = scmp.lt.s32.totalorder %s32, 1
        %s629 = scalar_select %p628, %s32, 1
        %s630 = scalar_lea.vmem %s7, %s629
        %p631 = scmp.lt.s32.totalorder %s32, 1
        %s632 = scalar_select %p631, %s32, 1
        %s633 = scalar_lea.vmem %s8, %s632
        %p634 = scmp.lt.s32.totalorder %s32, 1
        %s635 = scalar_select %p634, %s32, 1
        %s636 = smul.addr %s635, 16
        %s637 = smul.addr %s636, 8
        %s638 = scalar_lea.vmem %s9, %s637
        %p639 = scmp.lt.s32.totalorder %s32, 1
        %s640 = scalar_select %p639, %s32, 1
        %s641 = smul.addr %s640, 2
        %s642 = scalar_lea.vmem %s10, %s641
        %p643 = scmp.lt.s32.totalorder %s32, 1
        %s644 = scalar_select %p643, %s32, 1
        %s645 = smul.addr %s644, 32
        %s646 = smul.addr %s645, 8
        %s647 = scalar_lea.vmem %s11, %s646
        %p648 = scmp.lt.s32.totalorder %s32, 1
        %s649 = scalar_select %p648, %s32, 1
        %s650 = scalar_lea.vmem %s12, %s649
        %s651 = smul.u32 3, %s31
        %p652 = scmp.eq.s32.totalorder %s32, 0
        // Predicated region
        $region73: #{tpu_custom_call.1} parent=71 // pred_check
          %p653 = pneg %p652
        $region74: #{tpu_custom_call.1} parent=71 // pred_check_branch
          %655 = sbr.rel (%p653) target = $region76
        $region75: #{tpu_custom_call.1} parent=71 // pred_region
          %v656 = vld [vmem:[%s603] sm:$0xff]
          %v657 = vld [vmem:[%s603 + $0x8] sm:$0xff]
          %v658 = vld [vmem:[%s603 + $0x10] sm:$0xff]
          %vm659 = vcmask 523264
          %660 = vst.msk [vmem:[#allocation2] sm:$0xff] %vm659, %v656
          %661 = vst.msk [vmem:[#allocation2 + $0x8] sm:$0xff] %vm659, %v657
          %662 = vst.msk [vmem:[#allocation2 + $0x10] sm:$0xff] %vm659, %v658
        $region76: #{tpu_custom_call.1} parent=71 // pred_fallthru
          _
        %v663 = vld [vmem:[#allocation2] sm:$0xff]
        %v664 = vld [vmem:[#allocation2 + $0x8] sm:$0xff]
        %v665 = vld [vmem:[#allocation2 + $0x10] sm:$0xff]
        %vm666 = vcmask 523264
        %v667 = vsel %vm666, %v663, 0.0
        %668 = vadd.xlane.f32.xlu0 %v667
        %v669 = vpop.xlane.xlu0 %668
        %v670 = vsel %vm666, %v664, 0.0
        %671 = vadd.xlane.f32.xlu0 %v670
        %v672 = vpop.xlane.xlu0 %671
        %v673 = vsel %vm666, %v665, 0.0
        %674 = vadd.xlane.f32.xlu0 %v673
        %v675 = vpop.xlane.xlu0 %674
        %v676 = vrcp.pop 64.0
        %v677 = vmul.f32 %v669, %v676
        %v678 = vmul.f32 %v672, %v676
        %v679 = vmul.f32 %v675, %v676
        %v680 = vsub.f32 %v663, %v677
        %v681 = vsub.f32 %v664, %v678
        %v682 = vsub.f32 %v665, %v679
        %v683 = vmul.f32 %v680, %v680
        %v684 = vmul.f32 %v681, %v681
        %v685 = vmul.f32 %v682, %v682
        %v686 = vsel %vm666, %v683, 0.0
        %687 = vadd.xlane.f32.xlu0 %v686
        %v688 = vpop.xlane.xlu0 %687
        %v689 = vsel %vm666, %v684, 0.0
        %690 = vadd.xlane.f32.xlu0 %v689
        %v691 = vpop.xlane.xlu0 %690
        %v692 = vsel %vm666, %v685, 0.0
        %693 = vadd.xlane.f32.xlu0 %v692
        %v694 = vpop.xlane.xlu0 %693
        %v695 = vmul.f32 %v688, %v676
        %v696 = vmul.f32 %v691, %v676
        %v697 = vmul.f32 %v694, %v676
        %v698 = vadd.f32 %v695, 1e-05
        %v699 = vadd.f32 %v696, 1e-05
        %v700 = vadd.f32 %v697, 1e-05
        %v701 = vrsqrt.pop %v698
        %v702 = vrsqrt.pop %v699
        %v703 = vrsqrt.pop %v700
        %v704 = vmul.f32 %v680, %v701
        %v705 = vmul.f32 %v681, %v702
        %v706 = vmul.f32 %v682, %v703
        %v707 = vld [vmem:[%s607] sm:$0x1]
        %v709 = vlaneseq
        %v710 = vshrl.u32 %v709, 7
        %v711 = vsub.s32 0, %v710
        %v712 = vrot.slane %v707, %v711
        %v714 = vmul.f32 %v704, %v712
        %v715 = vmul.f32 %v705, %v712
        %v716 = vmul.f32 %v706, %v712
        %v717 = vld [vmem:[%s610] sm:$0x1]
        %v719 = vlaneseq
        %v720 = vshrl.u32 %v719, 7
        %v721 = vsub.s32 0, %v720
        %v722 = vrot.slane %v717, %v721
        %v724 = vadd.f32 %v714, %v722
        %v725 = vadd.f32 %v715, %v722
        %v726 = vadd.f32 %v716, %v722
        %v727 = vld [vmem:[%s615] sm:$0xff]
        %v728 = vld [vmem:[%s615 + $0x8] sm:$0xff]
        %v729 = vld [vmem:[%s615 + $0x10] sm:$0xff]
        %v730 = vld [vmem:[%s615 + $0x18] sm:$0xff]
        %v731 = vld [vmem:[%s615 + $0x20] sm:$0xff]
        %v732 = vld [vmem:[%s615 + $0x28] sm:$0xff]
        %v733 = vld [vmem:[%s615 + $0x30] sm:$0xff]
        %v734 = vld [vmem:[%s615 + $0x38] sm:$0xff]
        %v735 = vld [vmem:[%s615 + $0x40] sm:$0xff]
        %v736 = vld [vmem:[%s615 + $0x48] sm:$0xff]
        %v737 = vld [vmem:[%s615 + $0x50] sm:$0xff]
        %v738 = vld [vmem:[%s615 + $0x58] sm:$0xff]
        %v739 = vld [vmem:[%s615 + $0x60] sm:$0xff]
        %v740 = vld [vmem:[%s615 + $0x68] sm:$0xff]
        %v741 = vld [vmem:[%s615 + $0x70] sm:$0xff]
        %v742 = vld [vmem:[%s615 + $0x78] sm:$0xff]
        %v743 = vld [vmem:[%s619] sm:$0x3]
        %v745 = vlaneseq
        %v746 = vshrl.u32 %v745, 7
        %v747 = vsub.s32 0, %v746
        %v748 = vrot.slane %v743, %v747
        %v749 = vlaneseq
        %v750 = vshrl.u32 %v749, 7
        %v751 = vsub.s32 1, %v750
        %v752 = vrot.slane %v743, %v751
        %v756 = vsel %vm666, %v724, 0
        %v759 = vsel %vm666, %v725, 0
        %v762 = vsel %vm666, %v726, 0
        %764 = vmatprep.subr.mxu0 %v728
        %765 = vmatpush1.msra.mxu0 %v727
        %766 = vmatprep.subr.mxu0 %v730
        %767 = vmatpush1.msra.mxu0 %v729
        %768 = vmatprep.subr.mxu0 %v732
        %769 = vmatpush1.msra.mxu0 %v731
        %770 = vmatprep.subr.mxu0 %v734
        %771 = vmatpush1.msra.mxu0 %v733
        %772 = vmatprep.subr.mxu0 %v736
        %773 = vmatpush1.msra.mxu0 %v735
        %774 = vmatprep.subr.mxu0 %v738
        %775 = vmatpush1.msra.mxu0 %v737
        %776 = vmatprep.subr.mxu0 %v740
        %777 = vmatpush1.msra.mxu0 %v739
        %778 = vmatprep.subr.mxu0 %v742
        %779 = vmatpush1.msra.mxu0 %v741
        %780 = vmatprep.subr.mxu0 0.0
        %781 = vmatpush1.msra.mxu0 0.0
        %782 = vmatprep.subr.mxu0 0.0
        %783 = vmatpush1.msra.mxu0 0.0
        %784 = vmatprep.subr.mxu0 0.0
        %785 = vmatpush1.msra.mxu0 0.0
        %786 = vmatprep.subr.mxu0 0.0
        %787 = vmatpush1.msra.mxu0 0.0
        %788 = vmatprep.subr.mxu0 0.0
        %789 = vmatpush1.msra.mxu0 0.0
        %790 = vmatprep.subr.mxu0 0.0
        %791 = vmatpush1.msra.mxu0 0.0
        %792 = vmatprep.subr.mxu0 0.0
        %793 = vmatpush1.msra.mxu0 0.0
        %794 = vmatprep.subr.mxu0 0.0
        %795 = vmatpush1.msra.mxu0 0.0
        %796 = vmatprep.subr.mxu0 0.0
        %797 = vmatpush1.msra.mxu0 0.0
        %798 = vmatprep.subr.mxu0 0.0
        %799 = vmatpush1.msra.mxu0 0.0
        %800 = vmatprep.subr.mxu0 0.0
        %801 = vmatpush1.msra.mxu0 0.0
        %802 = vmatprep.subr.mxu0 0.0
        %803 = vmatpush1.msra.mxu0 0.0
        %804 = vmatprep.subr.mxu0 0.0
        %805 = vmatpush1.msra.mxu0 0.0
        %806 = vmatprep.subr.mxu0 0.0
        %807 = vmatpush1.msra.mxu0 0.0
        %808 = vmatprep.subr.mxu0 0.0
        %809 = vmatpush1.msra.mxu0 0.0
        %810 = vmatprep.subr.mxu0 0.0
        %811 = vmatpush1.msra.mxu0 0.0
        %812 = vmatprep.subr.mxu0 0.0
        %813 = vmatpush1.msra.mxu0 0.0
        %814 = vmatprep.subr.mxu0 0.0
        %815 = vmatpush1.msra.mxu0 0.0
        %816 = vmatprep.subr.mxu0 0.0
        %817 = vmatpush1.msra.mxu0 0.0
        %818 = vmatprep.subr.mxu0 0.0
        %819 = vmatpush1.msra.mxu0 0.0
        %820 = vmatprep.subr.mxu0 0.0
        %821 = vmatpush1.msra.mxu0 0.0
        %822 = vmatprep.subr.mxu0 0.0
        %823 = vmatpush1.msra.mxu0 0.0
        %824 = vmatprep.subr.mxu0 0.0
        %825 = vmatpush1.msra.mxu0 0.0
        %826 = vmatprep.subr.mxu0 0.0
        %827 = vmatpush1.msra.mxu0 0.0
        %828 = vmatprep.mubr.f32.mxu0 0.0
        %829 = vmatmul.mubr.f32.gmra.mrb[0].mxu0 %v756
        %v830 = vpop.f32.mrb[0].mxu0
        %v831 = vadd.f32 %v748, %v830
        %v832 = vpop.f32.mrb[0].mxu0
        %v833 = vadd.f32 %v752, %v832
        %834 = vmatprep.mubr.f32.mxu0 0.0
        %835 = vmatmul.mubr.f32.gmra.mrb[0].mxu0 %v759
        %v836 = vpop.f32.mrb[0].mxu0
        %v837 = vadd.f32 %v748, %v836
        %v838 = vpop.f32.mrb[0].mxu0
        %v839 = vadd.f32 %v752, %v838
        %840 = vmatprep.mubr.f32.mxu0 0.0
        %841 = vmatmul.mubr.f32.gmra.mrb[0].mxu0 %v762
        %v842 = vpop.f32.mrb[0].mxu0
        %v843 = vadd.f32 %v748, %v842
        %v844 = vpop.f32.mrb[0].mxu0
        %v845 = vadd.f32 %v752, %v844
        %846 = vdwg.mxu0
        %848 = vrot.lane.b32.xlu0 %v831, 64
        %v849 = vpop.permute.xlu0 %848
        %vm850 = vcmask 130048
        %v851 = vsel %vm850, %v831, 0
        %v853 = vsel %vm850, %v849, 0
        %855 = vmatprep.subr.mxu0 0.0
        %856 = vmatpush1.xpose.msra.mxu0 %v853
        %857 = vmatprep.subr.mxu0 0.0
        %858 = vmatpush1.xpose.msra.mxu0 0.0
        %859 = vmatprep.subr.mxu0 0.0
        %860 = vmatpush1.xpose.msra.mxu0 0.0
        %861 = vmatprep.subr.mxu0 0.0
        %862 = vmatpush1.xpose.msra.mxu0 0.0
        %863 = vmatprep.subr.mxu0 0.0
        %864 = vmatpush1.xpose.msra.mxu0 0.0
        %865 = vmatprep.subr.mxu0 0.0
        %866 = vmatpush1.xpose.msra.mxu0 0.0
        %867 = vmatprep.subr.mxu0 0.0
        %868 = vmatpush1.xpose.msra.mxu0 0.0
        %869 = vmatprep.subr.mxu0 0.0
        %870 = vmatpush1.xpose.msra.mxu0 0.0
        %871 = vmatprep.subr.mxu0 0.0
        %872 = vmatpush1.xpose.msra.mxu0 0.0
        %873 = vmatprep.subr.mxu0 0.0
        %874 = vmatpush1.xpose.msra.mxu0 0.0
        %875 = vmatprep.subr.mxu0 0.0
        %876 = vmatpush1.xpose.msra.mxu0 0.0
        %877 = vmatprep.subr.mxu0 0.0
        %878 = vmatpush1.xpose.msra.mxu0 0.0
        %879 = vmatprep.subr.mxu0 0.0
        %880 = vmatpush1.xpose.msra.mxu0 0.0
        %881 = vmatprep.subr.mxu0 0.0
        %882 = vmatpush1.xpose.msra.mxu0 0.0
        %883 = vmatprep.subr.mxu0 0.0
        %884 = vmatpush1.xpose.msra.mxu0 0.0
        %885 = vmatprep.subr.mxu0 0.0
        %886 = vmatpush1.xpose.msra.mxu0 0.0
        %887 = vmatprep.subr.mxu0 0.0
        %888 = vmatpush1.xpose.msra.mxu0 0.0
        %889 = vmatprep.subr.mxu0 0.0
        %890 = vmatpush1.xpose.msra.mxu0 0.0
        %891 = vmatprep.subr.mxu0 0.0
        %892 = vmatpush1.xpose.msra.mxu0 0.0
        %893 = vmatprep.subr.mxu0 0.0
        %894 = vmatpush1.xpose.msra.mxu0 0.0
        %895 = vmatprep.subr.mxu0 0.0
        %896 = vmatpush1.xpose.msra.mxu0 0.0
        %897 = vmatprep.subr.mxu0 0.0
        %898 = vmatpush1.xpose.msra.mxu0 0.0
        %899 = vmatprep.subr.mxu0 0.0
        %900 = vmatpush1.xpose.msra.mxu0 0.0
        %901 = vmatprep.subr.mxu0 0.0
        %902 = vmatpush1.xpose.msra.mxu0 0.0
        %903 = vmatprep.subr.mxu0 0.0
        %904 = vmatpush1.xpose.msra.mxu0 0.0
        %905 = vmatprep.subr.mxu0 0.0
        %906 = vmatpush1.xpose.msra.mxu0 0.0
        %907 = vmatprep.subr.mxu0 0.0
        %908 = vmatpush1.xpose.msra.mxu0 0.0
        %909 = vmatprep.subr.mxu0 0.0
        %910 = vmatpush1.xpose.msra.mxu0 0.0
        %911 = vmatprep.subr.mxu0 0.0
        %912 = vmatpush1.xpose.msra.mxu0 0.0
        %913 = vmatprep.subr.mxu0 0.0
        %914 = vmatpush1.xpose.msra.mxu0 0.0
        %915 = vmatprep.subr.mxu0 0.0
        %916 = vmatpush1.xpose.msra.mxu0 0.0
        %917 = vmatprep.subr.mxu0 0.0
        %918 = vmatpush1.xpose.msra.mxu0 0.0
        %919 = vmatprep.mubr.f32.mxu0 0.0
        %920 = vmatmul.mubr.f32.gmra.mrb[0].mxu0 %v851
        %v921 = vpop.f32.mrb[0].mxu0
        %v922 = vadd.f32 0.0, %v921
        %v923 = vpop.f32.mrb[0].mxu0
        %924 = vdwg.mxu0
        %926 = vrot.lane.b32.xlu0 %v837, 64
        %v927 = vpop.permute.xlu0 %926
        %v928 = vsel %vm850, %v837, 0
        %v930 = vsel %vm850, %v927, 0
        %932 = vmatprep.subr.mxu0 0.0
        %933 = vmatpush1.xpose.msra.mxu0 %v930
        %934 = vmatprep.subr.mxu0 0.0
        %935 = vmatpush1.xpose.msra.mxu0 0.0
        %936 = vmatprep.subr.mxu0 0.0
        %937 = vmatpush1.xpose.msra.mxu0 0.0
        %938 = vmatprep.subr.mxu0 0.0
        %939 = vmatpush1.xpose.msra.mxu0 0.0
        %940 = vmatprep.subr.mxu0 0.0
        %941 = vmatpush1.xpose.msra.mxu0 0.0
        %942 = vmatprep.subr.mxu0 0.0
        %943 = vmatpush1.xpose.msra.mxu0 0.0
        %944 = vmatprep.subr.mxu0 0.0
        %945 = vmatpush1.xpose.msra.mxu0 0.0
        %946 = vmatprep.subr.mxu0 0.0
        %947 = vmatpush1.xpose.msra.mxu0 0.0
        %948 = vmatprep.subr.mxu0 0.0
        %949 = vmatpush1.xpose.msra.mxu0 0.0
        %950 = vmatprep.subr.mxu0 0.0
        %951 = vmatpush1.xpose.msra.mxu0 0.0
        %952 = vmatprep.subr.mxu0 0.0
        %953 = vmatpush1.xpose.msra.mxu0 0.0
        %954 = vmatprep.subr.mxu0 0.0
        %955 = vmatpush1.xpose.msra.mxu0 0.0
        %956 = vmatprep.subr.mxu0 0.0
        %957 = vmatpush1.xpose.msra.mxu0 0.0
        %958 = vmatprep.subr.mxu0 0.0
        %959 = vmatpush1.xpose.msra.mxu0 0.0
        %960 = vmatprep.subr.mxu0 0.0
        %961 = vmatpush1.xpose.msra.mxu0 0.0
        %962 = vmatprep.subr.mxu0 0.0
        %963 = vmatpush1.xpose.msra.mxu0 0.0
        %964 = vmatprep.subr.mxu0 0.0
        %965 = vmatpush1.xpose.msra.mxu0 0.0
        %966 = vmatprep.subr.mxu0 0.0
        %967 = vmatpush1.xpose.msra.mxu0 0.0
        %968 = vmatprep.subr.mxu0 0.0
        %969 = vmatpush1.xpose.msra.mxu0 0.0
        %970 = vmatprep.subr.mxu0 0.0
        %971 = vmatpush1.xpose.msra.mxu0 0.0
        %972 = vmatprep.subr.mxu0 0.0
        %973 = vmatpush1.xpose.msra.mxu0 0.0
        %974 = vmatprep.subr.mxu0 0.0
        %975 = vmatpush1.xpose.msra.mxu0 0.0
        %976 = vmatprep.subr.mxu0 0.0
        %977 = vmatpush1.xpose.msra.mxu0 0.0
        %978 = vmatprep.subr.mxu0 0.0
        %979 = vmatpush1.xpose.msra.mxu0 0.0
        %980 = vmatprep.subr.mxu0 0.0
        %981 = vmatpush1.xpose.msra.mxu0 0.0
        %982 = vmatprep.subr.mxu0 0.0
        %983 = vmatpush1.xpose.msra.mxu0 0.0
        %984 = vmatprep.subr.mxu0 0.0
        %985 = vmatpush1.xpose.msra.mxu0 0.0
        %986 = vmatprep.subr.mxu0 0.0
        %987 = vmatpush1.xpose.msra.mxu0 0.0
        %988 = vmatprep.subr.mxu0 0.0
        %989 = vmatpush1.xpose.msra.mxu0 0.0
        %990 = vmatprep.subr.mxu0 0.0
        %991 = vmatpush1.xpose.msra.mxu0 0.0
        %992 = vmatprep.subr.mxu0 0.0
        %993 = vmatpush1.xpose.msra.mxu0 0.0
        %994 = vmatprep.subr.mxu0 0.0
        %995 = vmatpush1.xpose.msra.mxu0 0.0
        %996 = vmatprep.mubr.f32.mxu0 0.0
        %997 = vmatmul.mubr.f32.gmra.mrb[0].mxu0 %v928
        %v998 = vpop.f32.mrb[0].mxu0
        %v999 = vadd.f32 0.0, %v998
        %v1000 = vpop.f32.mrb[0].mxu0
        %1001 = vdwg.mxu0
        %1003 = vrot.lane.b32.xlu0 %v843, 64
        %v1004 = vpop.permute.xlu0 %1003
        %v1005 = vsel %vm850, %v843, 0
        %v1007 = vsel %vm850, %v1004, 0
        %1009 = vmatprep.subr.mxu0 0.0
        %1010 = vmatpush1.xpose.msra.mxu0 %v1007
        %1011 = vmatprep.subr.mxu0 0.0
        %1012 = vmatpush1.xpose.msra.mxu0 0.0
        %1013 = vmatprep.subr.mxu0 0.0
        %1014 = vmatpush1.xpose.msra.mxu0 0.0
        %1015 = vmatprep.subr.mxu0 0.0
        %1016 = vmatpush1.xpose.msra.mxu0 0.0
        %1017 = vmatprep.subr.mxu0 0.0
        %1018 = vmatpush1.xpose.msra.mxu0 0.0
        %1019 = vmatprep.subr.mxu0 0.0
        %1020 = vmatpush1.xpose.msra.mxu0 0.0
        %1021 = vmatprep.subr.mxu0 0.0
        %1022 = vmatpush1.xpose.msra.mxu0 0.0
        %1023 = vmatprep.subr.mxu0 0.0
        %1024 = vmatpush1.xpose.msra.mxu0 0.0
        %1025 = vmatprep.subr.mxu0 0.0
        %1026 = vmatpush1.xpose.msra.mxu0 0.0
        %1027 = vmatprep.subr.mxu0 0.0
        %1028 = vmatpush1.xpose.msra.mxu0 0.0
        %1029 = vmatprep.subr.mxu0 0.0
        %1030 = vmatpush1.xpose.msra.mxu0 0.0
        %1031 = vmatprep.subr.mxu0 0.0
        %1032 = vmatpush1.xpose.msra.mxu0 0.0
        %1033 = vmatprep.subr.mxu0 0.0
        %1034 = vmatpush1.xpose.msra.mxu0 0.0
        %1035 = vmatprep.subr.mxu0 0.0
        %1036 = vmatpush1.xpose.msra.mxu0 0.0
        %1037 = vmatprep.subr.mxu0 0.0
        %1038 = vmatpush1.xpose.msra.mxu0 0.0
        %1039 = vmatprep.subr.mxu0 0.0
        %1040 = vmatpush1.xpose.msra.mxu0 0.0
        %1041 = vmatprep.subr.mxu0 0.0
        %1042 = vmatpush1.xpose.msra.mxu0 0.0
        %1043 = vmatprep.subr.mxu0 0.0
        %1044 = vmatpush1.xpose.msra.mxu0 0.0
        %1045 = vmatprep.subr.mxu0 0.0
        %1046 = vmatpush1.xpose.msra.mxu0 0.0
        %1047 = vmatprep.subr.mxu0 0.0
        %1048 = vmatpush1.xpose.msra.mxu0 0.0
        %1049 = vmatprep.subr.mxu0 0.0
        %1050 = vmatpush1.xpose.msra.mxu0 0.0
        %1051 = vmatprep.subr.mxu0 0.0
        %1052 = vmatpush1.xpose.msra.mxu0 0.0
        %1053 = vmatprep.subr.mxu0 0.0
        %1054 = vmatpush1.xpose.msra.mxu0 0.0
        %1055 = vmatprep.subr.mxu0 0.0
        %1056 = vmatpush1.xpose.msra.mxu0 0.0
        %1057 = vmatprep.subr.mxu0 0.0
        %1058 = vmatpush1.xpose.msra.mxu0 0.0
        %1059 = vmatprep.subr.mxu0 0.0
        %1060 = vmatpush1.xpose.msra.mxu0 0.0
        %1061 = vmatprep.subr.mxu0 0.0
        %1062 = vmatpush1.xpose.msra.mxu0 0.0
        %1063 = vmatprep.subr.mxu0 0.0
        %1064 = vmatpush1.xpose.msra.mxu0 0.0
        %1065 = vmatprep.subr.mxu0 0.0
        %1066 = vmatpush1.xpose.msra.mxu0 0.0
        %1067 = vmatprep.subr.mxu0 0.0
        %1068 = vmatpush1.xpose.msra.mxu0 0.0
        %1069 = vmatprep.subr.mxu0 0.0
        %1070 = vmatpush1.xpose.msra.mxu0 0.0
        %1071 = vmatprep.subr.mxu0 0.0
        %1072 = vmatpush1.xpose.msra.mxu0 0.0
        %1073 = vmatprep.mubr.f32.mxu0 0.0
        %1074 = vmatmul.mubr.f32.gmra.mrb[0].mxu0 %v1005
        %v1075 = vpop.f32.mrb[0].mxu0
        %v1076 = vadd.f32 0.0, %v1075
        %v1077 = vpop.f32.mrb[0].mxu0
        %1078 = vdwg.mxu0
        %vm1079 = vcmask 64512
        %v1080 = vsel %vm1079, %v922, -inf
        %1081 = vmax.xlane.f32.xlu0 %v1080
        %v1082 = vpop.xlane.xlu0 %1081
        %v1083 = vsel %vm1079, %v999, -inf
        %1084 = vmax.xlane.f32.xlu0 %v1083
        %v1085 = vpop.xlane.xlu0 %1084
        %v1086 = vsel %vm1079, %v1076, -inf
        %1087 = vmax.xlane.f32.xlu0 %v1086
        %v1088 = vpop.xlane.xlu0 %1087
        %v1089 = vsub.f32 %v922, %v1082
        %v1090 = vsub.f32 %v999, %v1085
        %v1091 = vsub.f32 %v1076, %v1088
        %v1092 = vmul.f32 %v1089, 1.442695
        %v1093 = vpow.pop %v1092
        %v1094 = vmul.f32 %v1090, 1.442695
        %v1095 = vpow.pop %v1094
        %v1096 = vmul.f32 %v1091, 1.442695
        %v1097 = vpow.pop %v1096
        %v1098 = vsel %vm1079, %v1093, 0.0
        %1099 = vadd.xlane.f32.xlu0 %v1098
        %v1100 = vpop.xlane.xlu0 %1099
        %v1101 = vsel %vm1079, %v1095, 0.0
        %1102 = vadd.xlane.f32.xlu0 %v1101
        %v1103 = vpop.xlane.xlu0 %1102
        %v1104 = vsel %vm1079, %v1097, 0.0
        %1105 = vadd.xlane.f32.xlu0 %v1104
        %v1106 = vpop.xlane.xlu0 %1105
        %v1107 = vrcp.pop %v1100
        %v1108 = vrcp.pop %v1103
        %v1109 = vrcp.pop %v1106
        %v1110 = vmul.f32 %v1093, %v1107
        %v1111 = vmul.f32 %v1095, %v1108
        %v1112 = vmul.f32 %v1097, %v1109
        %v1114 = vsel %vm1079, %v1110, 0
        %1116 = vmatprep.subr.mxu0 0.0
        %1117 = vmatpush1.msra.mxu0 %v833
        %1118 = vmatprep.subr.mxu0 0.0
        %1119 = vmatpush1.msra.mxu0 0.0
        %1120 = vmatprep.subr.mxu0 0.0
        %1121 = vmatpush1.msra.mxu0 0.0
        %1122 = vmatprep.subr.mxu0 0.0
        %1123 = vmatpush1.msra.mxu0 0.0
        %1124 = vmatprep.subr.mxu0 0.0
        %1125 = vmatpush1.msra.mxu0 0.0
        %1126 = vmatprep.subr.mxu0 0.0
        %1127 = vmatpush1.msra.mxu0 0.0
        %1128 = vmatprep.subr.mxu0 0.0
        %1129 = vmatpush1.msra.mxu0 0.0
        %1130 = vmatprep.subr.mxu0 0.0
        %1131 = vmatpush1.msra.mxu0 0.0
        %1132 = vmatprep.subr.mxu0 0.0
        %1133 = vmatpush1.msra.mxu0 0.0
        %1134 = vmatprep.subr.mxu0 0.0
        %1135 = vmatpush1.msra.mxu0 0.0
        %1136 = vmatprep.subr.mxu0 0.0
        %1137 = vmatpush1.msra.mxu0 0.0
        %1138 = vmatprep.subr.mxu0 0.0
        %1139 = vmatpush1.msra.mxu0 0.0
        %1140 = vmatprep.subr.mxu0 0.0
        %1141 = vmatpush1.msra.mxu0 0.0
        %1142 = vmatprep.subr.mxu0 0.0
        %1143 = vmatpush1.msra.mxu0 0.0
        %1144 = vmatprep.subr.mxu0 0.0
        %1145 = vmatpush1.msra.mxu0 0.0
        %1146 = vmatprep.subr.mxu0 0.0
        %1147 = vmatpush1.msra.mxu0 0.0
        %1148 = vmatprep.subr.mxu0 0.0
        %1149 = vmatpush1.msra.mxu0 0.0
        %1150 = vmatprep.subr.mxu0 0.0
        %1151 = vmatpush1.msra.mxu0 0.0
        %1152 = vmatprep.subr.mxu0 0.0
        %1153 = vmatpush1.msra.mxu0 0.0
        %1154 = vmatprep.subr.mxu0 0.0
        %1155 = vmatpush1.msra.mxu0 0.0
        %1156 = vmatprep.subr.mxu0 0.0
        %1157 = vmatpush1.msra.mxu0 0.0
        %1158 = vmatprep.subr.mxu0 0.0
        %1159 = vmatpush1.msra.mxu0 0.0
        %1160 = vmatprep.subr.mxu0 0.0
        %1161 = vmatpush1.msra.mxu0 0.0
        %1162 = vmatprep.subr.mxu0 0.0
        %1163 = vmatpush1.msra.mxu0 0.0
        %1164 = vmatprep.subr.mxu0 0.0
        %1165 = vmatpush1.msra.mxu0 0.0
        %1166 = vmatprep.subr.mxu0 0.0
        %1167 = vmatpush1.msra.mxu0 0.0
        %1168 = vmatprep.subr.mxu0 0.0
        %1169 = vmatpush1.msra.mxu0 0.0
        %1170 = vmatprep.subr.mxu0 0.0
        %1171 = vmatpush1.msra.mxu0 0.0
        %1172 = vmatprep.subr.mxu0 0.0
        %1173 = vmatpush1.msra.mxu0 0.0
        %1174 = vmatprep.subr.mxu0 0.0
        %1175 = vmatpush1.msra.mxu0 0.0
        %1176 = vmatprep.subr.mxu0 0.0
        %1177 = vmatpush1.msra.mxu0 0.0
        %1178 = vmatprep.subr.mxu0 0.0
        %1179 = vmatpush1.msra.mxu0 0.0
        %1180 = vmatprep.mubr.f32.mxu0 0.0
        %1181 = vmatmul.mubr.f32.gmra.mrb[0].mxu0 %v1114
        %v1182 = vpop.f32.mrb[0].mxu0
        %v1183 = vadd.f32 0.0, %v1182
        %v1184 = vpop.f32.mrb[0].mxu0
        %1185 = vdwg.mxu0
        %v1187 = vsel %vm1079, %v1111, 0
        %1189 = vmatprep.subr.mxu0 0.0
        %1190 = vmatpush1.msra.mxu0 %v839
        %1191 = vmatprep.subr.mxu0 0.0
        %1192 = vmatpush1.msra.mxu0 0.0
        %1193 = vmatprep.subr.mxu0 0.0
        %1194 = vmatpush1.msra.mxu0 0.0
        %1195 = vmatprep.subr.mxu0 0.0
        %1196 = vmatpush1.msra.mxu0 0.0
        %1197 = vmatprep.subr.mxu0 0.0
        %1198 = vmatpush1.msra.mxu0 0.0
        %1199 = vmatprep.subr.mxu0 0.0
        %1200 = vmatpush1.msra.mxu0 0.0
        %1201 = vmatprep.subr.mxu0 0.0
        %1202 = vmatpush1.msra.mxu0 0.0
        %1203 = vmatprep.subr.mxu0 0.0
        %1204 = vmatpush1.msra.mxu0 0.0
        %1205 = vmatprep.subr.mxu0 0.0
        %1206 = vmatpush1.msra.mxu0 0.0
        %1207 = vmatprep.subr.mxu0 0.0
        %1208 = vmatpush1.msra.mxu0 0.0
        %1209 = vmatprep.subr.mxu0 0.0
        %1210 = vmatpush1.msra.mxu0 0.0
        %1211 = vmatprep.subr.mxu0 0.0
        %1212 = vmatpush1.msra.mxu0 0.0
        %1213 = vmatprep.subr.mxu0 0.0
        %1214 = vmatpush1.msra.mxu0 0.0
        %1215 = vmatprep.subr.mxu0 0.0
        %1216 = vmatpush1.msra.mxu0 0.0
        %1217 = vmatprep.subr.mxu0 0.0
        %1218 = vmatpush1.msra.mxu0 0.0
        %1219 = vmatprep.subr.mxu0 0.0
        %1220 = vmatpush1.msra.mxu0 0.0
        %1221 = vmatprep.subr.mxu0 0.0
        %1222 = vmatpush1.msra.mxu0 0.0
        %1223 = vmatprep.subr.mxu0 0.0
        %1224 = vmatpush1.msra.mxu0 0.0
        %1225 = vmatprep.subr.mxu0 0.0
        %1226 = vmatpush1.msra.mxu0 0.0
        %1227 = vmatprep.subr.mxu0 0.0
        %1228 = vmatpush1.msra.mxu0 0.0
        %1229 = vmatprep.subr.mxu0 0.0
        %1230 = vmatpush1.msra.mxu0 0.0
        %1231 = vmatprep.subr.mxu0 0.0
        %1232 = vmatpush1.msra.mxu0 0.0
        %1233 = vmatprep.subr.mxu0 0.0
        %1234 = vmatpush1.msra.mxu0 0.0
        %1235 = vmatprep.subr.mxu0 0.0
        %1236 = vmatpush1.msra.mxu0 0.0
        %1237 = vmatprep.subr.mxu0 0.0
        %1238 = vmatpush1.msra.mxu0 0.0
        %1239 = vmatprep.subr.mxu0 0.0
        %1240 = vmatpush1.msra.mxu0 0.0
        %1241 = vmatprep.subr.mxu0 0.0
        %1242 = vmatpush1.msra.mxu0 0.0
        %1243 = vmatprep.subr.mxu0 0.0
        %1244 = vmatpush1.msra.mxu0 0.0
        %1245 = vmatprep.subr.mxu0 0.0
        %1246 = vmatpush1.msra.mxu0 0.0
        %1247 = vmatprep.subr.mxu0 0.0
        %1248 = vmatpush1.msra.mxu0 0.0
        %1249 = vmatprep.subr.mxu0 0.0
        %1250 = vmatpush1.msra.mxu0 0.0
        %1251 = vmatprep.subr.mxu0 0.0
        %1252 = vmatpush1.msra.mxu0 0.0
        %1253 = vmatprep.mubr.f32.mxu0 0.0
        %1254 = vmatmul.mubr.f32.gmra.mrb[0].mxu0 %v1187
        %v1255 = vpop.f32.mrb[0].mxu0
        %v1256 = vadd.f32 0.0, %v1255
        %v1257 = vpop.f32.mrb[0].mxu0
        %1258 = vdwg.mxu0
        %v1260 = vsel %vm1079, %v1112, 0
        %1262 = vmatprep.subr.mxu0 0.0
        %1263 = vmatpush1.msra.mxu0 %v845
        %1264 = vmatprep.subr.mxu0 0.0
        %1265 = vmatpush1.msra.mxu0 0.0
        %1266 = vmatprep.subr.mxu0 0.0
        %1267 = vmatpush1.msra.mxu0 0.0
        %1268 = vmatprep.subr.mxu0 0.0
        %1269 = vmatpush1.msra.mxu0 0.0
        %1270 = vmatprep.subr.mxu0 0.0
        %1271 = vmatpush1.msra.mxu0 0.0
        %1272 = vmatprep.subr.mxu0 0.0
        %1273 = vmatpush1.msra.mxu0 0.0
        %1274 = vmatprep.subr.mxu0 0.0
        %1275 = vmatpush1.msra.mxu0 0.0
        %1276 = vmatprep.subr.mxu0 0.0
        %1277 = vmatpush1.msra.mxu0 0.0
        %1278 = vmatprep.subr.mxu0 0.0
        %1279 = vmatpush1.msra.mxu0 0.0
        %1280 = vmatprep.subr.mxu0 0.0
        %1281 = vmatpush1.msra.mxu0 0.0
        %1282 = vmatprep.subr.mxu0 0.0
        %1283 = vmatpush1.msra.mxu0 0.0
        %1284 = vmatprep.subr.mxu0 0.0
        %1285 = vmatpush1.msra.mxu0 0.0
        %1286 = vmatprep.subr.mxu0 0.0
        %1287 = vmatpush1.msra.mxu0 0.0
        %1288 = vmatprep.subr.mxu0 0.0
        %1289 = vmatpush1.msra.mxu0 0.0
        %1290 = vmatprep.subr.mxu0 0.0
        %1291 = vmatpush1.msra.mxu0 0.0
        %1292 = vmatprep.subr.mxu0 0.0
        %1293 = vmatpush1.msra.mxu0 0.0
        %1294 = vmatprep.subr.mxu0 0.0
        %1295 = vmatpush1.msra.mxu0 0.0
        %1296 = vmatprep.subr.mxu0 0.0
        %1297 = vmatpush1.msra.mxu0 0.0
        %1298 = vmatprep.subr.mxu0 0.0
        %1299 = vmatpush1.msra.mxu0 0.0
        %1300 = vmatprep.subr.mxu0 0.0
        %1301 = vmatpush1.msra.mxu0 0.0
        %1302 = vmatprep.subr.mxu0 0.0
        %1303 = vmatpush1.msra.mxu0 0.0
        %1304 = vmatprep.subr.mxu0 0.0
        %1305 = vmatpush1.msra.mxu0 0.0
        %1306 = vmatprep.subr.mxu0 0.0
        %1307 = vmatpush1.msra.mxu0 0.0
        %1308 = vmatprep.subr.mxu0 0.0
        %1309 = vmatpush1.msra.mxu0 0.0
        %1310 = vmatprep.subr.mxu0 0.0
        %1311 = vmatpush1.msra.mxu0 0.0
        %1312 = vmatprep.subr.mxu0 0.0
        %1313 = vmatpush1.msra.mxu0 0.0
        %1314 = vmatprep.subr.mxu0 0.0
        %1315 = vmatpush1.msra.mxu0 0.0
        %1316 = vmatprep.subr.mxu0 0.0
        %1317 = vmatpush1.msra.mxu0 0.0
        %1318 = vmatprep.subr.mxu0 0.0
        %1319 = vmatpush1.msra.mxu0 0.0
        %1320 = vmatprep.subr.mxu0 0.0
        %1321 = vmatpush1.msra.mxu0 0.0
        %1322 = vmatprep.subr.mxu0 0.0
        %1323 = vmatpush1.msra.mxu0 0.0
        %1324 = vmatprep.subr.mxu0 0.0
        %1325 = vmatpush1.msra.mxu0 0.0
        %1326 = vmatprep.mubr.f32.mxu0 0.0
        %1327 = vmatmul.mubr.f32.gmra.mrb[0].mxu0 %v1260
        %v1328 = vpop.f32.mrb[0].mxu0
        %v1329 = vadd.f32 0.0, %v1328
        %v1330 = vpop.f32.mrb[0].mxu0
        %1331 = vdwg.mxu0
        %1332 = vst.msk [vmem:[#allocation3] sm:$0xff] %vm850, %v1183
        %1333 = vst.msk [vmem:[#allocation3 + $0x8] sm:$0xff] %vm850, %v1256
        %1334 = vst.msk [vmem:[#allocation3 + $0x10] sm:$0xff] %vm850, %v1329
        %1335 = vrot.lane.b32.xlu0 %v831, 112
        %v1336 = vpop.permute.xlu0 %1335
        %1337 = vrot.lane.b32.xlu0 %v831, 48
        %v1338 = vpop.permute.xlu0 %1337
        %v1339 = vsel %vm850, %v1336, 0
        %v1341 = vsel %vm850, %v1338, 0
        %1343 = vmatprep.subr.mxu0 0.0
        %1344 = vmatpush1.xpose.msra.mxu0 %v1341
        %1345 = vmatprep.subr.mxu0 0.0
        %1346 = vmatpush1.xpose.msra.mxu0 0.0
        %1347 = vmatprep.subr.mxu0 0.0
        %1348 = vmatpush1.xpose.msra.mxu0 0.0
        %1349 = vmatprep.subr.mxu0 0.0
        %1350 = vmatpush1.xpose.msra.mxu0 0.0
        %1351 = vmatprep.subr.mxu0 0.0
        %1352 = vmatpush1.xpose.msra.mxu0 0.0
        %1353 = vmatprep.subr.mxu0 0.0
        %1354 = vmatpush1.xpose.msra.mxu0 0.0
        %1355 = vmatprep.subr.mxu0 0.0
        %1356 = vmatpush1.xpose.msra.mxu0 0.0
        %1357 = vmatprep.subr.mxu0 0.0
        %1358 = vmatpush1.xpose.msra.mxu0 0.0
        %1359 = vmatprep.subr.mxu0 0.0
        %1360 = vmatpush1.xpose.msra.mxu0 0.0
        %1361 = vmatprep.subr.mxu0 0.0
        %1362 = vmatpush1.xpose.msra.mxu0 0.0
        %1363 = vmatprep.subr.mxu0 0.0
        %1364 = vmatpush1.xpose.msra.mxu0 0.0
        %1365 = vmatprep.subr.mxu0 0.0
        %1366 = vmatpush1.xpose.msra.mxu0 0.0
        %1367 = vmatprep.subr.mxu0 0.0
        %1368 = vmatpush1.xpose.msra.mxu0 0.0
        %1369 = vmatprep.subr.mxu0 0.0
        %1370 = vmatpush1.xpose.msra.mxu0 0.0
        %1371 = vmatprep.subr.mxu0 0.0
        %1372 = vmatpush1.xpose.msra.mxu0 0.0
        %1373 = vmatprep.subr.mxu0 0.0
        %1374 = vmatpush1.xpose.msra.mxu0 0.0
        %1375 = vmatprep.subr.mxu0 0.0
        %1376 = vmatpush1.xpose.msra.mxu0 0.0
        %1377 = vmatprep.subr.mxu0 0.0
        %1378 = vmatpush1.xpose.msra.mxu0 0.0
        %1379 = vmatprep.subr.mxu0 0.0
        %1380 = vmatpush1.xpose.msra.mxu0 0.0
        %1381 = vmatprep.subr.mxu0 0.0
        %1382 = vmatpush1.xpose.msra.mxu0 0.0
        %1383 = vmatprep.subr.mxu0 0.0
        %1384 = vmatpush1.xpose.msra.mxu0 0.0
        %1385 = vmatprep.subr.mxu0 0.0
        %1386 = vmatpush1.xpose.msra.mxu0 0.0
        %1387 = vmatprep.subr.mxu0 0.0
        %1388 = vmatpush1.xpose.msra.mxu0 0.0
        %1389 = vmatprep.subr.mxu0 0.0
        %1390 = vmatpush1.xpose.msra.mxu0 0.0
        %1391 = vmatprep.subr.mxu0 0.0
        %1392 = vmatpush1.xpose.msra.mxu0 0.0
        %1393 = vmatprep.subr.mxu0 0.0
        %1394 = vmatpush1.xpose.msra.mxu0 0.0
        %1395 = vmatprep.subr.mxu0 0.0
        %1396 = vmatpush1.xpose.msra.mxu0 0.0
        %1397 = vmatprep.subr.mxu0 0.0
        %1398 = vmatpush1.xpose.msra.mxu0 0.0
        %1399 = vmatprep.subr.mxu0 0.0
        %1400 = vmatpush1.xpose.msra.mxu0 0.0
        %1401 = vmatprep.subr.mxu0 0.0
        %1402 = vmatpush1.xpose.msra.mxu0 0.0
        %1403 = vmatprep.subr.mxu0 0.0
        %1404 = vmatpush1.xpose.msra.mxu0 0.0
        %1405 = vmatprep.subr.mxu0 0.0
        %1406 = vmatpush1.xpose.msra.mxu0 0.0
        %1407 = vmatprep.mubr.f32.mxu0 0.0
        %1408 = vmatmul.mubr.f32.gmra.mrb[0].mxu0 %v1339
        %v1409 = vpop.f32.mrb[0].mxu0
        %v1410 = vadd.f32 0.0, %v1409
        %v1411 = vpop.f32.mrb[0].mxu0
        %1412 = vdwg.mxu0
        %1413 = vrot.lane.b32.xlu0 %v837, 112
        %v1414 = vpop.permute.xlu0 %1413
        %1415 = vrot.lane.b32.xlu0 %v837, 48
        %v1416 = vpop.permute.xlu0 %1415
        %v1417 = vsel %vm850, %v1414, 0
        %v1419 = vsel %vm850, %v1416, 0
        %1421 = vmatprep.subr.mxu0 0.0
        %1422 = vmatpush1.xpose.msra.mxu0 %v1419
        %1423 = vmatprep.subr.mxu0 0.0
        %1424 = vmatpush1.xpose.msra.mxu0 0.0
        %1425 = vmatprep.subr.mxu0 0.0
        %1426 = vmatpush1.xpose.msra.mxu0 0.0
        %1427 = vmatprep.subr.mxu0 0.0
        %1428 = vmatpush1.xpose.msra.mxu0 0.0
        %1429 = vmatprep.subr.mxu0 0.0
        %1430 = vmatpush1.xpose.msra.mxu0 0.0
        %1431 = vmatprep.subr.mxu0 0.0
        %1432 = vmatpush1.xpose.msra.mxu0 0.0
        %1433 = vmatprep.subr.mxu0 0.0
        %1434 = vmatpush1.xpose.msra.mxu0 0.0
        %1435 = vmatprep.subr.mxu0 0.0
        %1436 = vmatpush1.xpose.msra.mxu0 0.0
        %1437 = vmatprep.subr.mxu0 0.0
        %1438 = vmatpush1.xpose.msra.mxu0 0.0
        %1439 = vmatprep.subr.mxu0 0.0
        %1440 = vmatpush1.xpose.msra.mxu0 0.0
        %1441 = vmatprep.subr.mxu0 0.0
        %1442 = vmatpush1.xpose.msra.mxu0 0.0
        %1443 = vmatprep.subr.mxu0 0.0
        %1444 = vmatpush1.xpose.msra.mxu0 0.0
        %1445 = vmatprep.subr.mxu0 0.0
        %1446 = vmatpush1.xpose.msra.mxu0 0.0
        %1447 = vmatprep.subr.mxu0 0.0
        %1448 = vmatpush1.xpose.msra.mxu0 0.0
        %1449 = vmatprep.subr.mxu0 0.0
        %1450 = vmatpush1.xpose.msra.mxu0 0.0
        %1451 = vmatprep.subr.mxu0 0.0
        %1452 = vmatpush1.xpose.msra.mxu0 0.0
        %1453 = vmatprep.subr.mxu0 0.0
        %1454 = vmatpush1.xpose.msra.mxu0 0.0
        %1455 = vmatprep.subr.mxu0 0.0
        %1456 = vmatpush1.xpose.msra.mxu0 0.0
        %1457 = vmatprep.subr.mxu0 0.0
        %1458 = vmatpush1.xpose.msra.mxu0 0.0
        %1459 = vmatprep.subr.mxu0 0.0
        %1460 = vmatpush1.xpose.msra.mxu0 0.0
        %1461 = vmatprep.subr.mxu0 0.0
        %1462 = vmatpush1.xpose.msra.mxu0 0.0
        %1463 = vmatprep.subr.mxu0 0.0
        %1464 = vmatpush1.xpose.msra.mxu0 0.0
        %1465 = vmatprep.subr.mxu0 0.0
        %1466 = vmatpush1.xpose.msra.mxu0 0.0
        %1467 = vmatprep.subr.mxu0 0.0
        %1468 = vmatpush1.xpose.msra.mxu0 0.0
        %1469 = vmatprep.subr.mxu0 0.0
        %1470 = vmatpush1.xpose.msra.mxu0 0.0
        %1471 = vmatprep.subr.mxu0 0.0
        %1472 = vmatpush1.xpose.msra.mxu0 0.0
        %1473 = vmatprep.subr.mxu0 0.0
        %1474 = vmatpush1.xpose.msra.mxu0 0.0
        %1475 = vmatprep.subr.mxu0 0.0
        %1476 = vmatpush1.xpose.msra.mxu0 0.0
        %1477 = vmatprep.subr.mxu0 0.0
        %1478 = vmatpush1.xpose.msra.mxu0 0.0
        %1479 = vmatprep.subr.mxu0 0.0
        %1480 = vmatpush1.xpose.msra.mxu0 0.0
        %1481 = vmatprep.subr.mxu0 0.0
        %1482 = vmatpush1.xpose.msra.mxu0 0.0
        %1483 = vmatprep.subr.mxu0 0.0
        %1484 = vmatpush1.xpose.msra.mxu0 0.0
        %1485 = vmatprep.mubr.f32.mxu0 0.0
        %1486 = vmatmul.mubr.f32.gmra.mrb[0].mxu0 %v1417
        %v1487 = vpop.f32.mrb[0].mxu0
        %v1488 = vadd.f32 0.0, %v1487
        %v1489 = vpop.f32.mrb[0].mxu0
        %1490 = vdwg.mxu0
        %1491 = vrot.lane.b32.xlu0 %v843, 112
        %v1492 = vpop.permute.xlu0 %1491
        %1493 = vrot.lane.b32.xlu0 %v843, 48
        %v1494 = vpop.permute.xlu0 %1493
        %v1495 = vsel %vm850, %v1492, 0
        %v1497 = vsel %vm850, %v1494, 0
        %1499 = vmatprep.subr.mxu0 0.0
        %1500 = vmatpush1.xpose.msra.mxu0 %v1497
        %1501 = vmatprep.subr.mxu0 0.0
        %1502 = vmatpush1.xpose.msra.mxu0 0.0
        %1503 = vmatprep.subr.mxu0 0.0
        %1504 = vmatpush1.xpose.msra.mxu0 0.0
        %1505 = vmatprep.subr.mxu0 0.0
        %1506 = vmatpush1.xpose.msra.mxu0 0.0
        %1507 = vmatprep.subr.mxu0 0.0
        %1508 = vmatpush1.xpose.msra.mxu0 0.0
        %1509 = vmatprep.subr.mxu0 0.0
        %1510 = vmatpush1.xpose.msra.mxu0 0.0
        %1511 = vmatprep.subr.mxu0 0.0
        %1512 = vmatpush1.xpose.msra.mxu0 0.0
        %1513 = vmatprep.subr.mxu0 0.0
        %1514 = vmatpush1.xpose.msra.mxu0 0.0
        %1515 = vmatprep.subr.mxu0 0.0
        %1516 = vmatpush1.xpose.msra.mxu0 0.0
        %1517 = vmatprep.subr.mxu0 0.0
        %1518 = vmatpush1.xpose.msra.mxu0 0.0
        %1519 = vmatprep.subr.mxu0 0.0
        %1520 = vmatpush1.xpose.msra.mxu0 0.0
        %1521 = vmatprep.subr.mxu0 0.0
        %1522 = vmatpush1.xpose.msra.mxu0 0.0
        %1523 = vmatprep.subr.mxu0 0.0
        %1524 = vmatpush1.xpose.msra.mxu0 0.0
        %1525 = vmatprep.subr.mxu0 0.0
        %1526 = vmatpush1.xpose.msra.mxu0 0.0
        %1527 = vmatprep.subr.mxu0 0.0
        %1528 = vmatpush1.xpose.msra.mxu0 0.0
        %1529 = vmatprep.subr.mxu0 0.0
        %1530 = vmatpush1.xpose.msra.mxu0 0.0
        %1531 = vmatprep.subr.mxu0 0.0
        %1532 = vmatpush1.xpose.msra.mxu0 0.0
        %1533 = vmatprep.subr.mxu0 0.0
        %1534 = vmatpush1.xpose.msra.mxu0 0.0
        %1535 = vmatprep.subr.mxu0 0.0
        %1536 = vmatpush1.xpose.msra.mxu0 0.0
        %1537 = vmatprep.subr.mxu0 0.0
        %1538 = vmatpush1.xpose.msra.mxu0 0.0
        %1539 = vmatprep.subr.mxu0 0.0
        %1540 = vmatpush1.xpose.msra.mxu0 0.0
        %1541 = vmatprep.subr.mxu0 0.0
        %1542 = vmatpush1.xpose.msra.mxu0 0.0
        %1543 = vmatprep.subr.mxu0 0.0
        %1544 = vmatpush1.xpose.msra.mxu0 0.0
        %1545 = vmatprep.subr.mxu0 0.0
        %1546 = vmatpush1.xpose.msra.mxu0 0.0
        %1547 = vmatprep.subr.mxu0 0.0
        %1548 = vmatpush1.xpose.msra.mxu0 0.0
        %1549 = vmatprep.subr.mxu0 0.0
        %1550 = vmatpush1.xpose.msra.mxu0 0.0
        %1551 = vmatprep.subr.mxu0 0.0
        %1552 = vmatpush1.xpose.msra.mxu0 0.0
        %1553 = vmatprep.subr.mxu0 0.0
        %1554 = vmatpush1.xpose.msra.mxu0 0.0
        %1555 = vmatprep.subr.mxu0 0.0
        %1556 = vmatpush1.xpose.msra.mxu0 0.0
        %1557 = vmatprep.subr.mxu0 0.0
        %1558 = vmatpush1.xpose.msra.mxu0 0.0
        %1559 = vmatprep.subr.mxu0 0.0
        %1560 = vmatpush1.xpose.msra.mxu0 0.0
        %1561 = vmatprep.subr.mxu0 0.0
        %1562 = vmatpush1.xpose.msra.mxu0 0.0
        %1563 = vmatprep.mubr.f32.mxu0 0.0
        %1564 = vmatmul.mubr.f32.gmra.mrb[0].mxu0 %v1495
        %v1565 = vpop.f32.mrb[0].mxu0
        %v1566 = vadd.f32 0.0, %v1565
        %v1567 = vpop.f32.mrb[0].mxu0
        %1568 = vdwg.mxu0
        %v1569 = vsel %vm1079, %v1410, -inf
        %1570 = vmax.xlane.f32.xlu0 %v1569
        %v1571 = vpop.xlane.xlu0 %1570
        %v1572 = vsel %vm1079, %v1488, -inf
        %1573 = vmax.xlane.f32.xlu0 %v1572
        %v1574 = vpop.xlane.xlu0 %1573
        %v1575 = vsel %vm1079, %v1566, -inf
        %1576 = vmax.xlane.f32.xlu0 %v1575
        %v1577 = vpop.xlane.xlu0 %1576
        %v1578 = vsub.f32 %v1410, %v1571
        %v1579 = vsub.f32 %v1488, %v1574
        %v1580 = vsub.f32 %v1566, %v1577
        %v1581 = vmul.f32 %v1578, 1.442695
        %v1582 = vpow.pop %v1581
        %v1583 = vmul.f32 %v1579, 1.442695
        %v1584 = vpow.pop %v1583
        %v1585 = vmul.f32 %v1580, 1.442695
        %v1586 = vpow.pop %v1585
        %v1587 = vsel %vm1079, %v1582, 0.0
        %1588 = vadd.xlane.f32.xlu0 %v1587
        %v1589 = vpop.xlane.xlu0 %1588
        %v1590 = vsel %vm1079, %v1584, 0.0
        %1591 = vadd.xlane.f32.xlu0 %v1590
        %v1592 = vpop.xlane.xlu0 %1591
        %v1593 = vsel %vm1079, %v1586, 0.0
        %1594 = vadd.xlane.f32.xlu0 %v1593
        %v1595 = vpop.xlane.xlu0 %1594
        %v1596 = vrcp.pop %v1589
        %v1597 = vrcp.pop %v1592
        %v1598 = vrcp.pop %v1595
        %v1599 = vmul.f32 %v1582, %v1596
        %v1600 = vmul.f32 %v1584, %v1597
        %v1601 = vmul.f32 %v1586, %v1598
        %1603 = vrot.lane.b32.xlu0 %v833, 112
        %v1604 = vpop.permute.xlu0 %1603
        %v1607 = vsel %vm1079, %v1599, 0
        %1609 = vmatprep.subr.mxu0 0.0
        %1610 = vmatpush1.msra.mxu0 %v1604
        %1611 = vmatprep.subr.mxu0 0.0
        %1612 = vmatpush1.msra.mxu0 0.0
        %1613 = vmatprep.subr.mxu0 0.0
        %1614 = vmatpush1.msra.mxu0 0.0
        %1615 = vmatprep.subr.mxu0 0.0
        %1616 = vmatpush1.msra.mxu0 0.0
        %1617 = vmatprep.subr.mxu0 0.0
        %1618 = vmatpush1.msra.mxu0 0.0
        %1619 = vmatprep.subr.mxu0 0.0
        %1620 = vmatpush1.msra.mxu0 0.0
        %1621 = vmatprep.subr.mxu0 0.0
        %1622 = vmatpush1.msra.mxu0 0.0
        %1623 = vmatprep.subr.mxu0 0.0
        %1624 = vmatpush1.msra.mxu0 0.0
        %1625 = vmatprep.subr.mxu0 0.0
        %1626 = vmatpush1.msra.mxu0 0.0
        %1627 = vmatprep.subr.mxu0 0.0
        %1628 = vmatpush1.msra.mxu0 0.0
        %1629 = vmatprep.subr.mxu0 0.0
        %1630 = vmatpush1.msra.mxu0 0.0
        %1631 = vmatprep.subr.mxu0 0.0
        %1632 = vmatpush1.msra.mxu0 0.0
        %1633 = vmatprep.subr.mxu0 0.0
        %1634 = vmatpush1.msra.mxu0 0.0
        %1635 = vmatprep.subr.mxu0 0.0
        %1636 = vmatpush1.msra.mxu0 0.0
        %1637 = vmatprep.subr.mxu0 0.0
        %1638 = vmatpush1.msra.mxu0 0.0
        %1639 = vmatprep.subr.mxu0 0.0
        %1640 = vmatpush1.msra.mxu0 0.0
        %1641 = vmatprep.subr.mxu0 0.0
        %1642 = vmatpush1.msra.mxu0 0.0
        %1643 = vmatprep.subr.mxu0 0.0
        %1644 = vmatpush1.msra.mxu0 0.0
        %1645 = vmatprep.subr.mxu0 0.0
        %1646 = vmatpush1.msra.mxu0 0.0
        %1647 = vmatprep.subr.mxu0 0.0
        %1648 = vmatpush1.msra.mxu0 0.0
        %1649 = vmatprep.subr.mxu0 0.0
        %1650 = vmatpush1.msra.mxu0 0.0
        %1651 = vmatprep.subr.mxu0 0.0
        %1652 = vmatpush1.msra.mxu0 0.0
        %1653 = vmatprep.subr.mxu0 0.0
        %1654 = vmatpush1.msra.mxu0 0.0
        %1655 = vmatprep.subr.mxu0 0.0
        %1656 = vmatpush1.msra.mxu0 0.0
        %1657 = vmatprep.subr.mxu0 0.0
        %1658 = vmatpush1.msra.mxu0 0.0
        %1659 = vmatprep.subr.mxu0 0.0
        %1660 = vmatpush1.msra.mxu0 0.0
        %1661 = vmatprep.subr.mxu0 0.0
        %1662 = vmatpush1.msra.mxu0 0.0
        %1663 = vmatprep.subr.mxu0 0.0
        %1664 = vmatpush1.msra.mxu0 0.0
        %1665 = vmatprep.subr.mxu0 0.0
        %1666 = vmatpush1.msra.mxu0 0.0
        %1667 = vmatprep.subr.mxu0 0.0
        %1668 = vmatpush1.msra.mxu0 0.0
        %1669 = vmatprep.subr.mxu0 0.0
        %1670 = vmatpush1.msra.mxu0 0.0
        %1671 = vmatprep.subr.mxu0 0.0
        %1672 = vmatpush1.msra.mxu0 0.0
        %1673 = vmatprep.mubr.f32.mxu0 0.0
        %1674 = vmatmul.mubr.f32.gmra.mrb[0].mxu0 %v1607
        %v1675 = vpop.f32.mrb[0].mxu0
        %v1676 = vadd.f32 0.0, %v1675
        %v1677 = vpop.f32.mrb[0].mxu0
        %1678 = vdwg.mxu0
        %1680 = vrot.lane.b32.xlu0 %v839, 112
        %v1681 = vpop.permute.xlu0 %1680
        %v1684 = vsel %vm1079, %v1600, 0
        %1686 = vmatprep.subr.mxu0 0.0
        %1687 = vmatpush1.msra.mxu0 %v1681
        %1688 = vmatprep.subr.mxu0 0.0
        %1689 = vmatpush1.msra.mxu0 0.0
        %1690 = vmatprep.subr.mxu0 0.0
        %1691 = vmatpush1.msra.mxu0 0.0
        %1692 = vmatprep.subr.mxu0 0.0
        %1693 = vmatpush1.msra.mxu0 0.0
        %1694 = vmatprep.subr.mxu0 0.0
        %1695 = vmatpush1.msra.mxu0 0.0
        %1696 = vmatprep.subr.mxu0 0.0
        %1697 = vmatpush1.msra.mxu0 0.0
        %1698 = vmatprep.subr.mxu0 0.0
        %1699 = vmatpush1.msra.mxu0 0.0
        %1700 = vmatprep.subr.mxu0 0.0
        %1701 = vmatpush1.msra.mxu0 0.0
        %1702 = vmatprep.subr.mxu0 0.0
        %1703 = vmatpush1.msra.mxu0 0.0
        %1704 = vmatprep.subr.mxu0 0.0
        %1705 = vmatpush1.msra.mxu0 0.0
        %1706 = vmatprep.subr.mxu0 0.0
        %1707 = vmatpush1.msra.mxu0 0.0
        %1708 = vmatprep.subr.mxu0 0.0
        %1709 = vmatpush1.msra.mxu0 0.0
        %1710 = vmatprep.subr.mxu0 0.0
        %1711 = vmatpush1.msra.mxu0 0.0
        %1712 = vmatprep.subr.mxu0 0.0
        %1713 = vmatpush1.msra.mxu0 0.0
        %1714 = vmatprep.subr.mxu0 0.0
        %1715 = vmatpush1.msra.mxu0 0.0
        %1716 = vmatprep.subr.mxu0 0.0
        %1717 = vmatpush1.msra.mxu0 0.0
        %1718 = vmatprep.subr.mxu0 0.0
        %1719 = vmatpush1.msra.mxu0 0.0
        %1720 = vmatprep.subr.mxu0 0.0
        %1721 = vmatpush1.msra.mxu0 0.0
        %1722 = vmatprep.subr.mxu0 0.0
        %1723 = vmatpush1.msra.mxu0 0.0
        %1724 = vmatprep.subr.mxu0 0.0
        %1725 = vmatpush1.msra.mxu0 0.0
        %1726 = vmatprep.subr.mxu0 0.0
        %1727 = vmatpush1.msra.mxu0 0.0
        %1728 = vmatprep.subr.mxu0 0.0
        %1729 = vmatpush1.msra.mxu0 0.0
        %1730 = vmatprep.subr.mxu0 0.0
        %1731 = vmatpush1.msra.mxu0 0.0
        %1732 = vmatprep.subr.mxu0 0.0
        %1733 = vmatpush1.msra.mxu0 0.0
        %1734 = vmatprep.subr.mxu0 0.0
        %1735 = vmatpush1.msra.mxu0 0.0
        %1736 = vmatprep.subr.mxu0 0.0
        %1737 = vmatpush1.msra.mxu0 0.0
        %1738 = vmatprep.subr.mxu0 0.0
        %1739 = vmatpush1.msra.mxu0 0.0
        %1740 = vmatprep.subr.mxu0 0.0
        %1741 = vmatpush1.msra.mxu0 0.0
        %1742 = vmatprep.subr.mxu0 0.0
        %1743 = vmatpush1.msra.mxu0 0.0
        %1744 = vmatprep.subr.mxu0 0.0
        %1745 = vmatpush1.msra.mxu0 0.0
        %1746 = vmatprep.subr.mxu0 0.0
        %1747 = vmatpush1.msra.mxu0 0.0
        %1748 = vmatprep.subr.mxu0 0.0
        %1749 = vmatpush1.msra.mxu0 0.0
        %1750 = vmatprep.mubr.f32.mxu0 0.0
        %1751 = vmatmul.mubr.f32.gmra.mrb[0].mxu0 %v1684
        %v1752 = vpop.f32.mrb[0].mxu0
        %v1753 = vadd.f32 0.0, %v1752
        %v1754 = vpop.f32.mrb[0].mxu0
        %1755 = vdwg.mxu0
        %1757 = vrot.lane.b32.xlu0 %v845, 112
        %v1758 = vpop.permute.xlu0 %1757
        %v1761 = vsel %vm1079, %v1601, 0
        %1763 = vmatprep.subr.mxu0 0.0
        %1764 = vmatpush1.msra.mxu0 %v1758
        %1765 = vmatprep.subr.mxu0 0.0
        %1766 = vmatpush1.msra.mxu0 0.0
        %1767 = vmatprep.subr.mxu0 0.0
        %1768 = vmatpush1.msra.mxu0 0.0
        %1769 = vmatprep.subr.mxu0 0.0
        %1770 = vmatpush1.msra.mxu0 0.0
        %1771 = vmatprep.subr.mxu0 0.0
        %1772 = vmatpush1.msra.mxu0 0.0
        %1773 = vmatprep.subr.mxu0 0.0
        %1774 = vmatpush1.msra.mxu0 0.0
        %1775 = vmatprep.subr.mxu0 0.0
        %1776 = vmatpush1.msra.mxu0 0.0
        %1777 = vmatprep.subr.mxu0 0.0
        %1778 = vmatpush1.msra.mxu0 0.0
        %1779 = vmatprep.subr.mxu0 0.0
        %1780 = vmatpush1.msra.mxu0 0.0
        %1781 = vmatprep.subr.mxu0 0.0
        %1782 = vmatpush1.msra.mxu0 0.0
        %1783 = vmatprep.subr.mxu0 0.0
        %1784 = vmatpush1.msra.mxu0 0.0
        %1785 = vmatprep.subr.mxu0 0.0
        %1786 = vmatpush1.msra.mxu0 0.0
        %1787 = vmatprep.subr.mxu0 0.0
        %1788 = vmatpush1.msra.mxu0 0.0
        %1789 = vmatprep.subr.mxu0 0.0
        %1790 = vmatpush1.msra.mxu0 0.0
        %1791 = vmatprep.subr.mxu0 0.0
        %1792 = vmatpush1.msra.mxu0 0.0
        %1793 = vmatprep.subr.mxu0 0.0
        %1794 = vmatpush1.msra.mxu0 0.0
        %1795 = vmatprep.subr.mxu0 0.0
        %1796 = vmatpush1.msra.mxu0 0.0
        %1797 = vmatprep.subr.mxu0 0.0
        %1798 = vmatpush1.msra.mxu0 0.0
        %1799 = vmatprep.subr.mxu0 0.0
        %1800 = vmatpush1.msra.mxu0 0.0
        %1801 = vmatprep.subr.mxu0 0.0
        %1802 = vmatpush1.msra.mxu0 0.0
        %1803 = vmatprep.subr.mxu0 0.0
        %1804 = vmatpush1.msra.mxu0 0.0
        %1805 = vmatprep.subr.mxu0 0.0
        %1806 = vmatpush1.msra.mxu0 0.0
        %1807 = vmatprep.subr.mxu0 0.0
        %1808 = vmatpush1.msra.mxu0 0.0
        %1809 = vmatprep.subr.mxu0 0.0
        %1810 = vmatpush1.msra.mxu0 0.0
        %1811 = vmatprep.subr.mxu0 0.0
        %1812 = vmatpush1.msra.mxu0 0.0
        %1813 = vmatprep.subr.mxu0 0.0
        %1814 = vmatpush1.msra.mxu0 0.0
        %1815 = vmatprep.subr.mxu0 0.0
        %1816 = vmatpush1.msra.mxu0 0.0
        %1817 = vmatprep.subr.mxu0 0.0
        %1818 = vmatpush1.msra.mxu0 0.0
        %1819 = vmatprep.subr.mxu0 0.0
        %1820 = vmatpush1.msra.mxu0 0.0
        %1821 = vmatprep.subr.mxu0 0.0
        %1822 = vmatpush1.msra.mxu0 0.0
        %1823 = vmatprep.subr.mxu0 0.0
        %1824 = vmatpush1.msra.mxu0 0.0
        %1825 = vmatprep.subr.mxu0 0.0
        %1826 = vmatpush1.msra.mxu0 0.0
        %1827 = vmatprep.mubr.f32.mxu0 0.0
        %1828 = vmatmul.mubr.f32.gmra.mrb[0].mxu0 %v1761
        %v1829 = vpop.f32.mrb[0].mxu0
        %v1830 = vadd.f32 0.0, %v1829
        %v1831 = vpop.f32.mrb[0].mxu0
        %1832 = vdwg.mxu0
        %1836 = vrot.lane.b32.xlu0 %v1676, 16
        %v1837 = vpop.permute.xlu0 %1836
        %1838 = vrot.lane.b32.xlu0 %v1753, 16
        %v1839 = vpop.permute.xlu0 %1838
        %1840 = vrot.lane.b32.xlu0 %v1830, 16
        %v1841 = vpop.permute.xlu0 %1840
        %vm1845 = vcmask 261248
        %1846 = vst.msk [vmem:[#allocation3] sm:$0xff] %vm1845, %v1837
        %1847 = vst.msk [vmem:[#allocation3 + $0x8] sm:$0xff] %vm1845, %v1839
        %1848 = vst.msk [vmem:[#allocation3 + $0x10] sm:$0xff] %vm1845, %v1841
        %1849 = vrot.lane.b32.xlu0 %v831, 96
        %v1850 = vpop.permute.xlu0 %1849
        %1851 = vrot.lane.b32.xlu0 %v831, 32
        %v1852 = vpop.permute.xlu0 %1851
        %v1853 = vsel %vm850, %v1850, 0
        %v1855 = vsel %vm850, %v1852, 0
        %1857 = vmatprep.subr.mxu0 0.0
        %1858 = vmatpush1.xpose.msra.mxu0 %v1855
        %1859 = vmatprep.subr.mxu0 0.0
        %1860 = vmatpush1.xpose.msra.mxu0 0.0
        %1861 = vmatprep.subr.mxu0 0.0
        %1862 = vmatpush1.xpose.msra.mxu0 0.0
        %1863 = vmatprep.subr.mxu0 0.0
        %1864 = vmatpush1.xpose.msra.mxu0 0.0
        %1865 = vmatprep.subr.mxu0 0.0
        %1866 = vmatpush1.xpose.msra.mxu0 0.0
        %1867 = vmatprep.subr.mxu0 0.0
        %1868 = vmatpush1.xpose.msra.mxu0 0.0
        %1869 = vmatprep.subr.mxu0 0.0
        %1870 = vmatpush1.xpose.msra.mxu0 0.0
        %1871 = vmatprep.subr.mxu0 0.0
        %1872 = vmatpush1.xpose.msra.mxu0 0.0
        %1873 = vmatprep.subr.mxu0 0.0
        %1874 = vmatpush1.xpose.msra.mxu0 0.0
        %1875 = vmatprep.subr.mxu0 0.0
        %1876 = vmatpush1.xpose.msra.mxu0 0.0
        %1877 = vmatprep.subr.mxu0 0.0
        %1878 = vmatpush1.xpose.msra.mxu0 0.0
        %1879 = vmatprep.subr.mxu0 0.0
        %1880 = vmatpush1.xpose.msra.mxu0 0.0
        %1881 = vmatprep.subr.mxu0 0.0
        %1882 = vmatpush1.xpose.msra.mxu0 0.0
        %1883 = vmatprep.subr.mxu0 0.0
        %1884 = vmatpush1.xpose.msra.mxu0 0.0
        %1885 = vmatprep.subr.mxu0 0.0
        %1886 = vmatpush1.xpose.msra.mxu0 0.0
        %1887 = vmatprep.subr.mxu0 0.0
        %1888 = vmatpush1.xpose.msra.mxu0 0.0
        %1889 = vmatprep.subr.mxu0 0.0
        %1890 = vmatpush1.xpose.msra.mxu0 0.0
        %1891 = vmatprep.subr.mxu0 0.0
        %1892 = vmatpush1.xpose.msra.mxu0 0.0
        %1893 = vmatprep.subr.mxu0 0.0
        %1894 = vmatpush1.xpose.msra.mxu0 0.0
        %1895 = vmatprep.subr.mxu0 0.0
        %1896 = vmatpush1.xpose.msra.mxu0 0.0
        %1897 = vmatprep.subr.mxu0 0.0
        %1898 = vmatpush1.xpose.msra.mxu0 0.0
        %1899 = vmatprep.subr.mxu0 0.0
        %1900 = vmatpush1.xpose.msra.mxu0 0.0
        %1901 = vmatprep.subr.mxu0 0.0
        %1902 = vmatpush1.xpose.msra.mxu0 0.0
        %1903 = vmatprep.subr.mxu0 0.0
        %1904 = vmatpush1.xpose.msra.mxu0 0.0
        %1905 = vmatprep.subr.mxu0 0.0
        %1906 = vmatpush1.xpose.msra.mxu0 0.0
        %1907 = vmatprep.subr.mxu0 0.0
        %1908 = vmatpush1.xpose.msra.mxu0 0.0
        %1909 = vmatprep.subr.mxu0 0.0
        %1910 = vmatpush1.xpose.msra.mxu0 0.0
        %1911 = vmatprep.subr.mxu0 0.0
        %1912 = vmatpush1.xpose.msra.mxu0 0.0
        %1913 = vmatprep.subr.mxu0 0.0
        %1914 = vmatpush1.xpose.msra.mxu0 0.0
        %1915 = vmatprep.subr.mxu0 0.0
        %1916 = vmatpush1.xpose.msra.mxu0 0.0
        %1917 = vmatprep.subr.mxu0 0.0
        %1918 = vmatpush1.xpose.msra.mxu0 0.0
        %1919 = vmatprep.subr.mxu0 0.0
        %1920 = vmatpush1.xpose.msra.mxu0 0.0
        %1921 = vmatprep.mubr.f32.mxu0 0.0
        %1922 = vmatmul.mubr.f32.gmra.mrb[0].mxu0 %v1853
        %v1923 = vpop.f32.mrb[0].mxu0
        %v1924 = vadd.f32 0.0, %v1923
        %v1925 = vpop.f32.mrb[0].mxu0
        %1926 = vdwg.mxu0
        %1927 = vrot.lane.b32.xlu0 %v837, 96
        %v1928 = vpop.permute.xlu0 %1927
        %1929 = vrot.lane.b32.xlu0 %v837, 32
        %v1930 = vpop.permute.xlu0 %1929
        %v1931 = vsel %vm850, %v1928, 0
        %v1933 = vsel %vm850, %v1930, 0
        %1935 = vmatprep.subr.mxu0 0.0
        %1936 = vmatpush1.xpose.msra.mxu0 %v1933
        %1937 = vmatprep.subr.mxu0 0.0
        %1938 = vmatpush1.xpose.msra.mxu0 0.0
        %1939 = vmatprep.subr.mxu0 0.0
        %1940 = vmatpush1.xpose.msra.mxu0 0.0
        %1941 = vmatprep.subr.mxu0 0.0
        %1942 = vmatpush1.xpose.msra.mxu0 0.0
        %1943 = vmatprep.subr.mxu0 0.0
        %1944 = vmatpush1.xpose.msra.mxu0 0.0
        %1945 = vmatprep.subr.mxu0 0.0
        %1946 = vmatpush1.xpose.msra.mxu0 0.0
        %1947 = vmatprep.subr.mxu0 0.0
        %1948 = vmatpush1.xpose.msra.mxu0 0.0
        %1949 = vmatprep.subr.mxu0 0.0
        %1950 = vmatpush1.xpose.msra.mxu0 0.0
        %1951 = vmatprep.subr.mxu0 0.0
        %1952 = vmatpush1.xpose.msra.mxu0 0.0
        %1953 = vmatprep.subr.mxu0 0.0
        %1954 = vmatpush1.xpose.msra.mxu0 0.0
        %1955 = vmatprep.subr.mxu0 0.0
        %1956 = vmatpush1.xpose.msra.mxu0 0.0
        %1957 = vmatprep.subr.mxu0 0.0
        %1958 = vmatpush1.xpose.msra.mxu0 0.0
        %1959 = vmatprep.subr.mxu0 0.0
        %1960 = vmatpush1.xpose.msra.mxu0 0.0
        %1961 = vmatprep.subr.mxu0 0.0
        %1962 = vmatpush1.xpose.msra.mxu0 0.0
        %1963 = vmatprep.subr.mxu0 0.0
        %1964 = vmatpush1.xpose.msra.mxu0 0.0
        %1965 = vmatprep.subr.mxu0 0.0
        %1966 = vmatpush1.xpose.msra.mxu0 0.0
        %1967 = vmatprep.subr.mxu0 0.0
        %1968 = vmatpush1.xpose.msra.mxu0 0.0
        %1969 = vmatprep.subr.mxu0 0.0
        %1970 = vmatpush1.xpose.msra.mxu0 0.0
        %1971 = vmatprep.subr.mxu0 0.0
        %1972 = vmatpush1.xpose.msra.mxu0 0.0
        %1973 = vmatprep.subr.mxu0 0.0
        %1974 = vmatpush1.xpose.msra.mxu0 0.0
        %1975 = vmatprep.subr.mxu0 0.0
        %1976 = vmatpush1.xpose.msra.mxu0 0.0
        %1977 = vmatprep.subr.mxu0 0.0
        %1978 = vmatpush1.xpose.msra.mxu0 0.0
        %1979 = vmatprep.subr.mxu0 0.0
        %1980 = vmatpush1.xpose.msra.mxu0 0.0
        %1981 = vmatprep.subr.mxu0 0.0
        %1982 = vmatpush1.xpose.msra.mxu0 0.0
        %1983 = vmatprep.subr.mxu0 0.0
        %1984 = vmatpush1.xpose.msra.mxu0 0.0
        %1985 = vmatprep.subr.mxu0 0.0
        %1986 = vmatpush1.xpose.msra.mxu0 0.0
        %1987 = vmatprep.subr.mxu0 0.0
        %1988 = vmatpush1.xpose.msra.mxu0 0.0
        %1989 = vmatprep.subr.mxu0 0.0
        %1990 = vmatpush1.xpose.msra.mxu0 0.0
        %1991 = vmatprep.subr.mxu0 0.0
        %1992 = vmatpush1.xpose.msra.mxu0 0.0
        %1993 = vmatprep.subr.mxu0 0.0
        %1994 = vmatpush1.xpose.msra.mxu0 0.0
        %1995 = vmatprep.subr.mxu0 0.0
        %1996 = vmatpush1.xpose.msra.mxu0 0.0
        %1997 = vmatprep.subr.mxu0 0.0
        %1998 = vmatpush1.xpose.msra.mxu0 0.0
        %1999 = vmatprep.mubr.f32.mxu0 0.0
        %2000 = vmatmul.mubr.f32.gmra.mrb[0].mxu0 %v1931
        %v2001 = vpop.f32.mrb[0].mxu0
        %v2002 = vadd.f32 0.0, %v2001
        %v2003 = vpop.f32.mrb[0].mxu0
        %2004 = vdwg.mxu0
        %2005 = vrot.lane.b32.xlu0 %v843, 96
        %v2006 = vpop.permute.xlu0 %2005
        %2007 = vrot.lane.b32.xlu0 %v843, 32
        %v2008 = vpop.permute.xlu0 %2007
        %v2009 = vsel %vm850, %v2006, 0
        %v2011 = vsel %vm850, %v2008, 0
        %2013 = vmatprep.subr.mxu0 0.0
        %2014 = vmatpush1.xpose.msra.mxu0 %v2011
        %2015 = vmatprep.subr.mxu0 0.0
        %2016 = vmatpush1.xpose.msra.mxu0 0.0
        %2017 = vmatprep.subr.mxu0 0.0
        %2018 = vmatpush1.xpose.msra.mxu0 0.0
        %2019 = vmatprep.subr.mxu0 0.0
        %2020 = vmatpush1.xpose.msra.mxu0 0.0
        %2021 = vmatprep.subr.mxu0 0.0
        %2022 = vmatpush1.xpose.msra.mxu0 0.0
        %2023 = vmatprep.subr.mxu0 0.0
        %2024 = vmatpush1.xpose.msra.mxu0 0.0
        %2025 = vmatprep.subr.mxu0 0.0
        %2026 = vmatpush1.xpose.msra.mxu0 0.0
        %2027 = vmatprep.subr.mxu0 0.0
        %2028 = vmatpush1.xpose.msra.mxu0 0.0
        %2029 = vmatprep.subr.mxu0 0.0
        %2030 = vmatpush1.xpose.msra.mxu0 0.0
        %2031 = vmatprep.subr.mxu0 0.0
        %2032 = vmatpush1.xpose.msra.mxu0 0.0
        %2033 = vmatprep.subr.mxu0 0.0
        %2034 = vmatpush1.xpose.msra.mxu0 0.0
        %2035 = vmatprep.subr.mxu0 0.0
        %2036 = vmatpush1.xpose.msra.mxu0 0.0
        %2037 = vmatprep.subr.mxu0 0.0
        %2038 = vmatpush1.xpose.msra.mxu0 0.0
        %2039 = vmatprep.subr.mxu0 0.0
        %2040 = vmatpush1.xpose.msra.mxu0 0.0
        %2041 = vmatprep.subr.mxu0 0.0
        %2042 = vmatpush1.xpose.msra.mxu0 0.0
        %2043 = vmatprep.subr.mxu0 0.0
        %2044 = vmatpush1.xpose.msra.mxu0 0.0
        %2045 = vmatprep.subr.mxu0 0.0
        %2046 = vmatpush1.xpose.msra.mxu0 0.0
        %2047 = vmatprep.subr.mxu0 0.0
        %2048 = vmatpush1.xpose.msra.mxu0 0.0
        %2049 = vmatprep.subr.mxu0 0.0
        %2050 = vmatpush1.xpose.msra.mxu0 0.0
        %2051 = vmatprep.subr.mxu0 0.0
        %2052 = vmatpush1.xpose.msra.mxu0 0.0
        %2053 = vmatprep.subr.mxu0 0.0
        %2054 = vmatpush1.xpose.msra.mxu0 0.0
        %2055 = vmatprep.subr.mxu0 0.0
        %2056 = vmatpush1.xpose.msra.mxu0 0.0
        %2057 = vmatprep.subr.mxu0 0.0
        %2058 = vmatpush1.xpose.msra.mxu0 0.0
        %2059 = vmatprep.subr.mxu0 0.0
        %2060 = vmatpush1.xpose.msra.mxu0 0.0
        %2061 = vmatprep.subr.mxu0 0.0
        %2062 = vmatpush1.xpose.msra.mxu0 0.0
        %2063 = vmatprep.subr.mxu0 0.0
        %2064 = vmatpush1.xpose.msra.mxu0 0.0
        %2065 = vmatprep.subr.mxu0 0.0
        %2066 = vmatpush1.xpose.msra.mxu0 0.0
        %2067 = vmatprep.subr.mxu0 0.0
        %2068 = vmatpush1.xpose.msra.mxu0 0.0
        %2069 = vmatprep.subr.mxu0 0.0
        %2070 = vmatpush1.xpose.msra.mxu0 0.0
        %2071 = vmatprep.subr.mxu0 0.0
        %2072 = vmatpush1.xpose.msra.mxu0 0.0
        %2073 = vmatprep.subr.mxu0 0.0
        %2074 = vmatpush1.xpose.msra.mxu0 0.0
        %2075 = vmatprep.subr.mxu0 0.0
        %2076 = vmatpush1.xpose.msra.mxu0 0.0
        %2077 = vmatprep.mubr.f32.mxu0 0.0
        %2078 = vmatmul.mubr.f32.gmra.mrb[0].mxu0 %v2009
        %v2079 = vpop.f32.mrb[0].mxu0
        %v2080 = vadd.f32 0.0, %v2079
        %v2081 = vpop.f32.mrb[0].mxu0
        %2082 = vdwg.mxu0
        %v2083 = vsel %vm1079, %v1924, -inf
        %2084 = vmax.xlane.f32.xlu0 %v2083
        %v2085 = vpop.xlane.xlu0 %2084
        %v2086 = vsel %vm1079, %v2002, -inf
        %2087 = vmax.xlane.f32.xlu0 %v2086
        %v2088 = vpop.xlane.xlu0 %2087
        %v2089 = vsel %vm1079, %v2080, -inf
        %2090 = vmax.xlane.f32.xlu0 %v2089
        %v2091 = vpop.xlane.xlu0 %2090
        %v2092 = vsub.f32 %v1924, %v2085
        %v2093 = vsub.f32 %v2002, %v2088
        %v2094 = vsub.f32 %v2080, %v2091
        %v2095 = vmul.f32 %v2092, 1.442695
        %v2096 = vpow.pop %v2095
        %v2097 = vmul.f32 %v2093, 1.442695
        %v2098 = vpow.pop %v2097
        %v2099 = vmul.f32 %v2094, 1.442695
        %v2100 = vpow.pop %v2099
        %v2101 = vsel %vm1079, %v2096, 0.0
        %2102 = vadd.xlane.f32.xlu0 %v2101
        %v2103 = vpop.xlane.xlu0 %2102
        %v2104 = vsel %vm1079, %v2098, 0.0
        %2105 = vadd.xlane.f32.xlu0 %v2104
        %v2106 = vpop.xlane.xlu0 %2105
        %v2107 = vsel %vm1079, %v2100, 0.0
        %2108 = vadd.xlane.f32.xlu0 %v2107
        %v2109 = vpop.xlane.xlu0 %2108
        %v2110 = vrcp.pop %v2103
        %v2111 = vrcp.pop %v2106
        %v2112 = vrcp.pop %v2109
        %v2113 = vmul.f32 %v2096, %v2110
        %v2114 = vmul.f32 %v2098, %v2111
        %v2115 = vmul.f32 %v2100, %v2112
        %2116 = vrot.lane.b32.xlu0 %v833, 96
        %v2117 = vpop.permute.xlu0 %2116
        %v2120 = vsel %vm1079, %v2113, 0
        %2122 = vmatprep.subr.mxu0 0.0
        %2123 = vmatpush1.msra.mxu0 %v2117
        %2124 = vmatprep.subr.mxu0 0.0
        %2125 = vmatpush1.msra.mxu0 0.0
        %2126 = vmatprep.subr.mxu0 0.0
        %2127 = vmatpush1.msra.mxu0 0.0
        %2128 = vmatprep.subr.mxu0 0.0
        %2129 = vmatpush1.msra.mxu0 0.0
        %2130 = vmatprep.subr.mxu0 0.0
        %2131 = vmatpush1.msra.mxu0 0.0
        %2132 = vmatprep.subr.mxu0 0.0
        %2133 = vmatpush1.msra.mxu0 0.0
        %2134 = vmatprep.subr.mxu0 0.0
        %2135 = vmatpush1.msra.mxu0 0.0
        %2136 = vmatprep.subr.mxu0 0.0
        %2137 = vmatpush1.msra.mxu0 0.0
        %2138 = vmatprep.subr.mxu0 0.0
        %2139 = vmatpush1.msra.mxu0 0.0
        %2140 = vmatprep.subr.mxu0 0.0
        %2141 = vmatpush1.msra.mxu0 0.0
        %2142 = vmatprep.subr.mxu0 0.0
        %2143 = vmatpush1.msra.mxu0 0.0
        %2144 = vmatprep.subr.mxu0 0.0
        %2145 = vmatpush1.msra.mxu0 0.0
        %2146 = vmatprep.subr.mxu0 0.0
        %2147 = vmatpush1.msra.mxu0 0.0
        %2148 = vmatprep.subr.mxu0 0.0
        %2149 = vmatpush1.msra.mxu0 0.0
        %2150 = vmatprep.subr.mxu0 0.0
        %2151 = vmatpush1.msra.mxu0 0.0
        %2152 = vmatprep.subr.mxu0 0.0
        %2153 = vmatpush1.msra.mxu0 0.0
        %2154 = vmatprep.subr.mxu0 0.0
        %2155 = vmatpush1.msra.mxu0 0.0
        %2156 = vmatprep.subr.mxu0 0.0
        %2157 = vmatpush1.msra.mxu0 0.0
        %2158 = vmatprep.subr.mxu0 0.0
        %2159 = vmatpush1.msra.mxu0 0.0
        %2160 = vmatprep.subr.mxu0 0.0
        %2161 = vmatpush1.msra.mxu0 0.0
        %2162 = vmatprep.subr.mxu0 0.0
        %2163 = vmatpush1.msra.mxu0 0.0
        %2164 = vmatprep.subr.mxu0 0.0
        %2165 = vmatpush1.msra.mxu0 0.0
        %2166 = vmatprep.subr.mxu0 0.0
        %2167 = vmatpush1.msra.mxu0 0.0
        %2168 = vmatprep.subr.mxu0 0.0
        %2169 = vmatpush1.msra.mxu0 0.0
        %2170 = vmatprep.subr.mxu0 0.0
        %2171 = vmatpush1.msra.mxu0 0.0
        %2172 = vmatprep.subr.mxu0 0.0
        %2173 = vmatpush1.msra.mxu0 0.0
        %2174 = vmatprep.subr.mxu0 0.0
        %2175 = vmatpush1.msra.mxu0 0.0
        %2176 = vmatprep.subr.mxu0 0.0
        %2177 = vmatpush1.msra.mxu0 0.0
        %2178 = vmatprep.subr.mxu0 0.0
        %2179 = vmatpush1.msra.mxu0 0.0
        %2180 = vmatprep.subr.mxu0 0.0
        %2181 = vmatpush1.msra.mxu0 0.0
        %2182 = vmatprep.subr.mxu0 0.0
        %2183 = vmatpush1.msra.mxu0 0.0
        %2184 = vmatprep.subr.mxu0 0.0
        %2185 = vmatpush1.msra.mxu0 0.0
        %2186 = vmatprep.mubr.f32.mxu0 0.0
        %2187 = vmatmul.mubr.f32.gmra.mrb[0].mxu0 %v2120
        %v2188 = vpop.f32.mrb[0].mxu0
        %v2189 = vadd.f32 0.0, %v2188
        %v2190 = vpop.f32.mrb[0].mxu0
        %2191 = vdwg.mxu0
        %2192 = vrot.lane.b32.xlu0 %v839, 96
        %v2193 = vpop.permute.xlu0 %2192
        %v2196 = vsel %vm1079, %v2114, 0
        %2198 = vmatprep.subr.mxu0 0.0
        %2199 = vmatpush1.msra.mxu0 %v2193
        %2200 = vmatprep.subr.mxu0 0.0
        %2201 = vmatpush1.msra.mxu0 0.0
        %2202 = vmatprep.subr.mxu0 0.0
        %2203 = vmatpush1.msra.mxu0 0.0
        %2204 = vmatprep.subr.mxu0 0.0
        %2205 = vmatpush1.msra.mxu0 0.0
        %2206 = vmatprep.subr.mxu0 0.0
        %2207 = vmatpush1.msra.mxu0 0.0
        %2208 = vmatprep.subr.mxu0 0.0
        %2209 = vmatpush1.msra.mxu0 0.0
        %2210 = vmatprep.subr.mxu0 0.0
        %2211 = vmatpush1.msra.mxu0 0.0
        %2212 = vmatprep.subr.mxu0 0.0
        %2213 = vmatpush1.msra.mxu0 0.0
        %2214 = vmatprep.subr.mxu0 0.0
        %2215 = vmatpush1.msra.mxu0 0.0
        %2216 = vmatprep.subr.mxu0 0.0
        %2217 = vmatpush1.msra.mxu0 0.0
        %2218 = vmatprep.subr.mxu0 0.0
        %2219 = vmatpush1.msra.mxu0 0.0
        %2220 = vmatprep.subr.mxu0 0.0
        %2221 = vmatpush1.msra.mxu0 0.0
        %2222 = vmatprep.subr.mxu0 0.0
        %2223 = vmatpush1.msra.mxu0 0.0
        %2224 = vmatprep.subr.mxu0 0.0
        %2225 = vmatpush1.msra.mxu0 0.0
        %2226 = vmatprep.subr.mxu0 0.0
        %2227 = vmatpush1.msra.mxu0 0.0
        %2228 = vmatprep.subr.mxu0 0.0
        %2229 = vmatpush1.msra.mxu0 0.0
        %2230 = vmatprep.subr.mxu0 0.0
        %2231 = vmatpush1.msra.mxu0 0.0
        %2232 = vmatprep.subr.mxu0 0.0
        %2233 = vmatpush1.msra.mxu0 0.0
        %2234 = vmatprep.subr.mxu0 0.0
        %2235 = vmatpush1.msra.mxu0 0.0
        %2236 = vmatprep.subr.mxu0 0.0
        %2237 = vmatpush1.msra.mxu0 0.0
        %2238 = vmatprep.subr.mxu0 0.0
        %2239 = vmatpush1.msra.mxu0 0.0
        %2240 = vmatprep.subr.mxu0 0.0
        %2241 = vmatpush1.msra.mxu0 0.0
        %2242 = vmatprep.subr.mxu0 0.0
        %2243 = vmatpush1.msra.mxu0 0.0
        %2244 = vmatprep.subr.mxu0 0.0
        %2245 = vmatpush1.msra.mxu0 0.0
        %2246 = vmatprep.subr.mxu0 0.0
        %2247 = vmatpush1.msra.mxu0 0.0
        %2248 = vmatprep.subr.mxu0 0.0
        %2249 = vmatpush1.msra.mxu0 0.0
        %2250 = vmatprep.subr.mxu0 0.0
        %2251 = vmatpush1.msra.mxu0 0.0
        %2252 = vmatprep.subr.mxu0 0.0
        %2253 = vmatpush1.msra.mxu0 0.0
        %2254 = vmatprep.subr.mxu0 0.0
        %2255 = vmatpush1.msra.mxu0 0.0
        %2256 = vmatprep.subr.mxu0 0.0
        %2257 = vmatpush1.msra.mxu0 0.0
        %2258 = vmatprep.subr.mxu0 0.0
        %2259 = vmatpush1.msra.mxu0 0.0
        %2260 = vmatprep.subr.mxu0 0.0
        %2261 = vmatpush1.msra.mxu0 0.0
        %2262 = vmatprep.mubr.f32.mxu0 0.0
        %2263 = vmatmul.mubr.f32.gmra.mrb[0].mxu0 %v2196
        %v2264 = vpop.f32.mrb[0].mxu0
        %v2265 = vadd.f32 0.0, %v2264
        %v2266 = vpop.f32.mrb[0].mxu0
        %2267 = vdwg.mxu0
        %2268 = vrot.lane.b32.xlu0 %v845, 96
        %v2269 = vpop.permute.xlu0 %2268
        %v2272 = vsel %vm1079, %v2115, 0
        %2274 = vmatprep.subr.mxu0 0.0
        %2275 = vmatpush1.msra.mxu0 %v2269
        %2276 = vmatprep.subr.mxu0 0.0
        %2277 = vmatpush1.msra.mxu0 0.0
        %2278 = vmatprep.subr.mxu0 0.0
        %2279 = vmatpush1.msra.mxu0 0.0
        %2280 = vmatprep.subr.mxu0 0.0
        %2281 = vmatpush1.msra.mxu0 0.0
        %2282 = vmatprep.subr.mxu0 0.0
        %2283 = vmatpush1.msra.mxu0 0.0
        %2284 = vmatprep.subr.mxu0 0.0
        %2285 = vmatpush1.msra.mxu0 0.0
        %2286 = vmatprep.subr.mxu0 0.0
        %2287 = vmatpush1.msra.mxu0 0.0
        %2288 = vmatprep.subr.mxu0 0.0
        %2289 = vmatpush1.msra.mxu0 0.0
        %2290 = vmatprep.subr.mxu0 0.0
        %2291 = vmatpush1.msra.mxu0 0.0
        %2292 = vmatprep.subr.mxu0 0.0
        %2293 = vmatpush1.msra.mxu0 0.0
        %2294 = vmatprep.subr.mxu0 0.0
        %2295 = vmatpush1.msra.mxu0 0.0
        %2296 = vmatprep.subr.mxu0 0.0
        %2297 = vmatpush1.msra.mxu0 0.0
        %2298 = vmatprep.subr.mxu0 0.0
        %2299 = vmatpush1.msra.mxu0 0.0
        %2300 = vmatprep.subr.mxu0 0.0
        %2301 = vmatpush1.msra.mxu0 0.0
        %2302 = vmatprep.subr.mxu0 0.0
        %2303 = vmatpush1.msra.mxu0 0.0
        %2304 = vmatprep.subr.mxu0 0.0
        %2305 = vmatpush1.msra.mxu0 0.0
        %2306 = vmatprep.subr.mxu0 0.0
        %2307 = vmatpush1.msra.mxu0 0.0
        %2308 = vmatprep.subr.mxu0 0.0
        %2309 = vmatpush1.msra.mxu0 0.0
        %2310 = vmatprep.subr.mxu0 0.0
        %2311 = vmatpush1.msra.mxu0 0.0
        %2312 = vmatprep.subr.mxu0 0.0
        %2313 = vmatpush1.msra.mxu0 0.0
        %2314 = vmatprep.subr.mxu0 0.0
        %2315 = vmatpush1.msra.mxu0 0.0
        %2316 = vmatprep.subr.mxu0 0.0
        %2317 = vmatpush1.msra.mxu0 0.0
        %2318 = vmatprep.subr.mxu0 0.0
        %2319 = vmatpush1.msra.mxu0 0.0
        %2320 = vmatprep.subr.mxu0 0.0
        %2321 = vmatpush1.msra.mxu0 0.0
        %2322 = vmatprep.subr.mxu0 0.0
        %2323 = vmatpush1.msra.mxu0 0.0
        %2324 = vmatprep.subr.mxu0 0.0
        %2325 = vmatpush1.msra.mxu0 0.0
        %2326 = vmatprep.subr.mxu0 0.0
        %2327 = vmatpush1.msra.mxu0 0.0
        %2328 = vmatprep.subr.mxu0 0.0
        %2329 = vmatpush1.msra.mxu0 0.0
        %2330 = vmatprep.subr.mxu0 0.0
        %2331 = vmatpush1.msra.mxu0 0.0
        %2332 = vmatprep.subr.mxu0 0.0
        %2333 = vmatpush1.msra.mxu0 0.0
        %2334 = vmatprep.subr.mxu0 0.0
        %2335 = vmatpush1.msra.mxu0 0.0
        %2336 = vmatprep.subr.mxu0 0.0
        %2337 = vmatpush1.msra.mxu0 0.0
        %2338 = vmatprep.mubr.f32.mxu0 0.0
        %2339 = vmatmul.mubr.f32.gmra.mrb[0].mxu0 %v2272
        %v2340 = vpop.f32.mrb[0].mxu0
        %v2341 = vadd.f32 0.0, %v2340
        %v2342 = vpop.f32.mrb[0].mxu0
        %2343 = vdwg.mxu0
        %2347 = vrot.lane.b32.xlu0 %v2189, 32
        %v2348 = vpop.permute.xlu0 %2347
        %2349 = vrot.lane.b32.xlu0 %v2265, 32
        %v2350 = vpop.permute.xlu0 %2349
        %2351 = vrot.lane.b32.xlu0 %v2341, 32
        %v2352 = vpop.permute.xlu0 %2351
        %vm2356 = vcmask 392448
        %2357 = vst.msk [vmem:[#allocation3] sm:$0xff] %vm2356, %v2348
        %2358 = vst.msk [vmem:[#allocation3 + $0x8] sm:$0xff] %vm2356, %v2350
        %2359 = vst.msk [vmem:[#allocation3 + $0x10] sm:$0xff] %vm2356, %v2352
        %2360 = vrot.lane.b32.xlu0 %v831, 80
        %v2361 = vpop.permute.xlu0 %2360
        %2362 = vrot.lane.b32.xlu0 %v831, 16
        %v2363 = vpop.permute.xlu0 %2362
        %v2364 = vsel %vm850, %v2361, 0
        %v2366 = vsel %vm850, %v2363, 0
        %2368 = vmatprep.subr.mxu0 0.0
        %2369 = vmatpush1.xpose.msra.mxu0 %v2366
        %2370 = vmatprep.subr.mxu0 0.0
        %2371 = vmatpush1.xpose.msra.mxu0 0.0
        %2372 = vmatprep.subr.mxu0 0.0
        %2373 = vmatpush1.xpose.msra.mxu0 0.0
        %2374 = vmatprep.subr.mxu0 0.0
        %2375 = vmatpush1.xpose.msra.mxu0 0.0
        %2376 = vmatprep.subr.mxu0 0.0
        %2377 = vmatpush1.xpose.msra.mxu0 0.0
        %2378 = vmatprep.subr.mxu0 0.0
        %2379 = vmatpush1.xpose.msra.mxu0 0.0
        %2380 = vmatprep.subr.mxu0 0.0
        %2381 = vmatpush1.xpose.msra.mxu0 0.0
        %2382 = vmatprep.subr.mxu0 0.0
        %2383 = vmatpush1.xpose.msra.mxu0 0.0
        %2384 = vmatprep.subr.mxu0 0.0
        %2385 = vmatpush1.xpose.msra.mxu0 0.0
        %2386 = vmatprep.subr.mxu0 0.0
        %2387 = vmatpush1.xpose.msra.mxu0 0.0
        %2388 = vmatprep.subr.mxu0 0.0
        %2389 = vmatpush1.xpose.msra.mxu0 0.0
        %2390 = vmatprep.subr.mxu0 0.0
        %2391 = vmatpush1.xpose.msra.mxu0 0.0
        %2392 = vmatprep.subr.mxu0 0.0
        %2393 = vmatpush1.xpose.msra.mxu0 0.0
        %2394 = vmatprep.subr.mxu0 0.0
        %2395 = vmatpush1.xpose.msra.mxu0 0.0
        %2396 = vmatprep.subr.mxu0 0.0
        %2397 = vmatpush1.xpose.msra.mxu0 0.0
        %2398 = vmatprep.subr.mxu0 0.0
        %2399 = vmatpush1.xpose.msra.mxu0 0.0
        %2400 = vmatprep.subr.mxu0 0.0
        %2401 = vmatpush1.xpose.msra.mxu0 0.0
        %2402 = vmatprep.subr.mxu0 0.0
        %2403 = vmatpush1.xpose.msra.mxu0 0.0
        %2404 = vmatprep.subr.mxu0 0.0
        %2405 = vmatpush1.xpose.msra.mxu0 0.0
        %2406 = vmatprep.subr.mxu0 0.0
        %2407 = vmatpush1.xpose.msra.mxu0 0.0
        %2408 = vmatprep.subr.mxu0 0.0
        %2409 = vmatpush1.xpose.msra.mxu0 0.0
        %2410 = vmatprep.subr.mxu0 0.0
        %2411 = vmatpush1.xpose.msra.mxu0 0.0
        %2412 = vmatprep.subr.mxu0 0.0
        %2413 = vmatpush1.xpose.msra.mxu0 0.0
        %2414 = vmatprep.subr.mxu0 0.0
        %2415 = vmatpush1.xpose.msra.mxu0 0.0
        %2416 = vmatprep.subr.mxu0 0.0
        %2417 = vmatpush1.xpose.msra.mxu0 0.0
        %2418 = vmatprep.subr.mxu0 0.0
        %2419 = vmatpush1.xpose.msra.mxu0 0.0
        %2420 = vmatprep.subr.mxu0 0.0
        %2421 = vmatpush1.xpose.msra.mxu0 0.0
        %2422 = vmatprep.subr.mxu0 0.0
        %2423 = vmatpush1.xpose.msra.mxu0 0.0
        %2424 = vmatprep.subr.mxu0 0.0
        %2425 = vmatpush1.xpose.msra.mxu0 0.0
        %2426 = vmatprep.subr.mxu0 0.0
        %2427 = vmatpush1.xpose.msra.mxu0 0.0
        %2428 = vmatprep.subr.mxu0 0.0
        %2429 = vmatpush1.xpose.msra.mxu0 0.0
        %2430 = vmatprep.subr.mxu0 0.0
        %2431 = vmatpush1.xpose.msra.mxu0 0.0
        %2432 = vmatprep.mubr.f32.mxu0 0.0
        %2433 = vmatmul.mubr.f32.gmra.mrb[0].mxu0 %v2364
        %v2434 = vpop.f32.mrb[0].mxu0
        %v2435 = vadd.f32 0.0, %v2434
        %v2436 = vpop.f32.mrb[0].mxu0
        %2437 = vdwg.mxu0
        %2438 = vrot.lane.b32.xlu0 %v837, 80
        %v2439 = vpop.permute.xlu0 %2438
        %2440 = vrot.lane.b32.xlu0 %v837, 16
        %v2441 = vpop.permute.xlu0 %2440
        %v2442 = vsel %vm850, %v2439, 0
        %v2444 = vsel %vm850, %v2441, 0
        %2446 = vmatprep.subr.mxu0 0.0
        %2447 = vmatpush1.xpose.msra.mxu0 %v2444
        %2448 = vmatprep.subr.mxu0 0.0
        %2449 = vmatpush1.xpose.msra.mxu0 0.0
        %2450 = vmatprep.subr.mxu0 0.0
        %2451 = vmatpush1.xpose.msra.mxu0 0.0
        %2452 = vmatprep.subr.mxu0 0.0
        %2453 = vmatpush1.xpose.msra.mxu0 0.0
        %2454 = vmatprep.subr.mxu0 0.0
        %2455 = vmatpush1.xpose.msra.mxu0 0.0
        %2456 = vmatprep.subr.mxu0 0.0
        %2457 = vmatpush1.xpose.msra.mxu0 0.0
        %2458 = vmatprep.subr.mxu0 0.0
        %2459 = vmatpush1.xpose.msra.mxu0 0.0
        %2460 = vmatprep.subr.mxu0 0.0
        %2461 = vmatpush1.xpose.msra.mxu0 0.0
        %2462 = vmatprep.subr.mxu0 0.0
        %2463 = vmatpush1.xpose.msra.mxu0 0.0
        %2464 = vmatprep.subr.mxu0 0.0
        %2465 = vmatpush1.xpose.msra.mxu0 0.0
        %2466 = vmatprep.subr.mxu0 0.0
        %2467 = vmatpush1.xpose.msra.mxu0 0.0
        %2468 = vmatprep.subr.mxu0 0.0
        %2469 = vmatpush1.xpose.msra.mxu0 0.0
        %2470 = vmatprep.subr.mxu0 0.0
        %2471 = vmatpush1.xpose.msra.mxu0 0.0
        %2472 = vmatprep.subr.mxu0 0.0
        %2473 = vmatpush1.xpose.msra.mxu0 0.0
        %2474 = vmatprep.subr.mxu0 0.0
        %2475 = vmatpush1.xpose.msra.mxu0 0.0
        %2476 = vmatprep.subr.mxu0 0.0
        %2477 = vmatpush1.xpose.msra.mxu0 0.0
        %2478 = vmatprep.subr.mxu0 0.0
        %2479 = vmatpush1.xpose.msra.mxu0 0.0
        %2480 = vmatprep.subr.mxu0 0.0
        %2481 = vmatpush1.xpose.msra.mxu0 0.0
        %2482 = vmatprep.subr.mxu0 0.0
        %2483 = vmatpush1.xpose.msra.mxu0 0.0
        %2484 = vmatprep.subr.mxu0 0.0
        %2485 = vmatpush1.xpose.msra.mxu0 0.0
        %2486 = vmatprep.subr.mxu0 0.0
        %2487 = vmatpush1.xpose.msra.mxu0 0.0
        %2488 = vmatprep.subr.mxu0 0.0
        %2489 = vmatpush1.xpose.msra.mxu0 0.0
        %2490 = vmatprep.subr.mxu0 0.0
        %2491 = vmatpush1.xpose.msra.mxu0 0.0
        %2492 = vmatprep.subr.mxu0 0.0
        %2493 = vmatpush1.xpose.msra.mxu0 0.0
        %2494 = vmatprep.subr.mxu0 0.0
        %2495 = vmatpush1.xpose.msra.mxu0 0.0
        %2496 = vmatprep.subr.mxu0 0.0
        %2497 = vmatpush1.xpose.msra.mxu0 0.0
        %2498 = vmatprep.subr.mxu0 0.0
        %2499 = vmatpush1.xpose.msra.mxu0 0.0
        %2500 = vmatprep.subr.mxu0 0.0
        %2501 = vmatpush1.xpose.msra.mxu0 0.0
        %2502 = vmatprep.subr.mxu0 0.0
        %2503 = vmatpush1.xpose.msra.mxu0 0.0
        %2504 = vmatprep.subr.mxu0 0.0
        %2505 = vmatpush1.xpose.msra.mxu0 0.0
        %2506 = vmatprep.subr.mxu0 0.0
        %2507 = vmatpush1.xpose.msra.mxu0 0.0
        %2508 = vmatprep.subr.mxu0 0.0
        %2509 = vmatpush1.xpose.msra.mxu0 0.0
        %2510 = vmatprep.mubr.f32.mxu0 0.0
        %2511 = vmatmul.mubr.f32.gmra.mrb[0].mxu0 %v2442
        %v2512 = vpop.f32.mrb[0].mxu0
        %v2513 = vadd.f32 0.0, %v2512
        %v2514 = vpop.f32.mrb[0].mxu0
        %2515 = vdwg.mxu0
        %2516 = vrot.lane.b32.xlu0 %v843, 80
        %v2517 = vpop.permute.xlu0 %2516
        %2518 = vrot.lane.b32.xlu0 %v843, 16
        %v2519 = vpop.permute.xlu0 %2518
        %v2520 = vsel %vm850, %v2517, 0
        %v2522 = vsel %vm850, %v2519, 0
        %2524 = vmatprep.subr.mxu0 0.0
        %2525 = vmatpush1.xpose.msra.mxu0 %v2522
        %2526 = vmatprep.subr.mxu0 0.0
        %2527 = vmatpush1.xpose.msra.mxu0 0.0
        %2528 = vmatprep.subr.mxu0 0.0
        %2529 = vmatpush1.xpose.msra.mxu0 0.0
        %2530 = vmatprep.subr.mxu0 0.0
        %2531 = vmatpush1.xpose.msra.mxu0 0.0
        %2532 = vmatprep.subr.mxu0 0.0
        %2533 = vmatpush1.xpose.msra.mxu0 0.0
        %2534 = vmatprep.subr.mxu0 0.0
        %2535 = vmatpush1.xpose.msra.mxu0 0.0
        %2536 = vmatprep.subr.mxu0 0.0
        %2537 = vmatpush1.xpose.msra.mxu0 0.0
        %2538 = vmatprep.subr.mxu0 0.0
        %2539 = vmatpush1.xpose.msra.mxu0 0.0
        %2540 = vmatprep.subr.mxu0 0.0
        %2541 = vmatpush1.xpose.msra.mxu0 0.0
        %2542 = vmatprep.subr.mxu0 0.0
        %2543 = vmatpush1.xpose.msra.mxu0 0.0
        %2544 = vmatprep.subr.mxu0 0.0
        %2545 = vmatpush1.xpose.msra.mxu0 0.0
        %2546 = vmatprep.subr.mxu0 0.0
        %2547 = vmatpush1.xpose.msra.mxu0 0.0
        %2548 = vmatprep.subr.mxu0 0.0
        %2549 = vmatpush1.xpose.msra.mxu0 0.0
        %2550 = vmatprep.subr.mxu0 0.0
        %2551 = vmatpush1.xpose.msra.mxu0 0.0
        %2552 = vmatprep.subr.mxu0 0.0
        %2553 = vmatpush1.xpose.msra.mxu0 0.0
        %2554 = vmatprep.subr.mxu0 0.0
        %2555 = vmatpush1.xpose.msra.mxu0 0.0
        %2556 = vmatprep.subr.mxu0 0.0
        %2557 = vmatpush1.xpose.msra.mxu0 0.0
        %2558 = vmatprep.subr.mxu0 0.0
        %2559 = vmatpush1.xpose.msra.mxu0 0.0
        %2560 = vmatprep.subr.mxu0 0.0
        %2561 = vmatpush1.xpose.msra.mxu0 0.0
        %2562 = vmatprep.subr.mxu0 0.0
        %2563 = vmatpush1.xpose.msra.mxu0 0.0
        %2564 = vmatprep.subr.mxu0 0.0
        %2565 = vmatpush1.xpose.msra.mxu0 0.0
        %2566 = vmatprep.subr.mxu0 0.0
        %2567 = vmatpush1.xpose.msra.mxu0 0.0
        %2568 = vmatprep.subr.mxu0 0.0
        %2569 = vmatpush1.xpose.msra.mxu0 0.0
        %2570 = vmatprep.subr.mxu0 0.0
        %2571 = vmatpush1.xpose.msra.mxu0 0.0
        %2572 = vmatprep.subr.mxu0 0.0
        %2573 = vmatpush1.xpose.msra.mxu0 0.0
        %2574 = vmatprep.subr.mxu0 0.0
        %2575 = vmatpush1.xpose.msra.mxu0 0.0
        %2576 = vmatprep.subr.mxu0 0.0
        %2577 = vmatpush1.xpose.msra.mxu0 0.0
        %2578 = vmatprep.subr.mxu0 0.0
        %2579 = vmatpush1.xpose.msra.mxu0 0.0
        %2580 = vmatprep.subr.mxu0 0.0
        %2581 = vmatpush1.xpose.msra.mxu0 0.0
        %2582 = vmatprep.subr.mxu0 0.0
        %2583 = vmatpush1.xpose.msra.mxu0 0.0
        %2584 = vmatprep.subr.mxu0 0.0
        %2585 = vmatpush1.xpose.msra.mxu0 0.0
        %2586 = vmatprep.subr.mxu0 0.0
        %2587 = vmatpush1.xpose.msra.mxu0 0.0
        %2588 = vmatprep.mubr.f32.mxu0 0.0
        %2589 = vmatmul.mubr.f32.gmra.mrb[0].mxu0 %v2520
        %v2590 = vpop.f32.mrb[0].mxu0
        %v2591 = vadd.f32 0.0, %v2590
        %v2592 = vpop.f32.mrb[0].mxu0
        %2593 = vdwg.mxu0
        %v2594 = vsel %vm1079, %v2435, -inf
        %2595 = vmax.xlane.f32.xlu0 %v2594
        %v2596 = vpop.xlane.xlu0 %2595
        %v2597 = vsel %vm1079, %v2513, -inf
        %2598 = vmax.xlane.f32.xlu0 %v2597
        %v2599 = vpop.xlane.xlu0 %2598
        %v2600 = vsel %vm1079, %v2591, -inf
        %2601 = vmax.xlane.f32.xlu0 %v2600
        %v2602 = vpop.xlane.xlu0 %2601
        %v2603 = vsub.f32 %v2435, %v2596
        %v2604 = vsub.f32 %v2513, %v2599
        %v2605 = vsub.f32 %v2591, %v2602
        %v2606 = vmul.f32 %v2603, 1.442695
        %v2607 = vpow.pop %v2606
        %v2608 = vmul.f32 %v2604, 1.442695
        %v2609 = vpow.pop %v2608
        %v2610 = vmul.f32 %v2605, 1.442695
        %v2611 = vpow.pop %v2610
        %v2612 = vsel %vm1079, %v2607, 0.0
        %2613 = vadd.xlane.f32.xlu0 %v2612
        %v2614 = vpop.xlane.xlu0 %2613
        %v2615 = vsel %vm1079, %v2609, 0.0
        %2616 = vadd.xlane.f32.xlu0 %v2615
        %v2617 = vpop.xlane.xlu0 %2616
        %v2618 = vsel %vm1079, %v2611, 0.0
        %2619 = vadd.xlane.f32.xlu0 %v2618
        %v2620 = vpop.xlane.xlu0 %2619
        %v2621 = vrcp.pop %v2614
        %v2622 = vrcp.pop %v2617
        %v2623 = vrcp.pop %v2620
        %v2624 = vmul.f32 %v2607, %v2621
        %v2625 = vmul.f32 %v2609, %v2622
        %v2626 = vmul.f32 %v2611, %v2623
        %2627 = vrot.lane.b32.xlu0 %v833, 80
        %v2628 = vpop.permute.xlu0 %2627
        %v2631 = vsel %vm1079, %v2624, 0
        %2633 = vmatprep.subr.mxu0 0.0
        %2634 = vmatpush1.msra.mxu0 %v2628
        %2635 = vmatprep.subr.mxu0 0.0
        %2636 = vmatpush1.msra.mxu0 0.0
        %2637 = vmatprep.subr.mxu0 0.0
        %2638 = vmatpush1.msra.mxu0 0.0
        %2639 = vmatprep.subr.mxu0 0.0
        %2640 = vmatpush1.msra.mxu0 0.0
        %2641 = vmatprep.subr.mxu0 0.0
        %2642 = vmatpush1.msra.mxu0 0.0
        %2643 = vmatprep.subr.mxu0 0.0
        %2644 = vmatpush1.msra.mxu0 0.0
        %2645 = vmatprep.subr.mxu0 0.0
        %2646 = vmatpush1.msra.mxu0 0.0
        %2647 = vmatprep.subr.mxu0 0.0
        %2648 = vmatpush1.msra.mxu0 0.0
        %2649 = vmatprep.subr.mxu0 0.0
        %2650 = vmatpush1.msra.mxu0 0.0
        %2651 = vmatprep.subr.mxu0 0.0
        %2652 = vmatpush1.msra.mxu0 0.0
        %2653 = vmatprep.subr.mxu0 0.0
        %2654 = vmatpush1.msra.mxu0 0.0
        %2655 = vmatprep.subr.mxu0 0.0
        %2656 = vmatpush1.msra.mxu0 0.0
        %2657 = vmatprep.subr.mxu0 0.0
        %2658 = vmatpush1.msra.mxu0 0.0
        %2659 = vmatprep.subr.mxu0 0.0
        %2660 = vmatpush1.msra.mxu0 0.0
        %2661 = vmatprep.subr.mxu0 0.0
        %2662 = vmatpush1.msra.mxu0 0.0
        %2663 = vmatprep.subr.mxu0 0.0
        %2664 = vmatpush1.msra.mxu0 0.0
        %2665 = vmatprep.subr.mxu0 0.0
        %2666 = vmatpush1.msra.mxu0 0.0
        %2667 = vmatprep.subr.mxu0 0.0
        %2668 = vmatpush1.msra.mxu0 0.0
        %2669 = vmatprep.subr.mxu0 0.0
        %2670 = vmatpush1.msra.mxu0 0.0
        %2671 = vmatprep.subr.mxu0 0.0
        %2672 = vmatpush1.msra.mxu0 0.0
        %2673 = vmatprep.subr.mxu0 0.0
        %2674 = vmatpush1.msra.mxu0 0.0
        %2675 = vmatprep.subr.mxu0 0.0
        %2676 = vmatpush1.msra.mxu0 0.0
        %2677 = vmatprep.subr.mxu0 0.0
        %2678 = vmatpush1.msra.mxu0 0.0
        %2679 = vmatprep.subr.mxu0 0.0
        %2680 = vmatpush1.msra.mxu0 0.0
        %2681 = vmatprep.subr.mxu0 0.0
        %2682 = vmatpush1.msra.mxu0 0.0
        %2683 = vmatprep.subr.mxu0 0.0
        %2684 = vmatpush1.msra.mxu0 0.0
        %2685 = vmatprep.subr.mxu0 0.0
        %2686 = vmatpush1.msra.mxu0 0.0
        %2687 = vmatprep.subr.mxu0 0.0
        %2688 = vmatpush1.msra.mxu0 0.0
        %2689 = vmatprep.subr.mxu0 0.0
        %2690 = vmatpush1.msra.mxu0 0.0
        %2691 = vmatprep.subr.mxu0 0.0
        %2692 = vmatpush1.msra.mxu0 0.0
        %2693 = vmatprep.subr.mxu0 0.0
        %2694 = vmatpush1.msra.mxu0 0.0
        %2695 = vmatprep.subr.mxu0 0.0
        %2696 = vmatpush1.msra.mxu0 0.0
        %2697 = vmatprep.mubr.f32.mxu0 0.0
        %2698 = vmatmul.mubr.f32.gmra.mrb[0].mxu0 %v2631
        %v2699 = vpop.f32.mrb[0].mxu0
        %v2700 = vadd.f32 0.0, %v2699
        %v2701 = vpop.f32.mrb[0].mxu0
        %2702 = vdwg.mxu0
        %2703 = vrot.lane.b32.xlu0 %v839, 80
        %v2704 = vpop.permute.xlu0 %2703
        %v2707 = vsel %vm1079, %v2625, 0
        %2709 = vmatprep.subr.mxu0 0.0
        %2710 = vmatpush1.msra.mxu0 %v2704
        %2711 = vmatprep.subr.mxu0 0.0
        %2712 = vmatpush1.msra.mxu0 0.0
        %2713 = vmatprep.subr.mxu0 0.0
        %2714 = vmatpush1.msra.mxu0 0.0
        %2715 = vmatprep.subr.mxu0 0.0
        %2716 = vmatpush1.msra.mxu0 0.0
        %2717 = vmatprep.subr.mxu0 0.0
        %2718 = vmatpush1.msra.mxu0 0.0
        %2719 = vmatprep.subr.mxu0 0.0
        %2720 = vmatpush1.msra.mxu0 0.0
        %2721 = vmatprep.subr.mxu0 0.0
        %2722 = vmatpush1.msra.mxu0 0.0
        %2723 = vmatprep.subr.mxu0 0.0
        %2724 = vmatpush1.msra.mxu0 0.0
        %2725 = vmatprep.subr.mxu0 0.0
        %2726 = vmatpush1.msra.mxu0 0.0
        %2727 = vmatprep.subr.mxu0 0.0
        %2728 = vmatpush1.msra.mxu0 0.0
        %2729 = vmatprep.subr.mxu0 0.0
        %2730 = vmatpush1.msra.mxu0 0.0
        %2731 = vmatprep.subr.mxu0 0.0
        %2732 = vmatpush1.msra.mxu0 0.0
        %2733 = vmatprep.subr.mxu0 0.0
        %2734 = vmatpush1.msra.mxu0 0.0
        %2735 = vmatprep.subr.mxu0 0.0
        %2736 = vmatpush1.msra.mxu0 0.0
        %2737 = vmatprep.subr.mxu0 0.0
        %2738 = vmatpush1.msra.mxu0 0.0
        %2739 = vmatprep.subr.mxu0 0.0
        %2740 = vmatpush1.msra.mxu0 0.0
        %2741 = vmatprep.subr.mxu0 0.0
        %2742 = vmatpush1.msra.mxu0 0.0
        %2743 = vmatprep.subr.mxu0 0.0
        %2744 = vmatpush1.msra.mxu0 0.0
        %2745 = vmatprep.subr.mxu0 0.0
        %2746 = vmatpush1.msra.mxu0 0.0
        %2747 = vmatprep.subr.mxu0 0.0
        %2748 = vmatpush1.msra.mxu0 0.0
        %2749 = vmatprep.subr.mxu0 0.0
        %2750 = vmatpush1.msra.mxu0 0.0
        %2751 = vmatprep.subr.mxu0 0.0
        %2752 = vmatpush1.msra.mxu0 0.0
        %2753 = vmatprep.subr.mxu0 0.0
        %2754 = vmatpush1.msra.mxu0 0.0
        %2755 = vmatprep.subr.mxu0 0.0
        %2756 = vmatpush1.msra.mxu0 0.0
        %2757 = vmatprep.subr.mxu0 0.0
        %2758 = vmatpush1.msra.mxu0 0.0
        %2759 = vmatprep.subr.mxu0 0.0
        %2760 = vmatpush1.msra.mxu0 0.0
        %2761 = vmatprep.subr.mxu0 0.0
        %2762 = vmatpush1.msra.mxu0 0.0
        %2763 = vmatprep.subr.mxu0 0.0
        %2764 = vmatpush1.msra.mxu0 0.0
        %2765 = vmatprep.subr.mxu0 0.0
        %2766 = vmatpush1.msra.mxu0 0.0
        %2767 = vmatprep.subr.mxu0 0.0
        %2768 = vmatpush1.msra.mxu0 0.0
        %2769 = vmatprep.subr.mxu0 0.0
        %2770 = vmatpush1.msra.mxu0 0.0
        %2771 = vmatprep.subr.mxu0 0.0
        %2772 = vmatpush1.msra.mxu0 0.0
        %2773 = vmatprep.mubr.f32.mxu0 0.0
        %2774 = vmatmul.mubr.f32.gmra.mrb[0].mxu0 %v2707
        %v2775 = vpop.f32.mrb[0].mxu0
        %v2776 = vadd.f32 0.0, %v2775
        %v2777 = vpop.f32.mrb[0].mxu0
        %2778 = vdwg.mxu0
        %2779 = vrot.lane.b32.xlu0 %v845, 80
        %v2780 = vpop.permute.xlu0 %2779
        %v2783 = vsel %vm1079, %v2626, 0
        %2785 = vmatprep.subr.mxu0 0.0
        %2786 = vmatpush1.msra.mxu0 %v2780
        %2787 = vmatprep.subr.mxu0 0.0
        %2788 = vmatpush1.msra.mxu0 0.0
        %2789 = vmatprep.subr.mxu0 0.0
        %2790 = vmatpush1.msra.mxu0 0.0
        %2791 = vmatprep.subr.mxu0 0.0
        %2792 = vmatpush1.msra.mxu0 0.0
        %2793 = vmatprep.subr.mxu0 0.0
        %2794 = vmatpush1.msra.mxu0 0.0
        %2795 = vmatprep.subr.mxu0 0.0
        %2796 = vmatpush1.msra.mxu0 0.0
        %2797 = vmatprep.subr.mxu0 0.0
        %2798 = vmatpush1.msra.mxu0 0.0
        %2799 = vmatprep.subr.mxu0 0.0
        %2800 = vmatpush1.msra.mxu0 0.0
        %2801 = vmatprep.subr.mxu0 0.0
        %2802 = vmatpush1.msra.mxu0 0.0
        %2803 = vmatprep.subr.mxu0 0.0
        %2804 = vmatpush1.msra.mxu0 0.0
        %2805 = vmatprep.subr.mxu0 0.0
        %2806 = vmatpush1.msra.mxu0 0.0
        %2807 = vmatprep.subr.mxu0 0.0
        %2808 = vmatpush1.msra.mxu0 0.0
        %2809 = vmatprep.subr.mxu0 0.0
        %2810 = vmatpush1.msra.mxu0 0.0
        %2811 = vmatprep.subr.mxu0 0.0
        %2812 = vmatpush1.msra.mxu0 0.0
        %2813 = vmatprep.subr.mxu0 0.0
        %2814 = vmatpush1.msra.mxu0 0.0
        %2815 = vmatprep.subr.mxu0 0.0
        %2816 = vmatpush1.msra.mxu0 0.0
        %2817 = vmatprep.subr.mxu0 0.0
        %2818 = vmatpush1.msra.mxu0 0.0
        %2819 = vmatprep.subr.mxu0 0.0
        %2820 = vmatpush1.msra.mxu0 0.0
        %2821 = vmatprep.subr.mxu0 0.0
        %2822 = vmatpush1.msra.mxu0 0.0
        %2823 = vmatprep.subr.mxu0 0.0
        %2824 = vmatpush1.msra.mxu0 0.0
        %2825 = vmatprep.subr.mxu0 0.0
        %2826 = vmatpush1.msra.mxu0 0.0
        %2827 = vmatprep.subr.mxu0 0.0
        %2828 = vmatpush1.msra.mxu0 0.0
        %2829 = vmatprep.subr.mxu0 0.0
        %2830 = vmatpush1.msra.mxu0 0.0
        %2831 = vmatprep.subr.mxu0 0.0
        %2832 = vmatpush1.msra.mxu0 0.0
        %2833 = vmatprep.subr.mxu0 0.0
        %2834 = vmatpush1.msra.mxu0 0.0
        %2835 = vmatprep.subr.mxu0 0.0
        %2836 = vmatpush1.msra.mxu0 0.0
        %2837 = vmatprep.subr.mxu0 0.0
        %2838 = vmatpush1.msra.mxu0 0.0
        %2839 = vmatprep.subr.mxu0 0.0
        %2840 = vmatpush1.msra.mxu0 0.0
        %2841 = vmatprep.subr.mxu0 0.0
        %2842 = vmatpush1.msra.mxu0 0.0
        %2843 = vmatprep.subr.mxu0 0.0
        %2844 = vmatpush1.msra.mxu0 0.0
        %2845 = vmatprep.subr.mxu0 0.0
        %2846 = vmatpush1.msra.mxu0 0.0
        %2847 = vmatprep.subr.mxu0 0.0
        %2848 = vmatpush1.msra.mxu0 0.0
        %2849 = vmatprep.mubr.f32.mxu0 0.0
        %2850 = vmatmul.mubr.f32.gmra.mrb[0].mxu0 %v2783
        %v2851 = vpop.f32.mrb[0].mxu0
        %v2852 = vadd.f32 0.0, %v2851
        %v2853 = vpop.f32.mrb[0].mxu0
        %2854 = vdwg.mxu0
        %2858 = vrot.lane.b32.xlu0 %v2700, 48
        %v2859 = vpop.permute.xlu0 %2858
        %2860 = vrot.lane.b32.xlu0 %v2776, 48
        %v2861 = vpop.permute.xlu0 %2860
        %2862 = vrot.lane.b32.xlu0 %v2852, 48
        %v2863 = vpop.permute.xlu0 %2862
        %vm2867 = vcmask 523648
        %2868 = vst.msk [vmem:[#allocation3] sm:$0xff] %vm2867, %v2859
        %2869 = vst.msk [vmem:[#allocation3 + $0x8] sm:$0xff] %vm2867, %v2861
        %2870 = vst.msk [vmem:[#allocation3 + $0x10] sm:$0xff] %vm2867, %v2863
        %v2871 = vld [vmem:[#allocation3] sm:$0xff]
        %v2872 = vld [vmem:[#allocation3 + $0x8] sm:$0xff]
        %v2873 = vld [vmem:[#allocation3 + $0x10] sm:$0xff]
        %v2874 = vld [vmem:[%s624] sm:$0xff]
        %v2875 = vld [vmem:[%s624 + $0x8] sm:$0xff]
        %v2876 = vld [vmem:[%s624 + $0x10] sm:$0xff]
        %v2877 = vld [vmem:[%s624 + $0x18] sm:$0xff]
        %v2878 = vld [vmem:[%s624 + $0x20] sm:$0xff]
        %v2879 = vld [vmem:[%s624 + $0x28] sm:$0xff]
        %v2880 = vld [vmem:[%s624 + $0x30] sm:$0xff]
        %v2881 = vld [vmem:[%s624 + $0x38] sm:$0xff]
        %v2883 = vsel %vm666, %v2871, 0
        %v2886 = vsel %vm666, %v2872, 0
        %v2889 = vsel %vm666, %v2873, 0
        %2891 = vmatprep.subr.mxu0 0.0
        %2892 = vmatpush1.msra.mxu0 %v2874
        %2893 = vmatprep.subr.mxu0 0.0
        %2894 = vmatpush1.msra.mxu0 %v2875
        %2895 = vmatprep.subr.mxu0 0.0
        %2896 = vmatpush1.msra.mxu0 %v2876
        %2897 = vmatprep.subr.mxu0 0.0
        %2898 = vmatpush1.msra.mxu0 %v2877
        %2899 = vmatprep.subr.mxu0 0.0
        %2900 = vmatpush1.msra.mxu0 %v2878
        %2901 = vmatprep.subr.mxu0 0.0
        %2902 = vmatpush1.msra.mxu0 %v2879
        %2903 = vmatprep.subr.mxu0 0.0
        %2904 = vmatpush1.msra.mxu0 %v2880
        %2905 = vmatprep.subr.mxu0 0.0
        %2906 = vmatpush1.msra.mxu0 %v2881
        %2907 = vmatprep.subr.mxu0 0.0
        %2908 = vmatpush1.msra.mxu0 0.0
        %2909 = vmatprep.subr.mxu0 0.0
        %2910 = vmatpush1.msra.mxu0 0.0
        %2911 = vmatprep.subr.mxu0 0.0
        %2912 = vmatpush1.msra.mxu0 0.0
        %2913 = vmatprep.subr.mxu0 0.0
        %2914 = vmatpush1.msra.mxu0 0.0
        %2915 = vmatprep.subr.mxu0 0.0
        %2916 = vmatpush1.msra.mxu0 0.0
        %2917 = vmatprep.subr.mxu0 0.0
        %2918 = vmatpush1.msra.mxu0 0.0
        %2919 = vmatprep.subr.mxu0 0.0
        %2920 = vmatpush1.msra.mxu0 0.0
        %2921 = vmatprep.subr.mxu0 0.0
        %2922 = vmatpush1.msra.mxu0 0.0
        %2923 = vmatprep.subr.mxu0 0.0
        %2924 = vmatpush1.msra.mxu0 0.0
        %2925 = vmatprep.subr.mxu0 0.0
        %2926 = vmatpush1.msra.mxu0 0.0
        %2927 = vmatprep.subr.mxu0 0.0
        %2928 = vmatpush1.msra.mxu0 0.0
        %2929 = vmatprep.subr.mxu0 0.0
        %2930 = vmatpush1.msra.mxu0 0.0
        %2931 = vmatprep.subr.mxu0 0.0
        %2932 = vmatpush1.msra.mxu0 0.0
        %2933 = vmatprep.subr.mxu0 0.0
        %2934 = vmatpush1.msra.mxu0 0.0
        %2935 = vmatprep.subr.mxu0 0.0
        %2936 = vmatpush1.msra.mxu0 0.0
        %2937 = vmatprep.subr.mxu0 0.0
        %2938 = vmatpush1.msra.mxu0 0.0
        %2939 = vmatprep.subr.mxu0 0.0
        %2940 = vmatpush1.msra.mxu0 0.0
        %2941 = vmatprep.subr.mxu0 0.0
        %2942 = vmatpush1.msra.mxu0 0.0
        %2943 = vmatprep.subr.mxu0 0.0
        %2944 = vmatpush1.msra.mxu0 0.0
        %2945 = vmatprep.subr.mxu0 0.0
        %2946 = vmatpush1.msra.mxu0 0.0
        %2947 = vmatprep.subr.mxu0 0.0
        %2948 = vmatpush1.msra.mxu0 0.0
        %2949 = vmatprep.subr.mxu0 0.0
        %2950 = vmatpush1.msra.mxu0 0.0
        %2951 = vmatprep.subr.mxu0 0.0
        %2952 = vmatpush1.msra.mxu0 0.0
        %2953 = vmatprep.subr.mxu0 0.0
        %2954 = vmatpush1.msra.mxu0 0.0
        %2955 = vmatprep.mubr.f32.mxu0 0.0
        %2956 = vmatmul.mubr.f32.gmra.mrb[0].mxu0 %v2883
        %v2957 = vpop.f32.mrb[0].mxu0
        %v2958 = vadd.f32 0.0, %v2957
        %v2959 = vpop.f32.mrb[0].mxu0
        %2960 = vmatprep.mubr.f32.mxu0 0.0
        %2961 = vmatmul.mubr.f32.gmra.mrb[0].mxu0 %v2886
        %v2962 = vpop.f32.mrb[0].mxu0
        %v2963 = vadd.f32 0.0, %v2962
        %v2964 = vpop.f32.mrb[0].mxu0
        %2965 = vmatprep.mubr.f32.mxu0 0.0
        %2966 = vmatmul.mubr.f32.gmra.mrb[0].mxu0 %v2889
        %v2967 = vpop.f32.mrb[0].mxu0
        %v2968 = vadd.f32 0.0, %v2967
        %v2969 = vpop.f32.mrb[0].mxu0
        %2970 = vdwg.mxu0
        %v2971 = vadd.f32 %v663, %v2958
        %v2972 = vadd.f32 %v664, %v2963
        %v2973 = vadd.f32 %v665, %v2968
        %v2974 = vld [vmem:[%s627] sm:$0x1]
        %v2976 = vlaneseq
        %v2977 = vshrl.u32 %v2976, 7
        %v2978 = vsub.s32 0, %v2977
        %v2979 = vrot.slane %v2974, %v2978
        %v2981 = vadd.f32 %v2971, %v2979
        %v2982 = vadd.f32 %v2972, %v2979
        %v2983 = vadd.f32 %v2973, %v2979
        %v2984 = vsel %vm666, %v2981, 0.0
        %2985 = vadd.xlane.f32.xlu0 %v2984
        %v2986 = vpop.xlane.xlu0 %2985
        %v2987 = vsel %vm666, %v2982, 0.0
        %2988 = vadd.xlane.f32.xlu0 %v2987
        %v2989 = vpop.xlane.xlu0 %2988
        %v2990 = vsel %vm666, %v2983, 0.0
        %2991 = vadd.xlane.f32.xlu0 %v2990
        %v2992 = vpop.xlane.xlu0 %2991
        %v2993 = vmul.f32 %v2986, %v676
        %v2994 = vmul.f32 %v2989, %v676
        %v2995 = vmul.f32 %v2992, %v676
        %v2996 = vsub.f32 %v2981, %v2993
        %v2997 = vsub.f32 %v2982, %v2994
        %v2998 = vsub.f32 %v2983, %v2995
        %v2999 = vmul.f32 %v2996, %v2996
        %v3000 = vmul.f32 %v2997, %v2997
        %v3001 = vmul.f32 %v2998, %v2998
        %v3002 = vsel %vm666, %v2999, 0.0
        %3003 = vadd.xlane.f32.xlu0 %v3002
        %v3004 = vpop.xlane.xlu0 %3003
        %v3005 = vsel %vm666, %v3000, 0.0
        %3006 = vadd.xlane.f32.xlu0 %v3005
        %v3007 = vpop.xlane.xlu0 %3006
        %v3008 = vsel %vm666, %v3001, 0.0
        %3009 = vadd.xlane.f32.xlu0 %v3008
        %v3010 = vpop.xlane.xlu0 %3009
        %v3011 = vmul.f32 %v3004, %v676
        %v3012 = vmul.f32 %v3007, %v676
        %v3013 = vmul.f32 %v3010, %v676
        %v3014 = vadd.f32 %v3011, 1e-05
        %v3015 = vadd.f32 %v3012, 1e-05
        %v3016 = vadd.f32 %v3013, 1e-05
        %v3017 = vrsqrt.pop %v3014
        %v3018 = vrsqrt.pop %v3015
        %v3019 = vrsqrt.pop %v3016
        %v3020 = vmul.f32 %v2996, %v3017
        %v3021 = vmul.f32 %v2997, %v3018
        %v3022 = vmul.f32 %v2998, %v3019
        %v3023 = vld [vmem:[%s630] sm:$0x1]
        %v3025 = vlaneseq
        %v3026 = vshrl.u32 %v3025, 7
        %v3027 = vsub.s32 0, %v3026
        %v3028 = vrot.slane %v3023, %v3027
        %v3030 = vmul.f32 %v3020, %v3028
        %v3031 = vmul.f32 %v3021, %v3028
        %v3032 = vmul.f32 %v3022, %v3028
        %v3033 = vld [vmem:[%s633] sm:$0x1]
        %v3035 = vlaneseq
        %v3036 = vshrl.u32 %v3035, 7
        %v3037 = vsub.s32 0, %v3036
        %v3038 = vrot.slane %v3033, %v3037
        %v3040 = vadd.f32 %v3030, %v3038
        %v3041 = vadd.f32 %v3031, %v3038
        %v3042 = vadd.f32 %v3032, %v3038
        %v3043 = vld [vmem:[%s638] sm:$0xff]
        %v3044 = vld [vmem:[%s638 + $0x8] sm:$0xff]
        %v3045 = vld [vmem:[%s638 + $0x10] sm:$0xff]
        %v3046 = vld [vmem:[%s638 + $0x18] sm:$0xff]
        %v3047 = vld [vmem:[%s638 + $0x20] sm:$0xff]
        %v3048 = vld [vmem:[%s638 + $0x28] sm:$0xff]
        %v3049 = vld [vmem:[%s638 + $0x30] sm:$0xff]
        %v3050 = vld [vmem:[%s638 + $0x38] sm:$0xff]
        %v3051 = vld [vmem:[%s638 + $0x40] sm:$0xff]
        %v3052 = vld [vmem:[%s638 + $0x48] sm:$0xff]
        %v3053 = vld [vmem:[%s638 + $0x50] sm:$0xff]
        %v3054 = vld [vmem:[%s638 + $0x58] sm:$0xff]
        %v3055 = vld [vmem:[%s638 + $0x60] sm:$0xff]
        %v3056 = vld [vmem:[%s638 + $0x68] sm:$0xff]
        %v3057 = vld [vmem:[%s638 + $0x70] sm:$0xff]
        %v3058 = vld [vmem:[%s638 + $0x78] sm:$0xff]
        %v3059 = vld [vmem:[%s642] sm:$0x3]
        %v3061 = vlaneseq
        %v3062 = vshrl.u32 %v3061, 7
        %v3063 = vsub.s32 0, %v3062
        %v3064 = vrot.slane %v3059, %v3063
        %v3065 = vlaneseq
        %v3066 = vshrl.u32 %v3065, 7
        %v3067 = vsub.s32 1, %v3066
        %v3068 = vrot.slane %v3059, %v3067
        %v3072 = vsel %vm666, %v3040, 0
        %v3075 = vsel %vm666, %v3041, 0
        %v3078 = vsel %vm666, %v3042, 0
        %3080 = vmatprep.subr.mxu0 %v3044
        %3081 = vmatpush1.msra.mxu0 %v3043
        %3082 = vmatprep.subr.mxu0 %v3046
        %3083 = vmatpush1.msra.mxu0 %v3045
        %3084 = vmatprep.subr.mxu0 %v3048
        %3085 = vmatpush1.msra.mxu0 %v3047
        %3086 = vmatprep.subr.mxu0 %v3050
        %3087 = vmatpush1.msra.mxu0 %v3049
        %3088 = vmatprep.subr.mxu0 %v3052
        %3089 = vmatpush1.msra.mxu0 %v3051
        %3090 = vmatprep.subr.mxu0 %v3054
        %3091 = vmatpush1.msra.mxu0 %v3053
        %3092 = vmatprep.subr.mxu0 %v3056
        %3093 = vmatpush1.msra.mxu0 %v3055
        %3094 = vmatprep.subr.mxu0 %v3058
        %3095 = vmatpush1.msra.mxu0 %v3057
        %3096 = vmatprep.subr.mxu0 0.0
        %3097 = vmatpush1.msra.mxu0 0.0
        %3098 = vmatprep.subr.mxu0 0.0
        %3099 = vmatpush1.msra.mxu0 0.0
        %3100 = vmatprep.subr.mxu0 0.0
        %3101 = vmatpush1.msra.mxu0 0.0
        %3102 = vmatprep.subr.mxu0 0.0
        %3103 = vmatpush1.msra.mxu0 0.0
        %3104 = vmatprep.subr.mxu0 0.0
        %3105 = vmatpush1.msra.mxu0 0.0
        %3106 = vmatprep.subr.mxu0 0.0
        %3107 = vmatpush1.msra.mxu0 0.0
        %3108 = vmatprep.subr.mxu0 0.0
        %3109 = vmatpush1.msra.mxu0 0.0
        %3110 = vmatprep.subr.mxu0 0.0
        %3111 = vmatpush1.msra.mxu0 0.0
        %3112 = vmatprep.subr.mxu0 0.0
        %3113 = vmatpush1.msra.mxu0 0.0
        %3114 = vmatprep.subr.mxu0 0.0
        %3115 = vmatpush1.msra.mxu0 0.0
        %3116 = vmatprep.subr.mxu0 0.0
        %3117 = vmatpush1.msra.mxu0 0.0
        %3118 = vmatprep.subr.mxu0 0.0
        %3119 = vmatpush1.msra.mxu0 0.0
        %3120 = vmatprep.subr.mxu0 0.0
        %3121 = vmatpush1.msra.mxu0 0.0
        %3122 = vmatprep.subr.mxu0 0.0
        %3123 = vmatpush1.msra.mxu0 0.0
        %3124 = vmatprep.subr.mxu0 0.0
        %3125 = vmatpush1.msra.mxu0 0.0
        %3126 = vmatprep.subr.mxu0 0.0
        %3127 = vmatpush1.msra.mxu0 0.0
        %3128 = vmatprep.subr.mxu0 0.0
        %3129 = vmatpush1.msra.mxu0 0.0
        %3130 = vmatprep.subr.mxu0 0.0
        %3131 = vmatpush1.msra.mxu0 0.0
        %3132 = vmatprep.subr.mxu0 0.0
        %3133 = vmatpush1.msra.mxu0 0.0
        %3134 = vmatprep.subr.mxu0 0.0
        %3135 = vmatpush1.msra.mxu0 0.0
        %3136 = vmatprep.subr.mxu0 0.0
        %3137 = vmatpush1.msra.mxu0 0.0
        %3138 = vmatprep.subr.mxu0 0.0
        %3139 = vmatpush1.msra.mxu0 0.0
        %3140 = vmatprep.subr.mxu0 0.0
        %3141 = vmatpush1.msra.mxu0 0.0
        %3142 = vmatprep.subr.mxu0 0.0
        %3143 = vmatpush1.msra.mxu0 0.0
        %3144 = vmatprep.mubr.f32.mxu0 0.0
        %3145 = vmatmul.mubr.f32.gmra.mrb[0].mxu0 %v3072
        %v3146 = vpop.f32.mrb[0].mxu0
        %v3147 = vadd.f32 %v3064, %v3146
        %v3148 = vpop.f32.mrb[0].mxu0
        %v3149 = vadd.f32 %v3068, %v3148
        %3150 = vmatprep.mubr.f32.mxu0 0.0
        %3151 = vmatmul.mubr.f32.gmra.mrb[0].mxu0 %v3075
        %v3152 = vpop.f32.mrb[0].mxu0
        %v3153 = vadd.f32 %v3064, %v3152
        %v3154 = vpop.f32.mrb[0].mxu0
        %v3155 = vadd.f32 %v3068, %v3154
        %3156 = vmatprep.mubr.f32.mxu0 0.0
        %3157 = vmatmul.mubr.f32.gmra.mrb[0].mxu0 %v3078
        %v3158 = vpop.f32.mrb[0].mxu0
        %v3159 = vadd.f32 %v3064, %v3158
        %v3160 = vpop.f32.mrb[0].mxu0
        %v3161 = vadd.f32 %v3068, %v3160
        %3162 = vdwg.mxu0
        %v3163 = vmul.f32 %v3147, -1.702
        %v3164 = vmul.f32 %v3149, -1.702
        %v3165 = vmul.f32 %v3153, -1.702
        %v3166 = vmul.f32 %v3155, -1.702
        %v3167 = vmul.f32 %v3159, -1.702
        %v3168 = vmul.f32 %v3161, -1.702
        %v3169 = vmul.f32 %v3163, 1.442695
        %v3170 = vpow.pop %v3169
        %v3171 = vmul.f32 %v3164, 1.442695
        %v3172 = vpow.pop %v3171
        %v3173 = vmul.f32 %v3165, 1.442695
        %v3174 = vpow.pop %v3173
        %v3175 = vmul.f32 %v3166, 1.442695
        %v3176 = vpow.pop %v3175
        %v3177 = vmul.f32 %v3167, 1.442695
        %v3178 = vpow.pop %v3177
        %v3179 = vmul.f32 %v3168, 1.442695
        %v3180 = vpow.pop %v3179
        %v3181 = vadd.f32 %v3170, 1.0
        %v3182 = vadd.f32 %v3172, 1.0
        %v3183 = vadd.f32 %v3174, 1.0
        %v3184 = vadd.f32 %v3176, 1.0
        %v3185 = vadd.f32 %v3178, 1.0
        %v3186 = vadd.f32 %v3180, 1.0
        %v3187 = vrcp.pop %v3181
        %v3188 = vrcp.pop %v3182
        %v3189 = vrcp.pop %v3183
        %v3190 = vrcp.pop %v3184
        %v3191 = vrcp.pop %v3185
        %v3192 = vrcp.pop %v3186
        %v3193 = vmul.f32 %v3147, %v3187
        %v3194 = vmul.f32 %v3149, %v3188
        %v3195 = vmul.f32 %v3153, %v3189
        %v3196 = vmul.f32 %v3155, %v3190
        %v3197 = vmul.f32 %v3159, %v3191
        %v3198 = vmul.f32 %v3161, %v3192
        %v3199 = vld [vmem:[%s647] sm:$0xff]
        %v3200 = vld [vmem:[%s647 + $0x8] sm:$0xff]
        %v3201 = vld [vmem:[%s647 + $0x10] sm:$0xff]
        %v3202 = vld [vmem:[%s647 + $0x18] sm:$0xff]
        %v3203 = vld [vmem:[%s647 + $0x20] sm:$0xff]
        %v3204 = vld [vmem:[%s647 + $0x28] sm:$0xff]
        %v3205 = vld [vmem:[%s647 + $0x30] sm:$0xff]
        %v3206 = vld [vmem:[%s647 + $0x38] sm:$0xff]
        %v3207 = vld [vmem:[%s647 + $0x40] sm:$0xff]
        %v3208 = vld [vmem:[%s647 + $0x48] sm:$0xff]
        %v3209 = vld [vmem:[%s647 + $0x50] sm:$0xff]
        %v3210 = vld [vmem:[%s647 + $0x58] sm:$0xff]
        %v3211 = vld [vmem:[%s647 + $0x60] sm:$0xff]
        %v3212 = vld [vmem:[%s647 + $0x68] sm:$0xff]
        %v3213 = vld [vmem:[%s647 + $0x70] sm:$0xff]
        %v3214 = vld [vmem:[%s647 + $0x78] sm:$0xff]
        %v3215 = vld [vmem:[%s647 + $0x80] sm:$0xff]
        %v3216 = vld [vmem:[%s647 + $0x88] sm:$0xff]
        %v3217 = vld [vmem:[%s647 + $0x90] sm:$0xff]
        %v3218 = vld [vmem:[%s647 + $0x98] sm:$0xff]
        %v3219 = vld [vmem:[%s647 + $0xa0] sm:$0xff]
        %v3220 = vld [vmem:[%s647 + $0xa8] sm:$0xff]
        %v3221 = vld [vmem:[%s647 + $0xb0] sm:$0xff]
        %v3222 = vld [vmem:[%s647 + $0xb8] sm:$0xff]
        %v3223 = vld [vmem:[%s647 + $0xc0] sm:$0xff]
        %v3224 = vld [vmem:[%s647 + $0xc8] sm:$0xff]
        %v3225 = vld [vmem:[%s647 + $0xd0] sm:$0xff]
        %v3226 = vld [vmem:[%s647 + $0xd8] sm:$0xff]
        %v3227 = vld [vmem:[%s647 + $0xe0] sm:$0xff]
        %v3228 = vld [vmem:[%s647 + $0xe8] sm:$0xff]
        %v3229 = vld [vmem:[%s647 + $0xf0] sm:$0xff]
        %v3230 = vld [vmem:[%s647 + $0xf8] sm:$0xff]
        %3231 = vmatprep.subr.mxu0 0.0
        %3232 = vmatpush1.msra.mxu0 %v3199
        %3233 = vmatprep.subr.mxu0 0.0
        %3234 = vmatpush1.msra.mxu0 %v3200
        %3235 = vmatprep.subr.mxu0 0.0
        %3236 = vmatpush1.msra.mxu0 %v3201
        %3237 = vmatprep.subr.mxu0 0.0
        %3238 = vmatpush1.msra.mxu0 %v3202
        %3239 = vmatprep.subr.mxu0 0.0
        %3240 = vmatpush1.msra.mxu0 %v3203
        %3241 = vmatprep.subr.mxu0 0.0
        %3242 = vmatpush1.msra.mxu0 %v3204
        %3243 = vmatprep.subr.mxu0 0.0
        %3244 = vmatpush1.msra.mxu0 %v3205
        %3245 = vmatprep.subr.mxu0 0.0
        %3246 = vmatpush1.msra.mxu0 %v3206
        %3247 = vmatprep.subr.mxu0 0.0
        %3248 = vmatpush1.msra.mxu0 %v3207
        %3249 = vmatprep.subr.mxu0 0.0
        %3250 = vmatpush1.msra.mxu0 %v3208
        %3251 = vmatprep.subr.mxu0 0.0
        %3252 = vmatpush1.msra.mxu0 %v3209
        %3253 = vmatprep.subr.mxu0 0.0
        %3254 = vmatpush1.msra.mxu0 %v3210
        %3255 = vmatprep.subr.mxu0 0.0
        %3256 = vmatpush1.msra.mxu0 %v3211
        %3257 = vmatprep.subr.mxu0 0.0
        %3258 = vmatpush1.msra.mxu0 %v3212
        %3259 = vmatprep.subr.mxu0 0.0
        %3260 = vmatpush1.msra.mxu0 %v3213
        %3261 = vmatprep.subr.mxu0 0.0
        %3262 = vmatpush1.msra.mxu0 %v3214
        %3263 = vmatprep.subr.mxu0 0.0
        %3264 = vmatpush1.msra.mxu0 %v3215
        %3265 = vmatprep.subr.mxu0 0.0
        %3266 = vmatpush1.msra.mxu0 %v3216
        %3267 = vmatprep.subr.mxu0 0.0
        %3268 = vmatpush1.msra.mxu0 %v3217
        %3269 = vmatprep.subr.mxu0 0.0
        %3270 = vmatpush1.msra.mxu0 %v3218
        %3271 = vmatprep.subr.mxu0 0.0
        %3272 = vmatpush1.msra.mxu0 %v3219
        %3273 = vmatprep.subr.mxu0 0.0
        %3274 = vmatpush1.msra.mxu0 %v3220
        %3275 = vmatprep.subr.mxu0 0.0
        %3276 = vmatpush1.msra.mxu0 %v3221
        %3277 = vmatprep.subr.mxu0 0.0
        %3278 = vmatpush1.msra.mxu0 %v3222
        %3279 = vmatprep.subr.mxu0 0.0
        %3280 = vmatpush1.msra.mxu0 %v3223
        %3281 = vmatprep.subr.mxu0 0.0
        %3282 = vmatpush1.msra.mxu0 %v3224
        %3283 = vmatprep.subr.mxu0 0.0
        %3284 = vmatpush1.msra.mxu0 %v3225
        %3285 = vmatprep.subr.mxu0 0.0
        %3286 = vmatpush1.msra.mxu0 %v3226
        %3287 = vmatprep.subr.mxu0 0.0
        %3288 = vmatpush1.msra.mxu0 %v3227
        %3289 = vmatprep.subr.mxu0 0.0
        %3290 = vmatpush1.msra.mxu0 %v3228
        %3291 = vmatprep.subr.mxu0 0.0
        %3292 = vmatpush1.msra.mxu0 %v3229
        %3293 = vmatprep.subr.mxu0 0.0
        %3294 = vmatpush1.msra.mxu0 %v3230
        %3295 = vmatprep.mubr.f32.mxu0 %v3194
        %3296 = vmatmul.mubr.f32.gmra.mrb[0].mxu0 %v3193
        %v3297 = vpop.f32.mrb[0].mxu0
        %v3298 = vadd.f32 0.0, %v3297
        %v3299 = vpop.f32.mrb[0].mxu0
        %3300 = vmatprep.mubr.f32.mxu0 %v3196
        %3301 = vmatmul.mubr.f32.gmra.mrb[0].mxu0 %v3195
        %v3302 = vpop.f32.mrb[0].mxu0
        %v3303 = vadd.f32 0.0, %v3302
        %v3304 = vpop.f32.mrb[0].mxu0
        %3305 = vmatprep.mubr.f32.mxu0 %v3198
        %3306 = vmatmul.mubr.f32.gmra.mrb[0].mxu0 %v3197
        %v3307 = vpop.f32.mrb[0].mxu0
        %v3308 = vadd.f32 0.0, %v3307
        %v3309 = vpop.f32.mrb[0].mxu0
        %3310 = vdwg.mxu0
        %v3311 = vadd.f32 %v2981, %v3298
        %v3312 = vadd.f32 %v2982, %v3303
        %v3313 = vadd.f32 %v2983, %v3308
        %v3314 = vld [vmem:[%s650] sm:$0x1]
        %v3316 = vlaneseq
        %v3317 = vshrl.u32 %v3316, 7
        %v3318 = vsub.s32 0, %v3317
        %v3319 = vrot.slane %v3314, %v3318
        %v3321 = vadd.f32 %v3311, %v3319
        %v3322 = vadd.f32 %v3312, %v3319
        %v3323 = vadd.f32 %v3313, %v3319
        %3324 = vst.msk [vmem:[#allocation2] sm:$0xff] %vm666, %v3321
        %3325 = vst.msk [vmem:[#allocation2 + $0x8] sm:$0xff] %vm666, %v3322
        %3326 = vst.msk [vmem:[#allocation2 + $0x10] sm:$0xff] %vm666, %v3323
        %p3327 = scmp.eq.s32.totalorder %s32, 1
        // Predicated region
        $region77: #{tpu_custom_call.1} parent=71 // pred_check
          %p3328 = pneg %p3327
        $region78: #{tpu_custom_call.1} parent=71 // pred_check_branch
          %3330 = sbr.rel (%p3328) target = $region80
        $region79: #{tpu_custom_call.1} parent=71 // pred_region
          %3331 = vst.msk [vmem:[%s598] sm:$0xff] %vm666, %v3321
          %3332 = vst.msk [vmem:[%s598 + $0x8] sm:$0xff] %vm666, %v3322
          %3333 = vst.msk [vmem:[%s598 + $0x10] sm:$0xff] %vm666, %v3323
        $region80: #{tpu_custom_call.1} parent=71 // pred_fallthru
          _
        %s3334 = sand.u32 %s385, 1
        %s3335 = scalar_lea.sflag [#allocation5], %s3334
        %s3336 = sand.u32 %s385, 1
        %s3337 = smul.addr %s3336, 24
        %s3338 = scalar_lea.vmem [#allocation4], %s3337
        // Predicated region
        $region81: #{tpu_custom_call.1} parent=71 // pred_check
          %p3339 = pneg %p395
        $region82: #{tpu_custom_call.1} parent=71 // pred_check_branch
          %3341 = sbr.rel (%p3339) target = $region84
        $region83: #{tpu_custom_call.1} parent=71 // pred_region
          %s3342 = smul.u32 3, %s31
          %s3344 = ssub.s32 384, 384
          %3345 = vsyncadd %s3335, %s3344
          %s3346 = smul.addr %s3342, 128
          %s3347 = scalar_lea.hbm %s13, %s3346
          %s3348 = sshll.u32 %s3338, 4
          %s3349 = int_to_ptr.vmem [resolvable:$true] %s3348
          %3354 = dma.vmem_to_hbm [thread:$0]  %s3349, 384, %s3347, %s3335, 128, 128, 8
        $region84: #{tpu_custom_call.1} parent=71 // pred_fallthru
          _
      $region72: #{tpu_custom_call.1} parent=5 // pred_fallthru
        _
      %p3355 = scmp.le.s32.totalorder 2, %s22
      // Predicated region
      $region85: #{tpu_custom_call.1} parent=5 // pred_check
        %p3356 = pneg %p3355
      $region86: #{tpu_custom_call.1} parent=5 // pred_check_branch
        %3358 = sbr.rel (%p3356) target = $region88
      $region87: #{tpu_custom_call.1} parent=5 // pred_region
        %s3359 = ssub.s32 %s22, 2
        // Predicated region
        $region89: #{tpu_custom_call.1} parent=87 // pred_check
          %p3360 = pneg %p401
        $region90: #{tpu_custom_call.1} parent=87 // pred_check_branch
          %3362 = sbr.rel (%p3360) target = $region92
        $region91: #{tpu_custom_call.1} parent=87 // pred_region
          %s3363 = sand.u32 %s386, 1
          %s3364 = scalar_lea.sflag [#allocation5], %s3363
          %s3365 = sand.u32 %s386, 1
          %s3366 = smul.addr %s3365, 24
          %s3367 = scalar_lea.vmem [#allocation4], %s3366
          %3368 = dma.done %s3364, 384
        $region92: #{tpu_custom_call.1} parent=87 // pred_fallthru
          _
      $region88: #{tpu_custom_call.1} parent=5 // pred_fallthru
        _
    $region6: #{tpu_custom_call.1} parent=1 // loop_footer
      %s26 = sadd.s32 1, %s22
    $region7: #{tpu_custom_call.1} parent=1 // loop_footer_branch
      %21 = sbr.rel target = $region3
    $region8: #{tpu_custom_call.1} parent=1 // loop_exit
      _
    %3369 = vsyncpa [#allocation5], 1
    %s3370 = scalar_lea.sflag [#allocation5], 1
    %3371 = vsyncpa %s3370, 1

</llo_original>
